<compile_context>
chip_gen: v7x
topology: tpu7x:2x2x1
jax: 0.10.0
libtpu: 0.0.40
codegen_flags: <defaults>
</compile_context>

<pallas_src>
import jax
import jax.numpy as jnp
from jax import lax
from jax.experimental import pallas as pl
from jax.experimental.pallas import tpu as pltpu

# ----------------------------- configuration --------------------------------
B = 4              # trials per domain (batch)
CCH = 8            # EEG channels
T = 128            # time samples
F = 2              # filter bands in the filter head
K = 9              # temporal FIR taps
PAD = K // 2
D = 16             # spatial filters in the backbone
POOL = 8           # average-pool window over time
TP2 = T // POOL    # pooled time length (16)
FEAT = D * TP2     # feature_dim = base_network.output_num() = 256
NUM_CLASS = 4
NDOM = 2           # source + target, fused into one kernel launch
NS_ITERS = 10      # Newton-Schulz iterations (norm-scaled init -> quadratic convergence)


# --------------------------- fused forward kernel ----------------------------
def _fwd_kernel(x_ref, toep_ref, brow_ref, wbd_ref, pmat_ref, wc_ref, small_ref,
                clf_ref, head_ref):
    # ---- filter head: FIR filter bank as ONE MXU matmul (K = T = 128 exactly) ----
    # x: (NDOM*B*CCH, T) rows=(dom,b,c);  toep: (T, F*T) cols=(band,time), padding folded in.
    y = jnp.dot(x_ref[...], toep_ref[...], preferred_element_type=jnp.float32)
    y = y + brow_ref[...]                                          # per-band bias, (64, F*T)

    # ---- JefferyMean: per-domain mean trial covariance, both bands fused (K=256) ----
    # TODO(synk): the true Jeffrey (symmetric-KL) barycenter has no closed form; the
    #             arithmetic mean of per-trial covariances is used as the mean point.
    y3 = y.reshape(NDOM * B, CCH, F * T)                           # leading split only
    g = lax.dot_general(y3, y3, (((2,), (2,)), ((0,), (0,))),
                        preferred_element_type=jnp.float32)        # (NDOM*B, CCH, CCH)
    R = jnp.sum(g.reshape(NDOM, B, CCH, CCH), axis=1) * jnp.float32(1.0 / (B * F))

    # Identity built in-kernel (one fewer VMEM input).
    i8 = lax.broadcasted_iota(jnp.int32, (CCH, CCH), 0)
    j8 = lax.broadcasted_iota(jnp.int32, (CCH, CCH), 1)
    eye8 = (i8 == j8).astype(jnp.float32)                          # (CCH, CCH)

    # SPD ridge per domain.
    tr_r = jnp.sum(jnp.sum(R * eye8[None], axis=2, keepdims=True),
                   axis=1, keepdims=True)                          # (NDOM,1,1)
    a_reg = R + (1e-3 * tr_r / CCH + 1e-6) * eye8[None]            # (NDOM, CCH, CCH)

    # ---- batched Newton-Schulz SPD inverse (both domains in one interleaved chain) ----
    # Norm-scaled init: X0 = A / (||A||_1 * ||A||_inf); A symmetric so the two norms
    # coincide with the max absolute column sum.
    col_abs = jnp.sum(jnp.abs(a_reg), axis=1, keepdims=True)       # (NDOM,1,CCH)
    nrm = jnp.max(col_abs, axis=2, keepdims=True)                  # (NDOM,1,1)
    X = a_reg * (1.0 / (nrm * nrm))
    for _ in range(NS_ITERS):                                      # tiny batched MXU matmuls
        ax = lax.dot_general(a_reg, X, (((2,), (1,)), ((0,), (0,))),
                             preferred_element_type=jnp.float32)
        X = lax.dot_general(X, 2.0 * eye8[None] - ax, (((2,), (1,)), ((0,), (0,))),
                            preferred_element_type=jnp.float32)

    # ---- jeffrey head loss: symmetric KL between the two zero-mean Gaussians ----
    # tr(A^-1 B) = sum(A^-1 * B) since both matrices are symmetric.
    head = 0.5 * (jnp.sum(X[0] * a_reg[1]) + jnp.sum(X[1] * a_reg[0])) \
        - jnp.float32(CCH)
    head_ref[0] = head

    # ---- backbone on SOURCE trials only (target features are never used) ----
    # Spatial conv over (band, channel) as block-diagonal left-matmuls:
    # wbd[f] = kron(I_B, w1[f]) of shape (B*D, B*CCH), applied to the band-f lane slice.
    h = None
    for f in range(F):
        yf = y[:B * CCH, f * T:(f + 1) * T]                        # (B*CCH, T), source rows
        hf = jnp.dot(wbd_ref[f], yf, preferred_element_type=jnp.float32)   # (B*D, T)
        h = hf if h is None else h + hf
    h = jnp.where(h > 0, h, jnp.exp(jnp.minimum(h, 0.0)) - 1.0)    # ELU
    hp = jnp.dot(h, pmat_ref[...], preferred_element_type=jnp.float32)     # (B*D, TP2)
    hp3 = hp.reshape(B, D, TP2)                                    # leading split only

    # ---- classifier + cross-entropy on the source trials ----
    small = small_ref[...]                                         # (B, 2*NUM_CLASS)
    bcb = small[:, :NUM_CLASS]                                     # bias broadcast per trial
    onehot = small[:, NUM_CLASS:]                                  # one-hot labels
    prod = hp3[:, None, :, :] * wc_ref[...][None, :, :, :]         # (B, NUM_CLASS, D, TP2)
    logits = jnp.sum(jnp.sum(prod, axis=-1), axis=-1) + bcb        # (B, NUM_CLASS)
    m = jnp.max(logits, axis=-1, keepdims=True)
    lse = m + jnp.log(jnp.sum(jnp.exp(logits - m), axis=-1, keepdims=True))
    picked = jnp.sum(onehot * logits, axis=-1, keepdims=True)
    clf_ref[0] = jnp.sum(lse - picked) * jnp.float32(1.0 / B)


# ------------------------------ host-side glue --------------------------------
def _fir_toeplitz(w_filt):
    # toep[p, f*T + t] = w_filt[f, p - t + PAD] for 0 <= p - t + PAD < K, else 0.
    # 'same' padding is folded in (boundary taps truncated), so the contraction is K=T=128.
    diff = jnp.arange(T)[:, None] - jnp.arange(T)[None, :]         # (T, T)
    bands = []
    for f in range(F):
        tf = jnp.zeros((T, T), jnp.float32)
        for k in range(K):
            tf = tf + jnp.where(diff == (k - PAD), w_filt[f, k], 0.0)
        bands.append(tf)
    return jnp.concatenate(bands, axis=1)                          # (T, F*T)


def init_params(key):
    k1, k2, k3, k4 = jax.random.split(key, 4)
    w_filt = 0.3 * jax.random.normal(k1, (F, K), jnp.float32)      # filter_head taps
    b_filt = 0.01 * jax.random.normal(k2, (F,), jnp.float32)       # filter_head bias
    w1 = jax.random.normal(k3, (F, D, CCH), jnp.float32) / jnp.sqrt(F * CCH)       # spatial conv
    wc = jax.random.normal(k4, (NUM_CLASS, D, TP2), jnp.float32) / jnp.sqrt(FEAT)  # classifier
    bc = jnp.zeros((1, NUM_CLASS), jnp.float32)
    return w_filt, b_filt, w1, wc, bc


_VMEM = pl.BlockSpec(memory_space=pltpu.MemorySpace.VMEM)
_SMEM = pl.BlockSpec(memory_space=pltpu.MemorySpace.SMEM)


@jax.jit
def forward(source, target, source_label, params):
    """Equivalent of EEGTransferNet_head.forward -> (clf_loss, head_loss)."""
    w_filt, b_filt, w1, wc, bc = params

    # Fuse source + target into one 2-domain batch -> a single grid-less kernel launch.
    x = jnp.concatenate([source[:, 0], target[:, 0]], axis=0)      # (2B, CCH, T)
    x = x.reshape(NDOM * B * CCH, T)                               # rows = (dom, b, c)

    # Tiny parameter-derived operands (layout prep for the in-kernel MXU matmuls).
    toep = _fir_toeplitz(w_filt)                                   # (T, F*T), pad folded in
    brow = jnp.repeat(b_filt, T)[None, :]                          # (1, F*T)
    eyeB = jnp.eye(B, dtype=jnp.float32)
    wbd = jnp.stack([jnp.kron(eyeB, w1[f]) for f in range(F)], 0)  # (F, B*D, B*CCH)
    pmat = jnp.kron(jnp.eye(TP2, dtype=jnp.float32),
                    jnp.ones((POOL, 1), jnp.float32)) / POOL       # (T, TP2) avg-pool matrix
    onehot = jax.nn.one_hot(source_label, NUM_CLASS, dtype=jnp.float32)
    small = jnp.concatenate([jnp.broadcast_to(bc, (B, NUM_CLASS)), onehot], axis=1)  # (B, 2*NC)

    clf, head = pl.pallas_call(
        _fwd_kernel,
        out_shape=(jax.ShapeDtypeStruct((1,), jnp.float32),        # clf_loss
                   jax.ShapeDtypeStruct((1,), jnp.float32)),       # head_loss
        in_specs=[_VMEM] * 7,
        out_specs=(_SMEM, _SMEM),
    )(x, toep, brow, wbd, pmat, wc, small)
    return clf[0], head[0]


if __name__ == "__main__":
    key = jax.random.PRNGKey(0)
    kp, ks, kt, kl = jax.random.split(key, 4)
    params = init_params(kp)

    source = jax.random.normal(ks, (B, 1, CCH, T), jnp.float32)
    target = jax.random.normal(kt, (B, 1, CCH, T), jnp.float32)
    source_label = jax.random.randint(kl, (B,), 0, NUM_CLASS, dtype=jnp.int32)

    clf_loss, head_loss = forward(source, target, source_label, params)
    jax.block_until_ready((clf_loss, head_loss))
    assert clf_loss.shape == () and head_loss.shape == ()
    assert bool(jnp.isfinite(clf_loss)) and bool(jnp.isfinite(head_loss))
    print("KERNEL_OK")
</pallas_src>

<mosaic_0001>
module attributes {stable_mosaic.version = 11 : i64} {
  func.func @_fwd_kernel(%arg0: memref<64x128xf32, #tpu.memory_space<vmem>>, %arg1: memref<128x256xf32, #tpu.memory_space<vmem>>, %arg2: memref<1x256xf32, #tpu.memory_space<vmem>>, %arg3: memref<2x64x32xf32, #tpu.memory_space<vmem>>, %arg4: memref<128x16xf32, #tpu.memory_space<vmem>>, %arg5: memref<4x16x16xf32, #tpu.memory_space<vmem>>, %arg6: memref<4x8xf32, #tpu.memory_space<vmem>>, %arg7: memref<1xf32, #tpu.memory_space<smem>>, %arg8: memref<1xf32, #tpu.memory_space<smem>>) attributes {dimension_semantics = [], scalar_prefetch = 0 : i64, scratch_operands = 0 : i64, tpu.core_type = #tpu.core_type<tc>} {
    %c0 = arith.constant 0 : index
    %c0_0 = arith.constant 0 : index
    %0 = vector.load %arg0[%c0, %c0_0] : memref<64x128xf32, #tpu.memory_space<vmem>>, vector<64x128xf32>
    %c0_1 = arith.constant 0 : index
    %c0_2 = arith.constant 0 : index
    %1 = vector.load %arg1[%c0_1, %c0_2] : memref<128x256xf32, #tpu.memory_space<vmem>>, vector<128x256xf32>
    %cst = arith.constant dense<0.000000e+00> : vector<64x256xf32>
    %2 = tpu.matmul %0, %1, %cst {dimension_numbers = #tpu.dot_dimension_numbers<[1], [0], [0], [1], [0, 0, 1, 1], [], []>} : vector<64x128xf32>, vector<128x256xf32>, vector<64x256xf32> -> vector<64x256xf32>
    %c0_3 = arith.constant 0 : index
    %c0_4 = arith.constant 0 : index
    %3 = vector.load %arg2[%c0_3, %c0_4] : memref<1x256xf32, #tpu.memory_space<vmem>>, vector<1x256xf32>
    %4 = vector.broadcast %3 : vector<1x256xf32> to vector<64x256xf32>
    %5 = arith.addf %2, %4 : vector<64x256xf32>
    %6 = vector.shape_cast %5 : vector<64x256xf32> to vector<8x8x256xf32>
    %cst_5 = arith.constant dense<0.000000e+00> : vector<8x8x8xf32>
    %7 = tpu.matmul %6, %6, %cst_5 {dimension_numbers = #tpu.dot_dimension_numbers<[2], [2], [1], [1], [0, 0, 0, 1, 1, 1], [0], [0]>} : vector<8x8x256xf32>, vector<8x8x256xf32>, vector<8x8x8xf32> -> vector<8x8x8xf32>
    %8 = vector.shape_cast %7 : vector<8x8x8xf32> to vector<2x4x8x8xf32>
    %cst_6 = arith.constant dense<0.000000e+00> : vector<2x8x8xf32>
    %9 = vector.multi_reduction <add>, %8, %cst_6 [1] : vector<2x4x8x8xf32> to vector<2x8x8xf32>
    %cst_7 = arith.constant 1.250000e-01 : f32
    %10 = vector.broadcast %cst_7 : f32 to vector<2x8x8xf32>
    %11 = arith.mulf %9, %10 : vector<2x8x8xf32>
    %12 = tpu.iota {dimensions = array<i32: 0>} : vector<8x8xi32>
    %13 = tpu.iota {dimensions = array<i32: 1>} : vector<8x8xi32>
    %14 = arith.cmpi eq, %12, %13 : vector<8x8xi32>
    %15 = arith.extui %14 : vector<8x8xi1> to vector<8x8xi32>
    %16 = arith.sitofp %15 : vector<8x8xi32> to vector<8x8xf32>
    %17 = vector.shape_cast %16 : vector<8x8xf32> to vector<1x8x8xf32>
    %18 = vector.broadcast %17 : vector<1x8x8xf32> to vector<2x8x8xf32>
    %19 = arith.mulf %11, %18 : vector<2x8x8xf32>
    %cst_8 = arith.constant dense<0.000000e+00> : vector<2x8xf32>
    %20 = vector.multi_reduction <add>, %19, %cst_8 [2] : vector<2x8x8xf32> to vector<2x8xf32>
    %21 = vector.shape_cast %20 : vector<2x8xf32> to vector<2x8x1xf32>
    %cst_9 = arith.constant dense<0.000000e+00> : vector<2x1xf32>
    %22 = vector.multi_reduction <add>, %21, %cst_9 [1] : vector<2x8x1xf32> to vector<2x1xf32>
    %23 = vector.shape_cast %22 : vector<2x1xf32> to vector<2x1x1xf32>
    %cst_10 = arith.constant 1.000000e-03 : f32
    %24 = vector.broadcast %cst_10 : f32 to vector<2x1x1xf32>
    %25 = arith.mulf %24, %23 : vector<2x1x1xf32>
    %cst_11 = arith.constant 8.000000e+00 : f32
    %26 = vector.broadcast %cst_11 : f32 to vector<2x1x1xf32>
    %27 = arith.divf %25, %26 : vector<2x1x1xf32>
    %cst_12 = arith.constant 9.99999997E-7 : f32
    %28 = vector.broadcast %cst_12 : f32 to vector<2x1x1xf32>
    %29 = arith.addf %27, %28 : vector<2x1x1xf32>
    %30 = vector.shape_cast %16 : vector<8x8xf32> to vector<1x8x8xf32>
    %31 = vector.broadcast %29 : vector<2x1x1xf32> to vector<2x8x8xf32>
    %32 = vector.broadcast %30 : vector<1x8x8xf32> to vector<2x8x8xf32>
    %33 = arith.mulf %31, %32 : vector<2x8x8xf32>
    %34 = arith.addf %11, %33 : vector<2x8x8xf32>
    %35 = math.absf %34 : vector<2x8x8xf32>
    %cst_13 = arith.constant dense<0.000000e+00> : vector<2x8xf32>
    %36 = vector.multi_reduction <add>, %35, %cst_13 [1] : vector<2x8x8xf32> to vector<2x8xf32>
    %37 = vector.shape_cast %36 : vector<2x8xf32> to vector<2x1x8xf32>
    %cst_14 = arith.constant dense<0xFF800000> : vector<2x1xf32>
    %38 = vector.multi_reduction <maximumf>, %37, %cst_14 [2] : vector<2x1x8xf32> to vector<2x1xf32>
    %39 = vector.shape_cast %38 : vector<2x1xf32> to vector<2x1x1xf32>
    %40 = arith.mulf %39, %39 : vector<2x1x1xf32>
    %cst_15 = arith.constant 1.000000e+00 : f32
    %41 = vector.broadcast %cst_15 : f32 to vector<2x1x1xf32>
    %42 = arith.divf %41, %40 : vector<2x1x1xf32>
    %43 = vector.broadcast %42 : vector<2x1x1xf32> to vector<2x8x8xf32>
    %44 = arith.mulf %34, %43 : vector<2x8x8xf32>
    %cst_16 = arith.constant dense<0.000000e+00> : vector<2x8x8xf32>
    %45 = tpu.matmul %34, %44, %cst_16 {dimension_numbers = #tpu.dot_dimension_numbers<[2], [1], [1], [2], [0, 0, 0, 1, 1, 2], [0], [0]>} : vector<2x8x8xf32>, vector<2x8x8xf32>, vector<2x8x8xf32> -> vector<2x8x8xf32>
    %46 = vector.shape_cast %16 : vector<8x8xf32> to vector<1x8x8xf32>
    %cst_17 = arith.constant 2.000000e+00 : f32
    %47 = vector.broadcast %cst_17 : f32 to vector<1x8x8xf32>
    %48 = arith.mulf %47, %46 : vector<1x8x8xf32>
    %49 = vector.broadcast %48 : vector<1x8x8xf32> to vector<2x8x8xf32>
    %50 = arith.subf %49, %45 : vector<2x8x8xf32>
    %cst_18 = arith.constant dense<0.000000e+00> : vector<2x8x8xf32>
    %51 = tpu.matmul %44, %50, %cst_18 {dimension_numbers = #tpu.dot_dimension_numbers<[2], [1], [1], [2], [0, 0, 0, 1, 1, 2], [0], [0]>} : vector<2x8x8xf32>, vector<2x8x8xf32>, vector<2x8x8xf32> -> vector<2x8x8xf32>
    %cst_19 = arith.constant dense<0.000000e+00> : vector<2x8x8xf32>
    %52 = tpu.matmul %34, %51, %cst_19 {dimension_numbers = #tpu.dot_dimension_numbers<[2], [1], [1], [2], [0, 0, 0, 1, 1, 2], [0], [0]>} : vector<2x8x8xf32>, vector<2x8x8xf32>, vector<2x8x8xf32> -> vector<2x8x8xf32>
    %53 = vector.shape_cast %16 : vector<8x8xf32> to vector<1x8x8xf32>
    %cst_20 = arith.constant 2.000000e+00 : f32
    %54 = vector.broadcast %cst_20 : f32 to vector<1x8x8xf32>
    %55 = arith.mulf %54, %53 : vector<1x8x8xf32>
    %56 = vector.broadcast %55 : vector<1x8x8xf32> to vector<2x8x8xf32>
    %57 = arith.subf %56, %52 : vector<2x8x8xf32>
    %cst_21 = arith.constant dense<0.000000e+00> : vector<2x8x8xf32>
    %58 = tpu.matmul %51, %57, %cst_21 {dimension_numbers = #tpu.dot_dimension_numbers<[2], [1], [1], [2], [0, 0, 0, 1, 1, 2], [0], [0]>} : vector<2x8x8xf32>, vector<2x8x8xf32>, vector<2x8x8xf32> -> vector<2x8x8xf32>
    %cst_22 = arith.constant dense<0.000000e+00> : vector<2x8x8xf32>
    %59 = tpu.matmul %34, %58, %cst_22 {dimension_numbers = #tpu.dot_dimension_numbers<[2], [1], [1], [2], [0, 0, 0, 1, 1, 2], [0], [0]>} : vector<2x8x8xf32>, vector<2x8x8xf32>, vector<2x8x8xf32> -> vector<2x8x8xf32>
    %60 = vector.shape_cast %16 : vector<8x8xf32> to vector<1x8x8xf32>
    %cst_23 = arith.constant 2.000000e+00 : f32
    %61 = vector.broadcast %cst_23 : f32 to vector<1x8x8xf32>
    %62 = arith.mulf %61, %60 : vector<1x8x8xf32>
    %63 = vector.broadcast %62 : vector<1x8x8xf32> to vector<2x8x8xf32>
    %64 = arith.subf %63, %59 : vector<2x8x8xf32>
    %cst_24 = arith.constant dense<0.000000e+00> : vector<2x8x8xf32>
    %65 = tpu.matmul %58, %64, %cst_24 {dimension_numbers = #tpu.dot_dimension_numbers<[2], [1], [1], [2], [0, 0, 0, 1, 1, 2], [0], [0]>} : vector<2x8x8xf32>, vector<2x8x8xf32>, vector<2x8x8xf32> -> vector<2x8x8xf32>
    %cst_25 = arith.constant dense<0.000000e+00> : vector<2x8x8xf32>
    %66 = tpu.matmul %34, %65, %cst_25 {dimension_numbers = #tpu.dot_dimension_numbers<[2], [1], [1], [2], [0, 0, 0, 1, 1, 2], [0], [0]>} : vector<2x8x8xf32>, vector<2x8x8xf32>, vector<2x8x8xf32> -> vector<2x8x8xf32>
    %67 = vector.shape_cast %16 : vector<8x8xf32> to vector<1x8x8xf32>
    %cst_26 = arith.constant 2.000000e+00 : f32
    %68 = vector.broadcast %cst_26 : f32 to vector<1x8x8xf32>
    %69 = arith.mulf %68, %67 : vector<1x8x8xf32>
    %70 = vector.broadcast %69 : vector<1x8x8xf32> to vector<2x8x8xf32>
    %71 = arith.subf %70, %66 : vector<2x8x8xf32>
    %cst_27 = arith.constant dense<0.000000e+00> : vector<2x8x8xf32>
    %72 = tpu.matmul %65, %71, %cst_27 {dimension_numbers = #tpu.dot_dimension_numbers<[2], [1], [1], [2], [0, 0, 0, 1, 1, 2], [0], [0]>} : vector<2x8x8xf32>, vector<2x8x8xf32>, vector<2x8x8xf32> -> vector<2x8x8xf32>
    %cst_28 = arith.constant dense<0.000000e+00> : vector<2x8x8xf32>
    %73 = tpu.matmul %34, %72, %cst_28 {dimension_numbers = #tpu.dot_dimension_numbers<[2], [1], [1], [2], [0, 0, 0, 1, 1, 2], [0], [0]>} : vector<2x8x8xf32>, vector<2x8x8xf32>, vector<2x8x8xf32> -> vector<2x8x8xf32>
    %74 = vector.shape_cast %16 : vector<8x8xf32> to vector<1x8x8xf32>
    %cst_29 = arith.constant 2.000000e+00 : f32
    %75 = vector.broadcast %cst_29 : f32 to vector<1x8x8xf32>
    %76 = arith.mulf %75, %74 : vector<1x8x8xf32>
    %77 = vector.broadcast %76 : vector<1x8x8xf32> to vector<2x8x8xf32>
    %78 = arith.subf %77, %73 : vector<2x8x8xf32>
    %cst_30 = arith.constant dense<0.000000e+00> : vector<2x8x8xf32>
    %79 = tpu.matmul %72, %78, %cst_30 {dimension_numbers = #tpu.dot_dimension_numbers<[2], [1], [1], [2], [0, 0, 0, 1, 1, 2], [0], [0]>} : vector<2x8x8xf32>, vector<2x8x8xf32>, vector<2x8x8xf32> -> vector<2x8x8xf32>
    %cst_31 = arith.constant dense<0.000000e+00> : vector<2x8x8xf32>
    %80 = tpu.matmul %34, %79, %cst_31 {dimension_numbers = #tpu.dot_dimension_numbers<[2], [1], [1], [2], [0, 0, 0, 1, 1, 2], [0], [0]>} : vector<2x8x8xf32>, vector<2x8x8xf32>, vector<2x8x8xf32> -> vector<2x8x8xf32>
    %81 = vector.shape_cast %16 : vector<8x8xf32> to vector<1x8x8xf32>
    %cst_32 = arith.constant 2.000000e+00 : f32
    %82 = vector.broadcast %cst_32 : f32 to vector<1x8x8xf32>
    %83 = arith.mulf %82, %81 : vector<1x8x8xf32>
    %84 = vector.broadcast %83 : vector<1x8x8xf32> to vector<2x8x8xf32>
    %85 = arith.subf %84, %80 : vector<2x8x8xf32>
    %cst_33 = arith.constant dense<0.000000e+00> : vector<2x8x8xf32>
    %86 = tpu.matmul %79, %85, %cst_33 {dimension_numbers = #tpu.dot_dimension_numbers<[2], [1], [1], [2], [0, 0, 0, 1, 1, 2], [0], [0]>} : vector<2x8x8xf32>, vector<2x8x8xf32>, vector<2x8x8xf32> -> vector<2x8x8xf32>
    %cst_34 = arith.constant dense<0.000000e+00> : vector<2x8x8xf32>
    %87 = tpu.matmul %34, %86, %cst_34 {dimension_numbers = #tpu.dot_dimension_numbers<[2], [1], [1], [2], [0, 0, 0, 1, 1, 2], [0], [0]>} : vector<2x8x8xf32>, vector<2x8x8xf32>, vector<2x8x8xf32> -> vector<2x8x8xf32>
    %88 = vector.shape_cast %16 : vector<8x8xf32> to vector<1x8x8xf32>
    %cst_35 = arith.constant 2.000000e+00 : f32
    %89 = vector.broadcast %cst_35 : f32 to vector<1x8x8xf32>
    %90 = arith.mulf %89, %88 : vector<1x8x8xf32>
    %91 = vector.broadcast %90 : vector<1x8x8xf32> to vector<2x8x8xf32>
    %92 = arith.subf %91, %87 : vector<2x8x8xf32>
    %cst_36 = arith.constant dense<0.000000e+00> : vector<2x8x8xf32>
    %93 = tpu.matmul %86, %92, %cst_36 {dimension_numbers = #tpu.dot_dimension_numbers<[2], [1], [1], [2], [0, 0, 0, 1, 1, 2], [0], [0]>} : vector<2x8x8xf32>, vector<2x8x8xf32>, vector<2x8x8xf32> -> vector<2x8x8xf32>
    %cst_37 = arith.constant dense<0.000000e+00> : vector<2x8x8xf32>
    %94 = tpu.matmul %34, %93, %cst_37 {dimension_numbers = #tpu.dot_dimension_numbers<[2], [1], [1], [2], [0, 0, 0, 1, 1, 2], [0], [0]>} : vector<2x8x8xf32>, vector<2x8x8xf32>, vector<2x8x8xf32> -> vector<2x8x8xf32>
    %95 = vector.shape_cast %16 : vector<8x8xf32> to vector<1x8x8xf32>
    %cst_38 = arith.constant 2.000000e+00 : f32
    %96 = vector.broadcast %cst_38 : f32 to vector<1x8x8xf32>
    %97 = arith.mulf %96, %95 : vector<1x8x8xf32>
    %98 = vector.broadcast %97 : vector<1x8x8xf32> to vector<2x8x8xf32>
    %99 = arith.subf %98, %94 : vector<2x8x8xf32>
    %cst_39 = arith.constant dense<0.000000e+00> : vector<2x8x8xf32>
    %100 = tpu.matmul %93, %99, %cst_39 {dimension_numbers = #tpu.dot_dimension_numbers<[2], [1], [1], [2], [0, 0, 0, 1, 1, 2], [0], [0]>} : vector<2x8x8xf32>, vector<2x8x8xf32>, vector<2x8x8xf32> -> vector<2x8x8xf32>
    %cst_40 = arith.constant dense<0.000000e+00> : vector<2x8x8xf32>
    %101 = tpu.matmul %34, %100, %cst_40 {dimension_numbers = #tpu.dot_dimension_numbers<[2], [1], [1], [2], [0, 0, 0, 1, 1, 2], [0], [0]>} : vector<2x8x8xf32>, vector<2x8x8xf32>, vector<2x8x8xf32> -> vector<2x8x8xf32>
    %102 = vector.shape_cast %16 : vector<8x8xf32> to vector<1x8x8xf32>
    %cst_41 = arith.constant 2.000000e+00 : f32
    %103 = vector.broadcast %cst_41 : f32 to vector<1x8x8xf32>
    %104 = arith.mulf %103, %102 : vector<1x8x8xf32>
    %105 = vector.broadcast %104 : vector<1x8x8xf32> to vector<2x8x8xf32>
    %106 = arith.subf %105, %101 : vector<2x8x8xf32>
    %cst_42 = arith.constant dense<0.000000e+00> : vector<2x8x8xf32>
    %107 = tpu.matmul %100, %106, %cst_42 {dimension_numbers = #tpu.dot_dimension_numbers<[2], [1], [1], [2], [0, 0, 0, 1, 1, 2], [0], [0]>} : vector<2x8x8xf32>, vector<2x8x8xf32>, vector<2x8x8xf32> -> vector<2x8x8xf32>
    %cst_43 = arith.constant dense<0.000000e+00> : vector<2x8x8xf32>
    %108 = tpu.matmul %34, %107, %cst_43 {dimension_numbers = #tpu.dot_dimension_numbers<[2], [1], [1], [2], [0, 0, 0, 1, 1, 2], [0], [0]>} : vector<2x8x8xf32>, vector<2x8x8xf32>, vector<2x8x8xf32> -> vector<2x8x8xf32>
    %109 = vector.shape_cast %16 : vector<8x8xf32> to vector<1x8x8xf32>
    %cst_44 = arith.constant 2.000000e+00 : f32
    %110 = vector.broadcast %cst_44 : f32 to vector<1x8x8xf32>
    %111 = arith.mulf %110, %109 : vector<1x8x8xf32>
    %112 = vector.broadcast %111 : vector<1x8x8xf32> to vector<2x8x8xf32>
    %113 = arith.subf %112, %108 : vector<2x8x8xf32>
    %cst_45 = arith.constant dense<0.000000e+00> : vector<2x8x8xf32>
    %114 = tpu.matmul %107, %113, %cst_45 {dimension_numbers = #tpu.dot_dimension_numbers<[2], [1], [1], [2], [0, 0, 0, 1, 1, 2], [0], [0]>} : vector<2x8x8xf32>, vector<2x8x8xf32>, vector<2x8x8xf32> -> vector<2x8x8xf32>
    %115 = vector.extract_strided_slice %114 {offsets = [0, 0, 0], sizes = [1, 8, 8], strides = [1, 1, 1]} : vector<2x8x8xf32> to vector<1x8x8xf32>
    %116 = vector.shape_cast %115 : vector<1x8x8xf32> to vector<8x8xf32>
    %117 = vector.extract_strided_slice %34 {offsets = [1, 0, 0], sizes = [1, 8, 8], strides = [1, 1, 1]} : vector<2x8x8xf32> to vector<1x8x8xf32>
    %118 = vector.shape_cast %117 : vector<1x8x8xf32> to vector<8x8xf32>
    %119 = arith.mulf %116, %118 : vector<8x8xf32>
    %120 = vector.shape_cast %119 : vector<8x8xf32> to vector<1x8x8xf32>
    %cst_46 = arith.constant dense<0.000000e+00> : vector<1xf32>
    %121 = vector.multi_reduction <add>, %120, %cst_46 [1, 2] : vector<1x8x8xf32> to vector<1xf32>
    %122 = vector.shape_cast %121 : vector<1xf32> to vector<1x1x1xf32>
    %123 = vector.extract %122[0, 0, 0] : f32 from vector<1x1x1xf32>
    %124 = vector.extract_strided_slice %114 {offsets = [1, 0, 0], sizes = [1, 8, 8], strides = [1, 1, 1]} : vector<2x8x8xf32> to vector<1x8x8xf32>
    %125 = vector.shape_cast %124 : vector<1x8x8xf32> to vector<8x8xf32>
    %126 = vector.extract_strided_slice %34 {offsets = [0, 0, 0], sizes = [1, 8, 8], strides = [1, 1, 1]} : vector<2x8x8xf32> to vector<1x8x8xf32>
    %127 = vector.shape_cast %126 : vector<1x8x8xf32> to vector<8x8xf32>
    %128 = arith.mulf %125, %127 : vector<8x8xf32>
    %129 = vector.shape_cast %128 : vector<8x8xf32> to vector<1x8x8xf32>
    %cst_47 = arith.constant dense<0.000000e+00> : vector<1xf32>
    %130 = vector.multi_reduction <add>, %129, %cst_47 [1, 2] : vector<1x8x8xf32> to vector<1xf32>
    %131 = vector.shape_cast %130 : vector<1xf32> to vector<1x1x1xf32>
    %132 = vector.extract %131[0, 0, 0] : f32 from vector<1x1x1xf32>
    %133 = arith.addf %123, %132 : f32
    %cst_48 = arith.constant 5.000000e-01 : f32
    %134 = arith.mulf %cst_48, %133 : f32
    %cst_49 = arith.constant 8.000000e+00 : f32
    %135 = arith.subf %134, %cst_49 : f32
    %c0_50 = arith.constant 0 : index
    %136 = memref.load %arg8[%c0_50] : memref<1xf32, #tpu.memory_space<smem>>
    memref.store %135, %arg8[%c0_50] : memref<1xf32, #tpu.memory_space<smem>>
    %137 = vector.extract_strided_slice %5 {offsets = [0, 0], sizes = [32, 128], strides = [1, 1]} : vector<64x256xf32> to vector<32x128xf32>
    %c0_51 = arith.constant 0 : index
    %c0_52 = arith.constant 0 : index
    %c0_53 = arith.constant 0 : index
    %138 = vector.load %arg3[%c0_51, %c0_52, %c0_53] : memref<2x64x32xf32, #tpu.memory_space<vmem>>, vector<1x64x32xf32>
    %139 = vector.shape_cast %138 : vector<1x64x32xf32> to vector<64x32xf32>
    %cst_54 = arith.constant dense<0.000000e+00> : vector<64x128xf32>
    %140 = tpu.matmul %139, %137, %cst_54 {dimension_numbers = #tpu.dot_dimension_numbers<[1], [0], [0], [1], [0, 0, 1, 1], [], []>} : vector<64x32xf32>, vector<32x128xf32>, vector<64x128xf32> -> vector<64x128xf32>
    %141 = vector.extract_strided_slice %5 {offsets = [0, 128], sizes = [32, 128], strides = [1, 1]} : vector<64x256xf32> to vector<32x128xf32>
    %c1 = arith.constant 1 : index
    %c0_55 = arith.constant 0 : index
    %c0_56 = arith.constant 0 : index
    %142 = vector.load %arg3[%c1, %c0_55, %c0_56] : memref<2x64x32xf32, #tpu.memory_space<vmem>>, vector<1x64x32xf32>
    %143 = vector.shape_cast %142 : vector<1x64x32xf32> to vector<64x32xf32>
    %cst_57 = arith.constant dense<0.000000e+00> : vector<64x128xf32>
    %144 = tpu.matmul %143, %141, %cst_57 {dimension_numbers = #tpu.dot_dimension_numbers<[1], [0], [0], [1], [0, 0, 1, 1], [], []>} : vector<64x32xf32>, vector<32x128xf32>, vector<64x128xf32> -> vector<64x128xf32>
    %145 = arith.addf %140, %144 : vector<64x128xf32>
    %cst_58 = arith.constant 0.000000e+00 : f32
    %146 = vector.broadcast %cst_58 : f32 to vector<64x128xf32>
    %147 = arith.cmpf ogt, %145, %146 : vector<64x128xf32>
    %cst_59 = arith.constant 0.000000e+00 : f32
    %148 = vector.broadcast %cst_59 : f32 to vector<64x128xf32>
    %149 = arith.minimumf %145, %148 : vector<64x128xf32>
    %150 = math.exp %149 : vector<64x128xf32>
    %cst_60 = arith.constant 1.000000e+00 : f32
    %151 = vector.broadcast %cst_60 : f32 to vector<64x128xf32>
    %152 = arith.subf %150, %151 : vector<64x128xf32>
    %153 = arith.select %147, %145, %152 : vector<64x128xi1>, vector<64x128xf32>
    %c0_61 = arith.constant 0 : index
    %c0_62 = arith.constant 0 : index
    %154 = vector.load %arg4[%c0_61, %c0_62] : memref<128x16xf32, #tpu.memory_space<vmem>>, vector<128x16xf32>
    %cst_63 = arith.constant dense<0.000000e+00> : vector<64x16xf32>
    %155 = tpu.matmul %153, %154, %cst_63 {dimension_numbers = #tpu.dot_dimension_numbers<[1], [0], [0], [1], [0, 0, 1, 1], [], []>} : vector<64x128xf32>, vector<128x16xf32>, vector<64x16xf32> -> vector<64x16xf32>
    %156 = vector.shape_cast %155 : vector<64x16xf32> to vector<4x16x16xf32>
    %c0_64 = arith.constant 0 : index
    %c0_65 = arith.constant 0 : index
    %157 = vector.load %arg6[%c0_64, %c0_65] : memref<4x8xf32, #tpu.memory_space<vmem>>, vector<4x8xf32>
    %158 = vector.extract_strided_slice %157 {offsets = [0, 0], sizes = [4, 4], strides = [1, 1]} : vector<4x8xf32> to vector<4x4xf32>
    %159 = vector.extract_strided_slice %157 {offsets = [0, 4], sizes = [4, 4], strides = [1, 1]} : vector<4x8xf32> to vector<4x4xf32>
    %160 = vector.shape_cast %156 : vector<4x16x16xf32> to vector<4x1x16x16xf32>
    %c0_66 = arith.constant 0 : index
    %c0_67 = arith.constant 0 : index
    %c0_68 = arith.constant 0 : index
    %161 = vector.load %arg5[%c0_66, %c0_67, %c0_68] : memref<4x16x16xf32, #tpu.memory_space<vmem>>, vector<4x16x16xf32>
    %162 = vector.shape_cast %161 : vector<4x16x16xf32> to vector<1x4x16x16xf32>
    %163 = vector.broadcast %160 : vector<4x1x16x16xf32> to vector<4x4x16x16xf32>
    %164 = vector.broadcast %162 : vector<1x4x16x16xf32> to vector<4x4x16x16xf32>
    %165 = arith.mulf %163, %164 : vector<4x4x16x16xf32>
    %cst_69 = arith.constant dense<0.000000e+00> : vector<4x4x16xf32>
    %166 = vector.multi_reduction <add>, %165, %cst_69 [3] : vector<4x4x16x16xf32> to vector<4x4x16xf32>
    %cst_70 = arith.constant dense<0.000000e+00> : vector<4x4xf32>
    %167 = vector.multi_reduction <add>, %166, %cst_70 [2] : vector<4x4x16xf32> to vector<4x4xf32>
    %168 = arith.addf %167, %158 : vector<4x4xf32>
    %cst_71 = arith.constant dense<0xFF800000> : vector<4xf32>
    %169 = vector.multi_reduction <maximumf>, %168, %cst_71 [1] : vector<4x4xf32> to vector<4xf32>
    %170 = vector.shape_cast %169 : vector<4xf32> to vector<4x1xf32>
    %171 = vector.broadcast %170 : vector<4x1xf32> to vector<4x4xf32>
    %172 = arith.subf %168, %171 : vector<4x4xf32>
    %173 = math.exp %172 : vector<4x4xf32>
    %cst_72 = arith.constant dense<0.000000e+00> : vector<4xf32>
    %174 = vector.multi_reduction <add>, %173, %cst_72 [1] : vector<4x4xf32> to vector<4xf32>
    %175 = vector.shape_cast %174 : vector<4xf32> to vector<4x1xf32>
    %176 = math.log %175 : vector<4x1xf32>
    %177 = arith.addf %170, %176 : vector<4x1xf32>
    %178 = arith.mulf %159, %168 : vector<4x4xf32>
    %cst_73 = arith.constant dense<0.000000e+00> : vector<4xf32>
    %179 = vector.multi_reduction <add>, %178, %cst_73 [1] : vector<4x4xf32> to vector<4xf32>
    %180 = vector.shape_cast %179 : vector<4xf32> to vector<4x1xf32>
    %181 = arith.subf %177, %180 : vector<4x1xf32>
    %182 = vector.shape_cast %181 : vector<4x1xf32> to vector<1x4x1xf32>
    %cst_74 = arith.constant dense<0.000000e+00> : vector<1xf32>
    %183 = vector.multi_reduction <add>, %182, %cst_74 [1, 2] : vector<1x4x1xf32> to vector<1xf32>
    %184 = vector.shape_cast %183 : vector<1xf32> to vector<1x1x1xf32>
    %185 = vector.extract %184[0, 0, 0] : f32 from vector<1x1x1xf32>
    %cst_75 = arith.constant 2.500000e-01 : f32
    %186 = arith.mulf %185, %cst_75 : f32
    %c0_76 = arith.constant 0 : index
    %187 = memref.load %arg7[%c0_76] : memref<1xf32, #tpu.memory_space<smem>>
    memref.store %186, %arg7[%c0_76] : memref<1xf32, #tpu.memory_space<smem>>
    return
  }
}

</mosaic_0001>

<llo_original>
// kernel: forward.1
$region0: #{forward.1}
  #allocation0 [shape = 'u32[]', space=smem, size = 0x4, offset = 0x4, fixed_abs, tag = 'smem constant byte address 0x4 - core index']
  #allocation1 [shape = 'u32[144,128]{1,0:T(1,128)}', space=vmem, size = 0x12000, scoped, tag = 'internal scratch']
  %s0 = inlined_call_operand.vmem [shape: f32[64,128], index: 0, kind: input, shape index: {}]
  %s1 = inlined_call_operand.vmem [shape: f32[128,256], index: 1, kind: input, shape index: {}]
  %s2 = inlined_call_operand.vmem [shape: f32[1,256], index: 2, kind: input, shape index: {}]
  %s3 = inlined_call_operand.vmem [shape: f32[2,64,32], index: 3, kind: input, shape index: {}]
  %s4 = inlined_call_operand.vmem [shape: f32[128,16], index: 4, kind: input, shape index: {}]
  %s5 = inlined_call_operand.vmem [shape: f32[4,16,16], index: 5, kind: input, shape index: {}]
  %s6 = inlined_call_operand.vmem [shape: f32[4,8], index: 6, kind: input, shape index: {}]
  %s7 = inlined_call_operand.hbm [shape: f32[1], index: 7, kind: output, shape index: {0}]
  %s8 = inlined_call_operand.hbm [shape: f32[1], index: 8, kind: output, shape index: {1}]
  %9 = xla_tuple %s7, %s8
  %s10 = sld [smem:[#allocation0]]
  $region46: #{forward.1} parent=0
    _
  %s12 = ssub.s32 1, %s10
  %s13 = scalar_select 0, %s12, %s10
  $region1: #{forward.1} parent=0
    #allocation2 [shape = 'u8[512]{0}', space=smem, size = 0x200, scoped, tag = 'output window, operand 0, single buffered']
    #allocation3 [shape = 's32[1]{0}', space=sflag, size = 0x4, scoped, tag = 'scoped memory for forward.1']
    #allocation4 [shape = 'u8[512]{0}', space=smem, size = 0x200, scoped, tag = 'output window, operand 1, single buffered']
    #allocation5 [shape = 's32[1]{0}', space=sflag, size = 0x4, scoped, tag = 'scoped memory for forward.1']
    %14 = vsyncpa [#allocation3], 0
    %15 = vsyncpa [#allocation5], 0
    // Predicated region
    $region2: #{forward.1} parent=1 // pred_check
      _
    $region3: #{forward.1} parent=1 // pred_check_branch
      %17 = sbr.rel (0) target = $region5
    $region4: #{forward.1} parent=1 // pred_region
      _
    $region5: #{forward.1} parent=1 // pred_fallthru
      _
    // Predicated region
    $region6: #{forward.1} parent=1 // pred_check
      _
    $region7: #{forward.1} parent=1 // pred_check_branch
      %19 = sbr.rel (0) target = $region9
    $region8: #{forward.1} parent=1 // pred_region
      _
    $region9: #{forward.1} parent=1 // pred_fallthru
      _
    // Predicated region
    $region10: #{forward.1} parent=1 // pred_check
      _
    $region11: #{forward.1} parent=1 // pred_check_branch
      %21 = sbr.rel (0) target = $region13
    $region12: #{forward.1} parent=1 // pred_region
      _
    $region13: #{forward.1} parent=1 // pred_fallthru
      _
    // Predicated region
    $region14: #{forward.1} parent=1 // pred_check
      _
    $region15: #{forward.1} parent=1 // pred_check_branch
      %23 = sbr.rel (0) target = $region17
    $region16: #{forward.1} parent=1 // pred_region
      _
    $region17: #{forward.1} parent=1 // pred_fallthru
      _
    // Predicated region
    $region18: #{forward.1} parent=1 // pred_check
      _
    $region19: #{forward.1} parent=1 // pred_check_branch
      %25 = sbr.rel (0) target = $region21
    $region20: #{forward.1} parent=1 // pred_region
      _
    $region21: #{forward.1} parent=1 // pred_fallthru
      _
    // Predicated region
    $region22: #{forward.1} parent=1 // pred_check
      _
    $region23: #{forward.1} parent=1 // pred_check_branch
      %27 = sbr.rel (0) target = $region25
    $region24: #{forward.1} parent=1 // pred_region
      _
    $region25: #{forward.1} parent=1 // pred_fallthru
      _
    // Predicated region
    $region26: #{forward.1} parent=1 // pred_check
      _
    $region27: #{forward.1} parent=1 // pred_check_branch
      %29 = sbr.rel (0) target = $region29
    $region28: #{forward.1} parent=1 // pred_region
      _
    $region29: #{forward.1} parent=1 // pred_fallthru
      _
    %v30 = vld [vmem:[%s0] sm:$0xff]
    %v31 = vld [vmem:[%s0 + $0x8] sm:$0xff]
    %v32 = vld [vmem:[%s0 + $0x10] sm:$0xff]
    %v33 = vld [vmem:[%s0 + $0x18] sm:$0xff]
    %v34 = vld [vmem:[%s0 + $0x20] sm:$0xff]
    %v35 = vld [vmem:[%s0 + $0x28] sm:$0xff]
    %v36 = vld [vmem:[%s0 + $0x30] sm:$0xff]
    %v37 = vld [vmem:[%s0 + $0x38] sm:$0xff]
    %v38 = vld [vmem:[%s1] sm:$0xff]
    %v39 = vld [vmem:[%s1 + $0x8] sm:$0xff]
    %v40 = vld [vmem:[%s1 + $0x10] sm:$0xff]
    %v41 = vld [vmem:[%s1 + $0x18] sm:$0xff]
    %v42 = vld [vmem:[%s1 + $0x20] sm:$0xff]
    %v43 = vld [vmem:[%s1 + $0x28] sm:$0xff]
    %v44 = vld [vmem:[%s1 + $0x30] sm:$0xff]
    %v45 = vld [vmem:[%s1 + $0x38] sm:$0xff]
    %v46 = vld [vmem:[%s1 + $0x40] sm:$0xff]
    %v47 = vld [vmem:[%s1 + $0x48] sm:$0xff]
    %v48 = vld [vmem:[%s1 + $0x50] sm:$0xff]
    %v49 = vld [vmem:[%s1 + $0x58] sm:$0xff]
    %v50 = vld [vmem:[%s1 + $0x60] sm:$0xff]
    %v51 = vld [vmem:[%s1 + $0x68] sm:$0xff]
    %v52 = vld [vmem:[%s1 + $0x70] sm:$0xff]
    %v53 = vld [vmem:[%s1 + $0x78] sm:$0xff]
    %v54 = vld [vmem:[%s1 + $0x80] sm:$0xff]
    %v55 = vld [vmem:[%s1 + $0x88] sm:$0xff]
    %v56 = vld [vmem:[%s1 + $0x90] sm:$0xff]
    %v57 = vld [vmem:[%s1 + $0x98] sm:$0xff]
    %v58 = vld [vmem:[%s1 + $0xa0] sm:$0xff]
    %v59 = vld [vmem:[%s1 + $0xa8] sm:$0xff]
    %v60 = vld [vmem:[%s1 + $0xb0] sm:$0xff]
    %v61 = vld [vmem:[%s1 + $0xb8] sm:$0xff]
    %v62 = vld [vmem:[%s1 + $0xc0] sm:$0xff]
    %v63 = vld [vmem:[%s1 + $0xc8] sm:$0xff]
    %v64 = vld [vmem:[%s1 + $0xd0] sm:$0xff]
    %v65 = vld [vmem:[%s1 + $0xd8] sm:$0xff]
    %v66 = vld [vmem:[%s1 + $0xe0] sm:$0xff]
    %v67 = vld [vmem:[%s1 + $0xe8] sm:$0xff]
    %v68 = vld [vmem:[%s1 + $0xf0] sm:$0xff]
    %v69 = vld [vmem:[%s1 + $0xf8] sm:$0xff]
    %v70 = vld [vmem:[%s2] sm:$0x3]
    %v72 = vlaneseq
    %v73 = vshrl.u32 %v72, 7
    %v74 = vsub.s32 0, %v73
    %v75 = vrot.slane %v70, %v74
    %v76 = vlaneseq
    %v77 = vshrl.u32 %v76, 7
    %v78 = vsub.s32 1, %v77
    %v79 = vrot.slane %v70, %v78
    %82 = vmatprep.subr.mxu0 %v39
    %83 = vmatpush1.msra.mxu0 %v38
    %84 = vmatprep.subr.mxu0 %v41
    %85 = vmatpush1.msra.mxu0 %v40
    %86 = vmatprep.subr.mxu0 %v43
    %87 = vmatpush1.msra.mxu0 %v42
    %88 = vmatprep.subr.mxu0 %v45
    %89 = vmatpush1.msra.mxu0 %v44
    %90 = vmatprep.subr.mxu0 %v47
    %91 = vmatpush1.msra.mxu0 %v46
    %92 = vmatprep.subr.mxu0 %v49
    %93 = vmatpush1.msra.mxu0 %v48
    %94 = vmatprep.subr.mxu0 %v51
    %95 = vmatpush1.msra.mxu0 %v50
    %96 = vmatprep.subr.mxu0 %v53
    %97 = vmatpush1.msra.mxu0 %v52
    %98 = vmatprep.subr.mxu0 %v55
    %99 = vmatpush1.msra.mxu0 %v54
    %100 = vmatprep.subr.mxu0 %v57
    %101 = vmatpush1.msra.mxu0 %v56
    %102 = vmatprep.subr.mxu0 %v59
    %103 = vmatpush1.msra.mxu0 %v58
    %104 = vmatprep.subr.mxu0 %v61
    %105 = vmatpush1.msra.mxu0 %v60
    %106 = vmatprep.subr.mxu0 %v63
    %107 = vmatpush1.msra.mxu0 %v62
    %108 = vmatprep.subr.mxu0 %v65
    %109 = vmatpush1.msra.mxu0 %v64
    %110 = vmatprep.subr.mxu0 %v67
    %111 = vmatpush1.msra.mxu0 %v66
    %112 = vmatprep.subr.mxu0 %v69
    %113 = vmatpush1.msra.mxu0 %v68
    %114 = vmatprep.subr.mxu0 0.0
    %115 = vmatpush1.msra.mxu0 0.0
    %116 = vmatprep.subr.mxu0 0.0
    %117 = vmatpush1.msra.mxu0 0.0
    %118 = vmatprep.subr.mxu0 0.0
    %119 = vmatpush1.msra.mxu0 0.0
    %120 = vmatprep.subr.mxu0 0.0
    %121 = vmatpush1.msra.mxu0 0.0
    %122 = vmatprep.subr.mxu0 0.0
    %123 = vmatpush1.msra.mxu0 0.0
    %124 = vmatprep.subr.mxu0 0.0
    %125 = vmatpush1.msra.mxu0 0.0
    %126 = vmatprep.subr.mxu0 0.0
    %127 = vmatpush1.msra.mxu0 0.0
    %128 = vmatprep.subr.mxu0 0.0
    %129 = vmatpush1.msra.mxu0 0.0
    %130 = vmatprep.subr.mxu0 0.0
    %131 = vmatpush1.msra.mxu0 0.0
    %132 = vmatprep.subr.mxu0 0.0
    %133 = vmatpush1.msra.mxu0 0.0
    %134 = vmatprep.subr.mxu0 0.0
    %135 = vmatpush1.msra.mxu0 0.0
    %136 = vmatprep.subr.mxu0 0.0
    %137 = vmatpush1.msra.mxu0 0.0
    %138 = vmatprep.subr.mxu0 0.0
    %139 = vmatpush1.msra.mxu0 0.0
    %140 = vmatprep.subr.mxu0 0.0
    %141 = vmatpush1.msra.mxu0 0.0
    %142 = vmatprep.subr.mxu0 0.0
    %143 = vmatpush1.msra.mxu0 0.0
    %144 = vmatprep.subr.mxu0 0.0
    %145 = vmatpush1.msra.mxu0 0.0
    %146 = vmatprep.mubr.f32.mxu0 0.0
    %147 = vmatmul.mubr.f32.gmra.mrb[0].mxu0 %v30
    %v148 = vpop.f32.mrb[0].mxu0
    %v149 = vadd.f32 %v75, %v148
    %v150 = vpop.f32.mrb[0].mxu0
    %v151 = vadd.f32 %v79, %v150
    %152 = vmatprep.mubr.f32.mxu0 0.0
    %153 = vmatmul.mubr.f32.gmra.mrb[0].mxu0 %v31
    %v154 = vpop.f32.mrb[0].mxu0
    %v155 = vadd.f32 %v75, %v154
    %v156 = vpop.f32.mrb[0].mxu0
    %v157 = vadd.f32 %v79, %v156
    %158 = vmatprep.mubr.f32.mxu0 0.0
    %159 = vmatmul.mubr.f32.gmra.mrb[0].mxu0 %v32
    %v160 = vpop.f32.mrb[0].mxu0
    %v161 = vadd.f32 %v75, %v160
    %v162 = vpop.f32.mrb[0].mxu0
    %v163 = vadd.f32 %v79, %v162
    %164 = vmatprep.mubr.f32.mxu0 0.0
    %165 = vmatmul.mubr.f32.gmra.mrb[0].mxu0 %v33
    %v166 = vpop.f32.mrb[0].mxu0
    %v167 = vadd.f32 %v75, %v166
    %v168 = vpop.f32.mrb[0].mxu0
    %v169 = vadd.f32 %v79, %v168
    %170 = vmatprep.mubr.f32.mxu0 0.0
    %171 = vmatmul.mubr.f32.gmra.mrb[0].mxu0 %v34
    %v172 = vpop.f32.mrb[0].mxu0
    %v173 = vadd.f32 %v75, %v172
    %v174 = vpop.f32.mrb[0].mxu0
    %v175 = vadd.f32 %v79, %v174
    %176 = vmatprep.mubr.f32.mxu0 0.0
    %177 = vmatmul.mubr.f32.gmra.mrb[0].mxu0 %v35
    %v178 = vpop.f32.mrb[0].mxu0
    %v179 = vadd.f32 %v75, %v178
    %v180 = vpop.f32.mrb[0].mxu0
    %v181 = vadd.f32 %v79, %v180
    %182 = vmatprep.mubr.f32.mxu0 0.0
    %183 = vmatmul.mubr.f32.gmra.mrb[0].mxu0 %v36
    %v184 = vpop.f32.mrb[0].mxu0
    %v185 = vadd.f32 %v75, %v184
    %v186 = vpop.f32.mrb[0].mxu0
    %v187 = vadd.f32 %v79, %v186
    %188 = vmatprep.mubr.f32.mxu0 0.0
    %189 = vmatmul.mubr.f32.gmra.mrb[0].mxu0 %v37
    %v190 = vpop.f32.mrb[0].mxu0
    %v191 = vadd.f32 %v75, %v190
    %v192 = vpop.f32.mrb[0].mxu0
    %v193 = vadd.f32 %v79, %v192
    %194 = vdwg.mxu0
    %195 = vmatprep.subr.mxu0 %v151
    %196 = vmatpush1.xpose.msra.mxu0 %v149
    %197 = vmatprep.subr.mxu0 0.0
    %198 = vmatpush1.xpose.msra.mxu0 0.0
    %199 = vmatprep.subr.mxu0 0.0
    %200 = vmatpush1.xpose.msra.mxu0 0.0
    %201 = vmatprep.subr.mxu0 0.0
    %202 = vmatpush1.xpose.msra.mxu0 0.0
    %203 = vmatprep.subr.mxu0 0.0
    %204 = vmatpush1.xpose.msra.mxu0 0.0
    %205 = vmatprep.subr.mxu0 0.0
    %206 = vmatpush1.xpose.msra.mxu0 0.0
    %207 = vmatprep.subr.mxu0 0.0
    %208 = vmatpush1.xpose.msra.mxu0 0.0
    %209 = vmatprep.subr.mxu0 0.0
    %210 = vmatpush1.xpose.msra.mxu0 0.0
    %211 = vmatprep.subr.mxu0 0.0
    %212 = vmatpush1.xpose.msra.mxu0 0.0
    %213 = vmatprep.subr.mxu0 0.0
    %214 = vmatpush1.xpose.msra.mxu0 0.0
    %215 = vmatprep.subr.mxu0 0.0
    %216 = vmatpush1.xpose.msra.mxu0 0.0
    %217 = vmatprep.subr.mxu0 0.0
    %218 = vmatpush1.xpose.msra.mxu0 0.0
    %219 = vmatprep.subr.mxu0 0.0
    %220 = vmatpush1.xpose.msra.mxu0 0.0
    %221 = vmatprep.subr.mxu0 0.0
    %222 = vmatpush1.xpose.msra.mxu0 0.0
    %223 = vmatprep.subr.mxu0 0.0
    %224 = vmatpush1.xpose.msra.mxu0 0.0
    %225 = vmatprep.subr.mxu0 0.0
    %226 = vmatpush1.xpose.msra.mxu0 0.0
    %227 = vmatprep.subr.mxu0 0.0
    %228 = vmatpush1.xpose.msra.mxu0 0.0
    %229 = vmatprep.subr.mxu0 0.0
    %230 = vmatpush1.xpose.msra.mxu0 0.0
    %231 = vmatprep.subr.mxu0 0.0
    %232 = vmatpush1.xpose.msra.mxu0 0.0
    %233 = vmatprep.subr.mxu0 0.0
    %234 = vmatpush1.xpose.msra.mxu0 0.0
    %235 = vmatprep.subr.mxu0 0.0
    %236 = vmatpush1.xpose.msra.mxu0 0.0
    %237 = vmatprep.subr.mxu0 0.0
    %238 = vmatpush1.xpose.msra.mxu0 0.0
    %239 = vmatprep.subr.mxu0 0.0
    %240 = vmatpush1.xpose.msra.mxu0 0.0
    %241 = vmatprep.subr.mxu0 0.0
    %242 = vmatpush1.xpose.msra.mxu0 0.0
    %243 = vmatprep.subr.mxu0 0.0
    %244 = vmatpush1.xpose.msra.mxu0 0.0
    %245 = vmatprep.subr.mxu0 0.0
    %246 = vmatpush1.xpose.msra.mxu0 0.0
    %247 = vmatprep.subr.mxu0 0.0
    %248 = vmatpush1.xpose.msra.mxu0 0.0
    %249 = vmatprep.subr.mxu0 0.0
    %250 = vmatpush1.xpose.msra.mxu0 0.0
    %251 = vmatprep.subr.mxu0 0.0
    %252 = vmatpush1.xpose.msra.mxu0 0.0
    %253 = vmatprep.subr.mxu0 0.0
    %254 = vmatpush1.xpose.msra.mxu0 0.0
    %255 = vmatprep.subr.mxu0 0.0
    %256 = vmatpush1.xpose.msra.mxu0 0.0
    %257 = vmatprep.subr.mxu0 0.0
    %258 = vmatpush1.xpose.msra.mxu0 0.0
    %259 = vmatprep.mubr.f32.mxu0 %v151
    %260 = vmatmul.mubr.f32.gmra.mrb[0].mxu0 %v149
    %v261 = vpop.f32.mrb[0].mxu0
    %v262 = vadd.f32 0.0, %v261
    %v263 = vpop.f32.mrb[0].mxu0
    %264 = vdwg.mxu0
    %265 = vmatprep.subr.mxu0 %v157
    %266 = vmatpush1.xpose.msra.mxu0 %v155
    %267 = vmatprep.subr.mxu0 0.0
    %268 = vmatpush1.xpose.msra.mxu0 0.0
    %269 = vmatprep.subr.mxu0 0.0
    %270 = vmatpush1.xpose.msra.mxu0 0.0
    %271 = vmatprep.subr.mxu0 0.0
    %272 = vmatpush1.xpose.msra.mxu0 0.0
    %273 = vmatprep.subr.mxu0 0.0
    %274 = vmatpush1.xpose.msra.mxu0 0.0
    %275 = vmatprep.subr.mxu0 0.0
    %276 = vmatpush1.xpose.msra.mxu0 0.0
    %277 = vmatprep.subr.mxu0 0.0
    %278 = vmatpush1.xpose.msra.mxu0 0.0
    %279 = vmatprep.subr.mxu0 0.0
    %280 = vmatpush1.xpose.msra.mxu0 0.0
    %281 = vmatprep.subr.mxu0 0.0
    %282 = vmatpush1.xpose.msra.mxu0 0.0
    %283 = vmatprep.subr.mxu0 0.0
    %284 = vmatpush1.xpose.msra.mxu0 0.0
    %285 = vmatprep.subr.mxu0 0.0
    %286 = vmatpush1.xpose.msra.mxu0 0.0
    %287 = vmatprep.subr.mxu0 0.0
    %288 = vmatpush1.xpose.msra.mxu0 0.0
    %289 = vmatprep.subr.mxu0 0.0
    %290 = vmatpush1.xpose.msra.mxu0 0.0
    %291 = vmatprep.subr.mxu0 0.0
    %292 = vmatpush1.xpose.msra.mxu0 0.0
    %293 = vmatprep.subr.mxu0 0.0
    %294 = vmatpush1.xpose.msra.mxu0 0.0
    %295 = vmatprep.subr.mxu0 0.0
    %296 = vmatpush1.xpose.msra.mxu0 0.0
    %297 = vmatprep.subr.mxu0 0.0
    %298 = vmatpush1.xpose.msra.mxu0 0.0
    %299 = vmatprep.subr.mxu0 0.0
    %300 = vmatpush1.xpose.msra.mxu0 0.0
    %301 = vmatprep.subr.mxu0 0.0
    %302 = vmatpush1.xpose.msra.mxu0 0.0
    %303 = vmatprep.subr.mxu0 0.0
    %304 = vmatpush1.xpose.msra.mxu0 0.0
    %305 = vmatprep.subr.mxu0 0.0
    %306 = vmatpush1.xpose.msra.mxu0 0.0
    %307 = vmatprep.subr.mxu0 0.0
    %308 = vmatpush1.xpose.msra.mxu0 0.0
    %309 = vmatprep.subr.mxu0 0.0
    %310 = vmatpush1.xpose.msra.mxu0 0.0
    %311 = vmatprep.subr.mxu0 0.0
    %312 = vmatpush1.xpose.msra.mxu0 0.0
    %313 = vmatprep.subr.mxu0 0.0
    %314 = vmatpush1.xpose.msra.mxu0 0.0
    %315 = vmatprep.subr.mxu0 0.0
    %316 = vmatpush1.xpose.msra.mxu0 0.0
    %317 = vmatprep.subr.mxu0 0.0
    %318 = vmatpush1.xpose.msra.mxu0 0.0
    %319 = vmatprep.subr.mxu0 0.0
    %320 = vmatpush1.xpose.msra.mxu0 0.0
    %321 = vmatprep.subr.mxu0 0.0
    %322 = vmatpush1.xpose.msra.mxu0 0.0
    %323 = vmatprep.subr.mxu0 0.0
    %324 = vmatpush1.xpose.msra.mxu0 0.0
    %325 = vmatprep.subr.mxu0 0.0
    %326 = vmatpush1.xpose.msra.mxu0 0.0
    %327 = vmatprep.subr.mxu0 0.0
    %328 = vmatpush1.xpose.msra.mxu0 0.0
    %329 = vmatprep.mubr.f32.mxu0 %v157
    %330 = vmatmul.mubr.f32.gmra.mrb[0].mxu0 %v155
    %v331 = vpop.f32.mrb[0].mxu0
    %v332 = vadd.f32 0.0, %v331
    %v333 = vpop.f32.mrb[0].mxu0
    %334 = vdwg.mxu0
    %335 = vmatprep.subr.mxu0 %v163
    %336 = vmatpush1.xpose.msra.mxu0 %v161
    %337 = vmatprep.subr.mxu0 0.0
    %338 = vmatpush1.xpose.msra.mxu0 0.0
    %339 = vmatprep.subr.mxu0 0.0
    %340 = vmatpush1.xpose.msra.mxu0 0.0
    %341 = vmatprep.subr.mxu0 0.0
    %342 = vmatpush1.xpose.msra.mxu0 0.0
    %343 = vmatprep.subr.mxu0 0.0
    %344 = vmatpush1.xpose.msra.mxu0 0.0
    %345 = vmatprep.subr.mxu0 0.0
    %346 = vmatpush1.xpose.msra.mxu0 0.0
    %347 = vmatprep.subr.mxu0 0.0
    %348 = vmatpush1.xpose.msra.mxu0 0.0
    %349 = vmatprep.subr.mxu0 0.0
    %350 = vmatpush1.xpose.msra.mxu0 0.0
    %351 = vmatprep.subr.mxu0 0.0
    %352 = vmatpush1.xpose.msra.mxu0 0.0
    %353 = vmatprep.subr.mxu0 0.0
    %354 = vmatpush1.xpose.msra.mxu0 0.0
    %355 = vmatprep.subr.mxu0 0.0
    %356 = vmatpush1.xpose.msra.mxu0 0.0
    %357 = vmatprep.subr.mxu0 0.0
    %358 = vmatpush1.xpose.msra.mxu0 0.0
    %359 = vmatprep.subr.mxu0 0.0
    %360 = vmatpush1.xpose.msra.mxu0 0.0
    %361 = vmatprep.subr.mxu0 0.0
    %362 = vmatpush1.xpose.msra.mxu0 0.0
    %363 = vmatprep.subr.mxu0 0.0
    %364 = vmatpush1.xpose.msra.mxu0 0.0
    %365 = vmatprep.subr.mxu0 0.0
    %366 = vmatpush1.xpose.msra.mxu0 0.0
    %367 = vmatprep.subr.mxu0 0.0
    %368 = vmatpush1.xpose.msra.mxu0 0.0
    %369 = vmatprep.subr.mxu0 0.0
    %370 = vmatpush1.xpose.msra.mxu0 0.0
    %371 = vmatprep.subr.mxu0 0.0
    %372 = vmatpush1.xpose.msra.mxu0 0.0
    %373 = vmatprep.subr.mxu0 0.0
    %374 = vmatpush1.xpose.msra.mxu0 0.0
    %375 = vmatprep.subr.mxu0 0.0
    %376 = vmatpush1.xpose.msra.mxu0 0.0
    %377 = vmatprep.subr.mxu0 0.0
    %378 = vmatpush1.xpose.msra.mxu0 0.0
    %379 = vmatprep.subr.mxu0 0.0
    %380 = vmatpush1.xpose.msra.mxu0 0.0
    %381 = vmatprep.subr.mxu0 0.0
    %382 = vmatpush1.xpose.msra.mxu0 0.0
    %383 = vmatprep.subr.mxu0 0.0
    %384 = vmatpush1.xpose.msra.mxu0 0.0
    %385 = vmatprep.subr.mxu0 0.0
    %386 = vmatpush1.xpose.msra.mxu0 0.0
    %387 = vmatprep.subr.mxu0 0.0
    %388 = vmatpush1.xpose.msra.mxu0 0.0
    %389 = vmatprep.subr.mxu0 0.0
    %390 = vmatpush1.xpose.msra.mxu0 0.0
    %391 = vmatprep.subr.mxu0 0.0
    %392 = vmatpush1.xpose.msra.mxu0 0.0
    %393 = vmatprep.subr.mxu0 0.0
    %394 = vmatpush1.xpose.msra.mxu0 0.0
    %395 = vmatprep.subr.mxu0 0.0
    %396 = vmatpush1.xpose.msra.mxu0 0.0
    %397 = vmatprep.subr.mxu0 0.0
    %398 = vmatpush1.xpose.msra.mxu0 0.0
    %399 = vmatprep.mubr.f32.mxu0 %v163
    %400 = vmatmul.mubr.f32.gmra.mrb[0].mxu0 %v161
    %v401 = vpop.f32.mrb[0].mxu0
    %v402 = vadd.f32 0.0, %v401
    %v403 = vpop.f32.mrb[0].mxu0
    %404 = vdwg.mxu0
    %405 = vmatprep.subr.mxu0 %v169
    %406 = vmatpush1.xpose.msra.mxu0 %v167
    %407 = vmatprep.subr.mxu0 0.0
    %408 = vmatpush1.xpose.msra.mxu0 0.0
    %409 = vmatprep.subr.mxu0 0.0
    %410 = vmatpush1.xpose.msra.mxu0 0.0
    %411 = vmatprep.subr.mxu0 0.0
    %412 = vmatpush1.xpose.msra.mxu0 0.0
    %413 = vmatprep.subr.mxu0 0.0
    %414 = vmatpush1.xpose.msra.mxu0 0.0
    %415 = vmatprep.subr.mxu0 0.0
    %416 = vmatpush1.xpose.msra.mxu0 0.0
    %417 = vmatprep.subr.mxu0 0.0
    %418 = vmatpush1.xpose.msra.mxu0 0.0
    %419 = vmatprep.subr.mxu0 0.0
    %420 = vmatpush1.xpose.msra.mxu0 0.0
    %421 = vmatprep.subr.mxu0 0.0
    %422 = vmatpush1.xpose.msra.mxu0 0.0
    %423 = vmatprep.subr.mxu0 0.0
    %424 = vmatpush1.xpose.msra.mxu0 0.0
    %425 = vmatprep.subr.mxu0 0.0
    %426 = vmatpush1.xpose.msra.mxu0 0.0
    %427 = vmatprep.subr.mxu0 0.0
    %428 = vmatpush1.xpose.msra.mxu0 0.0
    %429 = vmatprep.subr.mxu0 0.0
    %430 = vmatpush1.xpose.msra.mxu0 0.0
    %431 = vmatprep.subr.mxu0 0.0
    %432 = vmatpush1.xpose.msra.mxu0 0.0
    %433 = vmatprep.subr.mxu0 0.0
    %434 = vmatpush1.xpose.msra.mxu0 0.0
    %435 = vmatprep.subr.mxu0 0.0
    %436 = vmatpush1.xpose.msra.mxu0 0.0
    %437 = vmatprep.subr.mxu0 0.0
    %438 = vmatpush1.xpose.msra.mxu0 0.0
    %439 = vmatprep.subr.mxu0 0.0
    %440 = vmatpush1.xpose.msra.mxu0 0.0
    %441 = vmatprep.subr.mxu0 0.0
    %442 = vmatpush1.xpose.msra.mxu0 0.0
    %443 = vmatprep.subr.mxu0 0.0
    %444 = vmatpush1.xpose.msra.mxu0 0.0
    %445 = vmatprep.subr.mxu0 0.0
    %446 = vmatpush1.xpose.msra.mxu0 0.0
    %447 = vmatprep.subr.mxu0 0.0
    %448 = vmatpush1.xpose.msra.mxu0 0.0
    %449 = vmatprep.subr.mxu0 0.0
    %450 = vmatpush1.xpose.msra.mxu0 0.0
    %451 = vmatprep.subr.mxu0 0.0
    %452 = vmatpush1.xpose.msra.mxu0 0.0
    %453 = vmatprep.subr.mxu0 0.0
    %454 = vmatpush1.xpose.msra.mxu0 0.0
    %455 = vmatprep.subr.mxu0 0.0
    %456 = vmatpush1.xpose.msra.mxu0 0.0
    %457 = vmatprep.subr.mxu0 0.0
    %458 = vmatpush1.xpose.msra.mxu0 0.0
    %459 = vmatprep.subr.mxu0 0.0
    %460 = vmatpush1.xpose.msra.mxu0 0.0
    %461 = vmatprep.subr.mxu0 0.0
    %462 = vmatpush1.xpose.msra.mxu0 0.0
    %463 = vmatprep.subr.mxu0 0.0
    %464 = vmatpush1.xpose.msra.mxu0 0.0
    %465 = vmatprep.subr.mxu0 0.0
    %466 = vmatpush1.xpose.msra.mxu0 0.0
    %467 = vmatprep.subr.mxu0 0.0
    %468 = vmatpush1.xpose.msra.mxu0 0.0
    %469 = vmatprep.mubr.f32.mxu0 %v169
    %470 = vmatmul.mubr.f32.gmra.mrb[0].mxu0 %v167
    %v471 = vpop.f32.mrb[0].mxu0
    %v472 = vadd.f32 0.0, %v471
    %v473 = vpop.f32.mrb[0].mxu0
    %474 = vdwg.mxu0
    %475 = vmatprep.subr.mxu0 %v175
    %476 = vmatpush1.xpose.msra.mxu0 %v173
    %477 = vmatprep.subr.mxu0 0.0
    %478 = vmatpush1.xpose.msra.mxu0 0.0
    %479 = vmatprep.subr.mxu0 0.0
    %480 = vmatpush1.xpose.msra.mxu0 0.0
    %481 = vmatprep.subr.mxu0 0.0
    %482 = vmatpush1.xpose.msra.mxu0 0.0
    %483 = vmatprep.subr.mxu0 0.0
    %484 = vmatpush1.xpose.msra.mxu0 0.0
    %485 = vmatprep.subr.mxu0 0.0
    %486 = vmatpush1.xpose.msra.mxu0 0.0
    %487 = vmatprep.subr.mxu0 0.0
    %488 = vmatpush1.xpose.msra.mxu0 0.0
    %489 = vmatprep.subr.mxu0 0.0
    %490 = vmatpush1.xpose.msra.mxu0 0.0
    %491 = vmatprep.subr.mxu0 0.0
    %492 = vmatpush1.xpose.msra.mxu0 0.0
    %493 = vmatprep.subr.mxu0 0.0
    %494 = vmatpush1.xpose.msra.mxu0 0.0
    %495 = vmatprep.subr.mxu0 0.0
    %496 = vmatpush1.xpose.msra.mxu0 0.0
    %497 = vmatprep.subr.mxu0 0.0
    %498 = vmatpush1.xpose.msra.mxu0 0.0
    %499 = vmatprep.subr.mxu0 0.0
    %500 = vmatpush1.xpose.msra.mxu0 0.0
    %501 = vmatprep.subr.mxu0 0.0
    %502 = vmatpush1.xpose.msra.mxu0 0.0
    %503 = vmatprep.subr.mxu0 0.0
    %504 = vmatpush1.xpose.msra.mxu0 0.0
    %505 = vmatprep.subr.mxu0 0.0
    %506 = vmatpush1.xpose.msra.mxu0 0.0
    %507 = vmatprep.subr.mxu0 0.0
    %508 = vmatpush1.xpose.msra.mxu0 0.0
    %509 = vmatprep.subr.mxu0 0.0
    %510 = vmatpush1.xpose.msra.mxu0 0.0
    %511 = vmatprep.subr.mxu0 0.0
    %512 = vmatpush1.xpose.msra.mxu0 0.0
    %513 = vmatprep.subr.mxu0 0.0
    %514 = vmatpush1.xpose.msra.mxu0 0.0
    %515 = vmatprep.subr.mxu0 0.0
    %516 = vmatpush1.xpose.msra.mxu0 0.0
    %517 = vmatprep.subr.mxu0 0.0
    %518 = vmatpush1.xpose.msra.mxu0 0.0
    %519 = vmatprep.subr.mxu0 0.0
    %520 = vmatpush1.xpose.msra.mxu0 0.0
    %521 = vmatprep.subr.mxu0 0.0
    %522 = vmatpush1.xpose.msra.mxu0 0.0
    %523 = vmatprep.subr.mxu0 0.0
    %524 = vmatpush1.xpose.msra.mxu0 0.0
    %525 = vmatprep.subr.mxu0 0.0
    %526 = vmatpush1.xpose.msra.mxu0 0.0
    %527 = vmatprep.subr.mxu0 0.0
    %528 = vmatpush1.xpose.msra.mxu0 0.0
    %529 = vmatprep.subr.mxu0 0.0
    %530 = vmatpush1.xpose.msra.mxu0 0.0
    %531 = vmatprep.subr.mxu0 0.0
    %532 = vmatpush1.xpose.msra.mxu0 0.0
    %533 = vmatprep.subr.mxu0 0.0
    %534 = vmatpush1.xpose.msra.mxu0 0.0
    %535 = vmatprep.subr.mxu0 0.0
    %536 = vmatpush1.xpose.msra.mxu0 0.0
    %537 = vmatprep.subr.mxu0 0.0
    %538 = vmatpush1.xpose.msra.mxu0 0.0
    %539 = vmatprep.mubr.f32.mxu0 %v175
    %540 = vmatmul.mubr.f32.gmra.mrb[0].mxu0 %v173
    %v541 = vpop.f32.mrb[0].mxu0
    %v542 = vadd.f32 0.0, %v541
    %v543 = vpop.f32.mrb[0].mxu0
    %544 = vdwg.mxu0
    %545 = vmatprep.subr.mxu0 %v181
    %546 = vmatpush1.xpose.msra.mxu0 %v179
    %547 = vmatprep.subr.mxu0 0.0
    %548 = vmatpush1.xpose.msra.mxu0 0.0
    %549 = vmatprep.subr.mxu0 0.0
    %550 = vmatpush1.xpose.msra.mxu0 0.0
    %551 = vmatprep.subr.mxu0 0.0
    %552 = vmatpush1.xpose.msra.mxu0 0.0
    %553 = vmatprep.subr.mxu0 0.0
    %554 = vmatpush1.xpose.msra.mxu0 0.0
    %555 = vmatprep.subr.mxu0 0.0
    %556 = vmatpush1.xpose.msra.mxu0 0.0
    %557 = vmatprep.subr.mxu0 0.0
    %558 = vmatpush1.xpose.msra.mxu0 0.0
    %559 = vmatprep.subr.mxu0 0.0
    %560 = vmatpush1.xpose.msra.mxu0 0.0
    %561 = vmatprep.subr.mxu0 0.0
    %562 = vmatpush1.xpose.msra.mxu0 0.0
    %563 = vmatprep.subr.mxu0 0.0
    %564 = vmatpush1.xpose.msra.mxu0 0.0
    %565 = vmatprep.subr.mxu0 0.0
    %566 = vmatpush1.xpose.msra.mxu0 0.0
    %567 = vmatprep.subr.mxu0 0.0
    %568 = vmatpush1.xpose.msra.mxu0 0.0
    %569 = vmatprep.subr.mxu0 0.0
    %570 = vmatpush1.xpose.msra.mxu0 0.0
    %571 = vmatprep.subr.mxu0 0.0
    %572 = vmatpush1.xpose.msra.mxu0 0.0
    %573 = vmatprep.subr.mxu0 0.0
    %574 = vmatpush1.xpose.msra.mxu0 0.0
    %575 = vmatprep.subr.mxu0 0.0
    %576 = vmatpush1.xpose.msra.mxu0 0.0
    %577 = vmatprep.subr.mxu0 0.0
    %578 = vmatpush1.xpose.msra.mxu0 0.0
    %579 = vmatprep.subr.mxu0 0.0
    %580 = vmatpush1.xpose.msra.mxu0 0.0
    %581 = vmatprep.subr.mxu0 0.0
    %582 = vmatpush1.xpose.msra.mxu0 0.0
    %583 = vmatprep.subr.mxu0 0.0
    %584 = vmatpush1.xpose.msra.mxu0 0.0
    %585 = vmatprep.subr.mxu0 0.0
    %586 = vmatpush1.xpose.msra.mxu0 0.0
    %587 = vmatprep.subr.mxu0 0.0
    %588 = vmatpush1.xpose.msra.mxu0 0.0
    %589 = vmatprep.subr.mxu0 0.0
    %590 = vmatpush1.xpose.msra.mxu0 0.0
    %591 = vmatprep.subr.mxu0 0.0
    %592 = vmatpush1.xpose.msra.mxu0 0.0
    %593 = vmatprep.subr.mxu0 0.0
    %594 = vmatpush1.xpose.msra.mxu0 0.0
    %595 = vmatprep.subr.mxu0 0.0
    %596 = vmatpush1.xpose.msra.mxu0 0.0
    %597 = vmatprep.subr.mxu0 0.0
    %598 = vmatpush1.xpose.msra.mxu0 0.0
    %599 = vmatprep.subr.mxu0 0.0
    %600 = vmatpush1.xpose.msra.mxu0 0.0
    %601 = vmatprep.subr.mxu0 0.0
    %602 = vmatpush1.xpose.msra.mxu0 0.0
    %603 = vmatprep.subr.mxu0 0.0
    %604 = vmatpush1.xpose.msra.mxu0 0.0
    %605 = vmatprep.subr.mxu0 0.0
    %606 = vmatpush1.xpose.msra.mxu0 0.0
    %607 = vmatprep.subr.mxu0 0.0
    %608 = vmatpush1.xpose.msra.mxu0 0.0
    %609 = vmatprep.mubr.f32.mxu0 %v181
    %610 = vmatmul.mubr.f32.gmra.mrb[0].mxu0 %v179
    %v611 = vpop.f32.mrb[0].mxu0
    %v612 = vadd.f32 0.0, %v611
    %v613 = vpop.f32.mrb[0].mxu0
    %614 = vdwg.mxu0
    %615 = vmatprep.subr.mxu0 %v187
    %616 = vmatpush1.xpose.msra.mxu0 %v185
    %617 = vmatprep.subr.mxu0 0.0
    %618 = vmatpush1.xpose.msra.mxu0 0.0
    %619 = vmatprep.subr.mxu0 0.0
    %620 = vmatpush1.xpose.msra.mxu0 0.0
    %621 = vmatprep.subr.mxu0 0.0
    %622 = vmatpush1.xpose.msra.mxu0 0.0
    %623 = vmatprep.subr.mxu0 0.0
    %624 = vmatpush1.xpose.msra.mxu0 0.0
    %625 = vmatprep.subr.mxu0 0.0
    %626 = vmatpush1.xpose.msra.mxu0 0.0
    %627 = vmatprep.subr.mxu0 0.0
    %628 = vmatpush1.xpose.msra.mxu0 0.0
    %629 = vmatprep.subr.mxu0 0.0
    %630 = vmatpush1.xpose.msra.mxu0 0.0
    %631 = vmatprep.subr.mxu0 0.0
    %632 = vmatpush1.xpose.msra.mxu0 0.0
    %633 = vmatprep.subr.mxu0 0.0
    %634 = vmatpush1.xpose.msra.mxu0 0.0
    %635 = vmatprep.subr.mxu0 0.0
    %636 = vmatpush1.xpose.msra.mxu0 0.0
    %637 = vmatprep.subr.mxu0 0.0
    %638 = vmatpush1.xpose.msra.mxu0 0.0
    %639 = vmatprep.subr.mxu0 0.0
    %640 = vmatpush1.xpose.msra.mxu0 0.0
    %641 = vmatprep.subr.mxu0 0.0
    %642 = vmatpush1.xpose.msra.mxu0 0.0
    %643 = vmatprep.subr.mxu0 0.0
    %644 = vmatpush1.xpose.msra.mxu0 0.0
    %645 = vmatprep.subr.mxu0 0.0
    %646 = vmatpush1.xpose.msra.mxu0 0.0
    %647 = vmatprep.subr.mxu0 0.0
    %648 = vmatpush1.xpose.msra.mxu0 0.0
    %649 = vmatprep.subr.mxu0 0.0
    %650 = vmatpush1.xpose.msra.mxu0 0.0
    %651 = vmatprep.subr.mxu0 0.0
    %652 = vmatpush1.xpose.msra.mxu0 0.0
    %653 = vmatprep.subr.mxu0 0.0
    %654 = vmatpush1.xpose.msra.mxu0 0.0
    %655 = vmatprep.subr.mxu0 0.0
    %656 = vmatpush1.xpose.msra.mxu0 0.0
    %657 = vmatprep.subr.mxu0 0.0
    %658 = vmatpush1.xpose.msra.mxu0 0.0
    %659 = vmatprep.subr.mxu0 0.0
    %660 = vmatpush1.xpose.msra.mxu0 0.0
    %661 = vmatprep.subr.mxu0 0.0
    %662 = vmatpush1.xpose.msra.mxu0 0.0
    %663 = vmatprep.subr.mxu0 0.0
    %664 = vmatpush1.xpose.msra.mxu0 0.0
    %665 = vmatprep.subr.mxu0 0.0
    %666 = vmatpush1.xpose.msra.mxu0 0.0
    %667 = vmatprep.subr.mxu0 0.0
    %668 = vmatpush1.xpose.msra.mxu0 0.0
    %669 = vmatprep.subr.mxu0 0.0
    %670 = vmatpush1.xpose.msra.mxu0 0.0
    %671 = vmatprep.subr.mxu0 0.0
    %672 = vmatpush1.xpose.msra.mxu0 0.0
    %673 = vmatprep.subr.mxu0 0.0
    %674 = vmatpush1.xpose.msra.mxu0 0.0
    %675 = vmatprep.subr.mxu0 0.0
    %676 = vmatpush1.xpose.msra.mxu0 0.0
    %677 = vmatprep.subr.mxu0 0.0
    %678 = vmatpush1.xpose.msra.mxu0 0.0
    %679 = vmatprep.mubr.f32.mxu0 %v187
    %680 = vmatmul.mubr.f32.gmra.mrb[0].mxu0 %v185
    %v681 = vpop.f32.mrb[0].mxu0
    %v682 = vadd.f32 0.0, %v681
    %v683 = vpop.f32.mrb[0].mxu0
    %684 = vdwg.mxu0
    %685 = vmatprep.subr.mxu0 %v193
    %686 = vmatpush1.xpose.msra.mxu0 %v191
    %687 = vmatprep.subr.mxu0 0.0
    %688 = vmatpush1.xpose.msra.mxu0 0.0
    %689 = vmatprep.subr.mxu0 0.0
    %690 = vmatpush1.xpose.msra.mxu0 0.0
    %691 = vmatprep.subr.mxu0 0.0
    %692 = vmatpush1.xpose.msra.mxu0 0.0
    %693 = vmatprep.subr.mxu0 0.0
    %694 = vmatpush1.xpose.msra.mxu0 0.0
    %695 = vmatprep.subr.mxu0 0.0
    %696 = vmatpush1.xpose.msra.mxu0 0.0
    %697 = vmatprep.subr.mxu0 0.0
    %698 = vmatpush1.xpose.msra.mxu0 0.0
    %699 = vmatprep.subr.mxu0 0.0
    %700 = vmatpush1.xpose.msra.mxu0 0.0
    %701 = vmatprep.subr.mxu0 0.0
    %702 = vmatpush1.xpose.msra.mxu0 0.0
    %703 = vmatprep.subr.mxu0 0.0
    %704 = vmatpush1.xpose.msra.mxu0 0.0
    %705 = vmatprep.subr.mxu0 0.0
    %706 = vmatpush1.xpose.msra.mxu0 0.0
    %707 = vmatprep.subr.mxu0 0.0
    %708 = vmatpush1.xpose.msra.mxu0 0.0
    %709 = vmatprep.subr.mxu0 0.0
    %710 = vmatpush1.xpose.msra.mxu0 0.0
    %711 = vmatprep.subr.mxu0 0.0
    %712 = vmatpush1.xpose.msra.mxu0 0.0
    %713 = vmatprep.subr.mxu0 0.0
    %714 = vmatpush1.xpose.msra.mxu0 0.0
    %715 = vmatprep.subr.mxu0 0.0
    %716 = vmatpush1.xpose.msra.mxu0 0.0
    %717 = vmatprep.subr.mxu0 0.0
    %718 = vmatpush1.xpose.msra.mxu0 0.0
    %719 = vmatprep.subr.mxu0 0.0
    %720 = vmatpush1.xpose.msra.mxu0 0.0
    %721 = vmatprep.subr.mxu0 0.0
    %722 = vmatpush1.xpose.msra.mxu0 0.0
    %723 = vmatprep.subr.mxu0 0.0
    %724 = vmatpush1.xpose.msra.mxu0 0.0
    %725 = vmatprep.subr.mxu0 0.0
    %726 = vmatpush1.xpose.msra.mxu0 0.0
    %727 = vmatprep.subr.mxu0 0.0
    %728 = vmatpush1.xpose.msra.mxu0 0.0
    %729 = vmatprep.subr.mxu0 0.0
    %730 = vmatpush1.xpose.msra.mxu0 0.0
    %731 = vmatprep.subr.mxu0 0.0
    %732 = vmatpush1.xpose.msra.mxu0 0.0
    %733 = vmatprep.subr.mxu0 0.0
    %734 = vmatpush1.xpose.msra.mxu0 0.0
    %735 = vmatprep.subr.mxu0 0.0
    %736 = vmatpush1.xpose.msra.mxu0 0.0
    %737 = vmatprep.subr.mxu0 0.0
    %738 = vmatpush1.xpose.msra.mxu0 0.0
    %739 = vmatprep.subr.mxu0 0.0
    %740 = vmatpush1.xpose.msra.mxu0 0.0
    %741 = vmatprep.subr.mxu0 0.0
    %742 = vmatpush1.xpose.msra.mxu0 0.0
    %743 = vmatprep.subr.mxu0 0.0
    %744 = vmatpush1.xpose.msra.mxu0 0.0
    %745 = vmatprep.subr.mxu0 0.0
    %746 = vmatpush1.xpose.msra.mxu0 0.0
    %747 = vmatprep.subr.mxu0 0.0
    %748 = vmatpush1.xpose.msra.mxu0 0.0
    %749 = vmatprep.mubr.f32.mxu0 %v193
    %750 = vmatmul.mubr.f32.gmra.mrb[0].mxu0 %v191
    %v751 = vpop.f32.mrb[0].mxu0
    %v752 = vadd.f32 0.0, %v751
    %v753 = vpop.f32.mrb[0].mxu0
    %754 = vdwg.mxu0
    %vm755 = vcmask 64512
    %v756 = vsel %vm755, %v262, 0.0
    %v757 = vsel %vm755, %v332, 0.0
    %v758 = vadd.f32 %v756, %v757
    %v759 = vsel %vm755, %v402, 0.0
    %v760 = vadd.f32 %v758, %v759
    %v761 = vsel %vm755, %v472, 0.0
    %v762 = vadd.f32 %v760, %v761
    %v763 = vsel %vm755, %v542, 0.0
    %v764 = vsel %vm755, %v612, 0.0
    %v765 = vadd.f32 %v763, %v764
    %v766 = vsel %vm755, %v682, 0.0
    %v767 = vadd.f32 %v765, %v766
    %v768 = vsel %vm755, %v752, 0.0
    %v769 = vadd.f32 %v767, %v768
    %v770 = vmul.f32 %v762, 0.125
    %v771 = vmul.f32 %v769, 0.125
    %v772 = vlaneseq
    %v773 = vshrl.u32 %v772, 7
    %v774 = vlaneseq
    %v775 = vand.u32 %v774, 127
    %vm776 = vcmp.eq.s32.totalorder %v773, %v775
    %v777 = vsel %vm776, 1, 0
    %v778 = vcvt.s32.f32 %v777
    %v779 = vmul.f32 %v770, %v778
    %v780 = vmul.f32 %v771, %v778
    %v781 = vsel %vm755, %v779, 0.0
    %782 = vadd.xlane.f32.xlu0 %v781
    %v783 = vpop.xlane.xlu0 %782
    %v784 = vsel %vm755, %v780, 0.0
    %785 = vadd.xlane.f32.xlu0 %v784
    %v786 = vpop.xlane.xlu0 %785
    %v787 = vrot.slane %v783, 4
    %v788 = vadd.f32 %v783, %v787
    %v789 = vrot.slane %v788, 2
    %v790 = vadd.f32 %v788, %v789
    %v791 = vrot.slane %v790, 1
    %v792 = vadd.f32 %v790, %v791
    %v793 = vrot.slane %v786, 4
    %v794 = vadd.f32 %v786, %v793
    %v795 = vrot.slane %v794, 2
    %v796 = vadd.f32 %v794, %v795
    %v797 = vrot.slane %v796, 1
    %v798 = vadd.f32 %v796, %v797
    %v799 = vmul.f32 %v792, 0.001
    %v800 = vmul.f32 %v798, 0.001
    %v801 = vrcp.pop 8.0
    %v802 = vmul.f32 %v799, %v801
    %v803 = vmul.f32 %v800, %v801
    %v804 = vadd.f32 %v802, 1e-06
    %v805 = vadd.f32 %v803, 1e-06
    %v806 = vmul.f32 %v804, %v778
    %v807 = vmul.f32 %v805, %v778
    %v808 = vadd.f32 %v770, %v806
    %v809 = vadd.f32 %v771, %v807
    %v810 = vand.u32 2147483647, %v808
    %v811 = vand.u32 2147483647, %v809
    %v812 = vsel %vm755, %v810, 0.0
    %v813 = vrot.slane %v812, 4
    %v814 = vadd.f32 %v812, %v813
    %v815 = vrot.slane %v814, 2
    %v816 = vadd.f32 %v814, %v815
    %v817 = vrot.slane %v816, 1
    %v818 = vadd.f32 %v816, %v817
    %v819 = vsel %vm755, %v811, 0.0
    %v820 = vrot.slane %v819, 4
    %v821 = vadd.f32 %v819, %v820
    %v822 = vrot.slane %v821, 2
    %v823 = vadd.f32 %v821, %v822
    %v824 = vrot.slane %v823, 1
    %v825 = vadd.f32 %v823, %v824
    %v826 = vsel %vm755, %v818, -inf
    %827 = vmax.xlane.f32.xlu0 %v826
    %v828 = vpop.xlane.xlu0 %827
    %v829 = vsel %vm755, %v825, -inf
    %830 = vmax.xlane.f32.xlu0 %v829
    %v831 = vpop.xlane.xlu0 %830
    %v832 = vmul.f32 %v828, %v828
    %v833 = vmul.f32 %v831, %v831
    %v834 = vrcp.pop %v832
    %v835 = vmul.f32 1.0, %v834
    %v836 = vrcp.pop %v833
    %v837 = vmul.f32 1.0, %v836
    %v838 = vmul.f32 %v808, %v835
    %v839 = vmul.f32 %v809, %v837
    %v841 = vsel %vm755, %v808, 0
    %843 = vmatprep.subr.mxu0 0.0
    %844 = vmatpush1.msra.mxu0 %v838
    %845 = vmatprep.subr.mxu0 0.0
    %846 = vmatpush1.msra.mxu0 0.0
    %847 = vmatprep.subr.mxu0 0.0
    %848 = vmatpush1.msra.mxu0 0.0
    %849 = vmatprep.subr.mxu0 0.0
    %850 = vmatpush1.msra.mxu0 0.0
    %851 = vmatprep.subr.mxu0 0.0
    %852 = vmatpush1.msra.mxu0 0.0
    %853 = vmatprep.subr.mxu0 0.0
    %854 = vmatpush1.msra.mxu0 0.0
    %855 = vmatprep.subr.mxu0 0.0
    %856 = vmatpush1.msra.mxu0 0.0
    %857 = vmatprep.subr.mxu0 0.0
    %858 = vmatpush1.msra.mxu0 0.0
    %859 = vmatprep.subr.mxu0 0.0
    %860 = vmatpush1.msra.mxu0 0.0
    %861 = vmatprep.subr.mxu0 0.0
    %862 = vmatpush1.msra.mxu0 0.0
    %863 = vmatprep.subr.mxu0 0.0
    %864 = vmatpush1.msra.mxu0 0.0
    %865 = vmatprep.subr.mxu0 0.0
    %866 = vmatpush1.msra.mxu0 0.0
    %867 = vmatprep.subr.mxu0 0.0
    %868 = vmatpush1.msra.mxu0 0.0
    %869 = vmatprep.subr.mxu0 0.0
    %870 = vmatpush1.msra.mxu0 0.0
    %871 = vmatprep.subr.mxu0 0.0
    %872 = vmatpush1.msra.mxu0 0.0
    %873 = vmatprep.subr.mxu0 0.0
    %874 = vmatpush1.msra.mxu0 0.0
    %875 = vmatprep.subr.mxu0 0.0
    %876 = vmatpush1.msra.mxu0 0.0
    %877 = vmatprep.subr.mxu0 0.0
    %878 = vmatpush1.msra.mxu0 0.0
    %879 = vmatprep.subr.mxu0 0.0
    %880 = vmatpush1.msra.mxu0 0.0
    %881 = vmatprep.subr.mxu0 0.0
    %882 = vmatpush1.msra.mxu0 0.0
    %883 = vmatprep.subr.mxu0 0.0
    %884 = vmatpush1.msra.mxu0 0.0
    %885 = vmatprep.subr.mxu0 0.0
    %886 = vmatpush1.msra.mxu0 0.0
    %887 = vmatprep.subr.mxu0 0.0
    %888 = vmatpush1.msra.mxu0 0.0
    %889 = vmatprep.subr.mxu0 0.0
    %890 = vmatpush1.msra.mxu0 0.0
    %891 = vmatprep.subr.mxu0 0.0
    %892 = vmatpush1.msra.mxu0 0.0
    %893 = vmatprep.subr.mxu0 0.0
    %894 = vmatpush1.msra.mxu0 0.0
    %895 = vmatprep.subr.mxu0 0.0
    %896 = vmatpush1.msra.mxu0 0.0
    %897 = vmatprep.subr.mxu0 0.0
    %898 = vmatpush1.msra.mxu0 0.0
    %899 = vmatprep.subr.mxu0 0.0
    %900 = vmatpush1.msra.mxu0 0.0
    %901 = vmatprep.subr.mxu0 0.0
    %902 = vmatpush1.msra.mxu0 0.0
    %903 = vmatprep.subr.mxu0 0.0
    %904 = vmatpush1.msra.mxu0 0.0
    %905 = vmatprep.subr.mxu0 0.0
    %906 = vmatpush1.msra.mxu0 0.0
    %907 = vmatprep.mubr.f32.mxu0 0.0
    %908 = vmatmul.mubr.f32.gmra.mrb[0].mxu0 %v841
    %v909 = vpop.f32.mrb[0].mxu0
    %v910 = vadd.f32 0.0, %v909
    %v911 = vpop.f32.mrb[0].mxu0
    %912 = vdwg.mxu0
    %v914 = vsel %vm755, %v809, 0
    %916 = vmatprep.subr.mxu0 0.0
    %917 = vmatpush1.msra.mxu0 %v839
    %918 = vmatprep.subr.mxu0 0.0
    %919 = vmatpush1.msra.mxu0 0.0
    %920 = vmatprep.subr.mxu0 0.0
    %921 = vmatpush1.msra.mxu0 0.0
    %922 = vmatprep.subr.mxu0 0.0
    %923 = vmatpush1.msra.mxu0 0.0
    %924 = vmatprep.subr.mxu0 0.0
    %925 = vmatpush1.msra.mxu0 0.0
    %926 = vmatprep.subr.mxu0 0.0
    %927 = vmatpush1.msra.mxu0 0.0
    %928 = vmatprep.subr.mxu0 0.0
    %929 = vmatpush1.msra.mxu0 0.0
    %930 = vmatprep.subr.mxu0 0.0
    %931 = vmatpush1.msra.mxu0 0.0
    %932 = vmatprep.subr.mxu0 0.0
    %933 = vmatpush1.msra.mxu0 0.0
    %934 = vmatprep.subr.mxu0 0.0
    %935 = vmatpush1.msra.mxu0 0.0
    %936 = vmatprep.subr.mxu0 0.0
    %937 = vmatpush1.msra.mxu0 0.0
    %938 = vmatprep.subr.mxu0 0.0
    %939 = vmatpush1.msra.mxu0 0.0
    %940 = vmatprep.subr.mxu0 0.0
    %941 = vmatpush1.msra.mxu0 0.0
    %942 = vmatprep.subr.mxu0 0.0
    %943 = vmatpush1.msra.mxu0 0.0
    %944 = vmatprep.subr.mxu0 0.0
    %945 = vmatpush1.msra.mxu0 0.0
    %946 = vmatprep.subr.mxu0 0.0
    %947 = vmatpush1.msra.mxu0 0.0
    %948 = vmatprep.subr.mxu0 0.0
    %949 = vmatpush1.msra.mxu0 0.0
    %950 = vmatprep.subr.mxu0 0.0
    %951 = vmatpush1.msra.mxu0 0.0
    %952 = vmatprep.subr.mxu0 0.0
    %953 = vmatpush1.msra.mxu0 0.0
    %954 = vmatprep.subr.mxu0 0.0
    %955 = vmatpush1.msra.mxu0 0.0
    %956 = vmatprep.subr.mxu0 0.0
    %957 = vmatpush1.msra.mxu0 0.0
    %958 = vmatprep.subr.mxu0 0.0
    %959 = vmatpush1.msra.mxu0 0.0
    %960 = vmatprep.subr.mxu0 0.0
    %961 = vmatpush1.msra.mxu0 0.0
    %962 = vmatprep.subr.mxu0 0.0
    %963 = vmatpush1.msra.mxu0 0.0
    %964 = vmatprep.subr.mxu0 0.0
    %965 = vmatpush1.msra.mxu0 0.0
    %966 = vmatprep.subr.mxu0 0.0
    %967 = vmatpush1.msra.mxu0 0.0
    %968 = vmatprep.subr.mxu0 0.0
    %969 = vmatpush1.msra.mxu0 0.0
    %970 = vmatprep.subr.mxu0 0.0
    %971 = vmatpush1.msra.mxu0 0.0
    %972 = vmatprep.subr.mxu0 0.0
    %973 = vmatpush1.msra.mxu0 0.0
    %974 = vmatprep.subr.mxu0 0.0
    %975 = vmatpush1.msra.mxu0 0.0
    %976 = vmatprep.subr.mxu0 0.0
    %977 = vmatpush1.msra.mxu0 0.0
    %978 = vmatprep.subr.mxu0 0.0
    %979 = vmatpush1.msra.mxu0 0.0
    %980 = vmatprep.mubr.f32.mxu0 0.0
    %981 = vmatmul.mubr.f32.gmra.mrb[0].mxu0 %v914
    %v982 = vpop.f32.mrb[0].mxu0
    %v983 = vadd.f32 0.0, %v982
    %v984 = vpop.f32.mrb[0].mxu0
    %985 = vdwg.mxu0
    %v986 = vmul.f32 %v778, 2.0
    %v987 = vsub.f32 %v986, %v910
    %v988 = vsub.f32 %v986, %v983
    %v990 = vsel %vm755, %v838, 0
    %992 = vmatprep.subr.mxu0 0.0
    %993 = vmatpush1.msra.mxu0 %v987
    %994 = vmatprep.subr.mxu0 0.0
    %995 = vmatpush1.msra.mxu0 0.0
    %996 = vmatprep.subr.mxu0 0.0
    %997 = vmatpush1.msra.mxu0 0.0
    %998 = vmatprep.subr.mxu0 0.0
    %999 = vmatpush1.msra.mxu0 0.0
    %1000 = vmatprep.subr.mxu0 0.0
    %1001 = vmatpush1.msra.mxu0 0.0
    %1002 = vmatprep.subr.mxu0 0.0
    %1003 = vmatpush1.msra.mxu0 0.0
    %1004 = vmatprep.subr.mxu0 0.0
    %1005 = vmatpush1.msra.mxu0 0.0
    %1006 = vmatprep.subr.mxu0 0.0
    %1007 = vmatpush1.msra.mxu0 0.0
    %1008 = vmatprep.subr.mxu0 0.0
    %1009 = vmatpush1.msra.mxu0 0.0
    %1010 = vmatprep.subr.mxu0 0.0
    %1011 = vmatpush1.msra.mxu0 0.0
    %1012 = vmatprep.subr.mxu0 0.0
    %1013 = vmatpush1.msra.mxu0 0.0
    %1014 = vmatprep.subr.mxu0 0.0
    %1015 = vmatpush1.msra.mxu0 0.0
    %1016 = vmatprep.subr.mxu0 0.0
    %1017 = vmatpush1.msra.mxu0 0.0
    %1018 = vmatprep.subr.mxu0 0.0
    %1019 = vmatpush1.msra.mxu0 0.0
    %1020 = vmatprep.subr.mxu0 0.0
    %1021 = vmatpush1.msra.mxu0 0.0
    %1022 = vmatprep.subr.mxu0 0.0
    %1023 = vmatpush1.msra.mxu0 0.0
    %1024 = vmatprep.subr.mxu0 0.0
    %1025 = vmatpush1.msra.mxu0 0.0
    %1026 = vmatprep.subr.mxu0 0.0
    %1027 = vmatpush1.msra.mxu0 0.0
    %1028 = vmatprep.subr.mxu0 0.0
    %1029 = vmatpush1.msra.mxu0 0.0
    %1030 = vmatprep.subr.mxu0 0.0
    %1031 = vmatpush1.msra.mxu0 0.0
    %1032 = vmatprep.subr.mxu0 0.0
    %1033 = vmatpush1.msra.mxu0 0.0
    %1034 = vmatprep.subr.mxu0 0.0
    %1035 = vmatpush1.msra.mxu0 0.0
    %1036 = vmatprep.subr.mxu0 0.0
    %1037 = vmatpush1.msra.mxu0 0.0
    %1038 = vmatprep.subr.mxu0 0.0
    %1039 = vmatpush1.msra.mxu0 0.0
    %1040 = vmatprep.subr.mxu0 0.0
    %1041 = vmatpush1.msra.mxu0 0.0
    %1042 = vmatprep.subr.mxu0 0.0
    %1043 = vmatpush1.msra.mxu0 0.0
    %1044 = vmatprep.subr.mxu0 0.0
    %1045 = vmatpush1.msra.mxu0 0.0
    %1046 = vmatprep.subr.mxu0 0.0
    %1047 = vmatpush1.msra.mxu0 0.0
    %1048 = vmatprep.subr.mxu0 0.0
    %1049 = vmatpush1.msra.mxu0 0.0
    %1050 = vmatprep.subr.mxu0 0.0
    %1051 = vmatpush1.msra.mxu0 0.0
    %1052 = vmatprep.subr.mxu0 0.0
    %1053 = vmatpush1.msra.mxu0 0.0
    %1054 = vmatprep.subr.mxu0 0.0
    %1055 = vmatpush1.msra.mxu0 0.0
    %1056 = vmatprep.mubr.f32.mxu0 0.0
    %1057 = vmatmul.mubr.f32.gmra.mrb[0].mxu0 %v990
    %v1058 = vpop.f32.mrb[0].mxu0
    %v1059 = vadd.f32 0.0, %v1058
    %v1060 = vpop.f32.mrb[0].mxu0
    %1061 = vdwg.mxu0
    %v1063 = vsel %vm755, %v839, 0
    %1065 = vmatprep.subr.mxu0 0.0
    %1066 = vmatpush1.msra.mxu0 %v988
    %1067 = vmatprep.subr.mxu0 0.0
    %1068 = vmatpush1.msra.mxu0 0.0
    %1069 = vmatprep.subr.mxu0 0.0
    %1070 = vmatpush1.msra.mxu0 0.0
    %1071 = vmatprep.subr.mxu0 0.0
    %1072 = vmatpush1.msra.mxu0 0.0
    %1073 = vmatprep.subr.mxu0 0.0
    %1074 = vmatpush1.msra.mxu0 0.0
    %1075 = vmatprep.subr.mxu0 0.0
    %1076 = vmatpush1.msra.mxu0 0.0
    %1077 = vmatprep.subr.mxu0 0.0
    %1078 = vmatpush1.msra.mxu0 0.0
    %1079 = vmatprep.subr.mxu0 0.0
    %1080 = vmatpush1.msra.mxu0 0.0
    %1081 = vmatprep.subr.mxu0 0.0
    %1082 = vmatpush1.msra.mxu0 0.0
    %1083 = vmatprep.subr.mxu0 0.0
    %1084 = vmatpush1.msra.mxu0 0.0
    %1085 = vmatprep.subr.mxu0 0.0
    %1086 = vmatpush1.msra.mxu0 0.0
    %1087 = vmatprep.subr.mxu0 0.0
    %1088 = vmatpush1.msra.mxu0 0.0
    %1089 = vmatprep.subr.mxu0 0.0
    %1090 = vmatpush1.msra.mxu0 0.0
    %1091 = vmatprep.subr.mxu0 0.0
    %1092 = vmatpush1.msra.mxu0 0.0
    %1093 = vmatprep.subr.mxu0 0.0
    %1094 = vmatpush1.msra.mxu0 0.0
    %1095 = vmatprep.subr.mxu0 0.0
    %1096 = vmatpush1.msra.mxu0 0.0
    %1097 = vmatprep.subr.mxu0 0.0
    %1098 = vmatpush1.msra.mxu0 0.0
    %1099 = vmatprep.subr.mxu0 0.0
    %1100 = vmatpush1.msra.mxu0 0.0
    %1101 = vmatprep.subr.mxu0 0.0
    %1102 = vmatpush1.msra.mxu0 0.0
    %1103 = vmatprep.subr.mxu0 0.0
    %1104 = vmatpush1.msra.mxu0 0.0
    %1105 = vmatprep.subr.mxu0 0.0
    %1106 = vmatpush1.msra.mxu0 0.0
    %1107 = vmatprep.subr.mxu0 0.0
    %1108 = vmatpush1.msra.mxu0 0.0
    %1109 = vmatprep.subr.mxu0 0.0
    %1110 = vmatpush1.msra.mxu0 0.0
    %1111 = vmatprep.subr.mxu0 0.0
    %1112 = vmatpush1.msra.mxu0 0.0
    %1113 = vmatprep.subr.mxu0 0.0
    %1114 = vmatpush1.msra.mxu0 0.0
    %1115 = vmatprep.subr.mxu0 0.0
    %1116 = vmatpush1.msra.mxu0 0.0
    %1117 = vmatprep.subr.mxu0 0.0
    %1118 = vmatpush1.msra.mxu0 0.0
    %1119 = vmatprep.subr.mxu0 0.0
    %1120 = vmatpush1.msra.mxu0 0.0
    %1121 = vmatprep.subr.mxu0 0.0
    %1122 = vmatpush1.msra.mxu0 0.0
    %1123 = vmatprep.subr.mxu0 0.0
    %1124 = vmatpush1.msra.mxu0 0.0
    %1125 = vmatprep.subr.mxu0 0.0
    %1126 = vmatpush1.msra.mxu0 0.0
    %1127 = vmatprep.subr.mxu0 0.0
    %1128 = vmatpush1.msra.mxu0 0.0
    %1129 = vmatprep.mubr.f32.mxu0 0.0
    %1130 = vmatmul.mubr.f32.gmra.mrb[0].mxu0 %v1063
    %v1131 = vpop.f32.mrb[0].mxu0
    %v1132 = vadd.f32 0.0, %v1131
    %v1133 = vpop.f32.mrb[0].mxu0
    %1134 = vdwg.mxu0
    %1135 = vmatprep.subr.mxu0 0.0
    %1136 = vmatpush1.msra.mxu0 %v1059
    %1137 = vmatprep.subr.mxu0 0.0
    %1138 = vmatpush1.msra.mxu0 0.0
    %1139 = vmatprep.subr.mxu0 0.0
    %1140 = vmatpush1.msra.mxu0 0.0
    %1141 = vmatprep.subr.mxu0 0.0
    %1142 = vmatpush1.msra.mxu0 0.0
    %1143 = vmatprep.subr.mxu0 0.0
    %1144 = vmatpush1.msra.mxu0 0.0
    %1145 = vmatprep.subr.mxu0 0.0
    %1146 = vmatpush1.msra.mxu0 0.0
    %1147 = vmatprep.subr.mxu0 0.0
    %1148 = vmatpush1.msra.mxu0 0.0
    %1149 = vmatprep.subr.mxu0 0.0
    %1150 = vmatpush1.msra.mxu0 0.0
    %1151 = vmatprep.subr.mxu0 0.0
    %1152 = vmatpush1.msra.mxu0 0.0
    %1153 = vmatprep.subr.mxu0 0.0
    %1154 = vmatpush1.msra.mxu0 0.0
    %1155 = vmatprep.subr.mxu0 0.0
    %1156 = vmatpush1.msra.mxu0 0.0
    %1157 = vmatprep.subr.mxu0 0.0
    %1158 = vmatpush1.msra.mxu0 0.0
    %1159 = vmatprep.subr.mxu0 0.0
    %1160 = vmatpush1.msra.mxu0 0.0
    %1161 = vmatprep.subr.mxu0 0.0
    %1162 = vmatpush1.msra.mxu0 0.0
    %1163 = vmatprep.subr.mxu0 0.0
    %1164 = vmatpush1.msra.mxu0 0.0
    %1165 = vmatprep.subr.mxu0 0.0
    %1166 = vmatpush1.msra.mxu0 0.0
    %1167 = vmatprep.subr.mxu0 0.0
    %1168 = vmatpush1.msra.mxu0 0.0
    %1169 = vmatprep.subr.mxu0 0.0
    %1170 = vmatpush1.msra.mxu0 0.0
    %1171 = vmatprep.subr.mxu0 0.0
    %1172 = vmatpush1.msra.mxu0 0.0
    %1173 = vmatprep.subr.mxu0 0.0
    %1174 = vmatpush1.msra.mxu0 0.0
    %1175 = vmatprep.subr.mxu0 0.0
    %1176 = vmatpush1.msra.mxu0 0.0
    %1177 = vmatprep.subr.mxu0 0.0
    %1178 = vmatpush1.msra.mxu0 0.0
    %1179 = vmatprep.subr.mxu0 0.0
    %1180 = vmatpush1.msra.mxu0 0.0
    %1181 = vmatprep.subr.mxu0 0.0
    %1182 = vmatpush1.msra.mxu0 0.0
    %1183 = vmatprep.subr.mxu0 0.0
    %1184 = vmatpush1.msra.mxu0 0.0
    %1185 = vmatprep.subr.mxu0 0.0
    %1186 = vmatpush1.msra.mxu0 0.0
    %1187 = vmatprep.subr.mxu0 0.0
    %1188 = vmatpush1.msra.mxu0 0.0
    %1189 = vmatprep.subr.mxu0 0.0
    %1190 = vmatpush1.msra.mxu0 0.0
    %1191 = vmatprep.subr.mxu0 0.0
    %1192 = vmatpush1.msra.mxu0 0.0
    %1193 = vmatprep.subr.mxu0 0.0
    %1194 = vmatpush1.msra.mxu0 0.0
    %1195 = vmatprep.subr.mxu0 0.0
    %1196 = vmatpush1.msra.mxu0 0.0
    %1197 = vmatprep.subr.mxu0 0.0
    %1198 = vmatpush1.msra.mxu0 0.0
    %1199 = vmatprep.mubr.f32.mxu0 0.0
    %1200 = vmatmul.mubr.f32.gmra.mrb[0].mxu0 %v841
    %v1201 = vpop.f32.mrb[0].mxu0
    %v1202 = vadd.f32 0.0, %v1201
    %v1203 = vpop.f32.mrb[0].mxu0
    %1204 = vdwg.mxu0
    %1205 = vmatprep.subr.mxu0 0.0
    %1206 = vmatpush1.msra.mxu0 %v1132
    %1207 = vmatprep.subr.mxu0 0.0
    %1208 = vmatpush1.msra.mxu0 0.0
    %1209 = vmatprep.subr.mxu0 0.0
    %1210 = vmatpush1.msra.mxu0 0.0
    %1211 = vmatprep.subr.mxu0 0.0
    %1212 = vmatpush1.msra.mxu0 0.0
    %1213 = vmatprep.subr.mxu0 0.0
    %1214 = vmatpush1.msra.mxu0 0.0
    %1215 = vmatprep.subr.mxu0 0.0
    %1216 = vmatpush1.msra.mxu0 0.0
    %1217 = vmatprep.subr.mxu0 0.0
    %1218 = vmatpush1.msra.mxu0 0.0
    %1219 = vmatprep.subr.mxu0 0.0
    %1220 = vmatpush1.msra.mxu0 0.0
    %1221 = vmatprep.subr.mxu0 0.0
    %1222 = vmatpush1.msra.mxu0 0.0
    %1223 = vmatprep.subr.mxu0 0.0
    %1224 = vmatpush1.msra.mxu0 0.0
    %1225 = vmatprep.subr.mxu0 0.0
    %1226 = vmatpush1.msra.mxu0 0.0
    %1227 = vmatprep.subr.mxu0 0.0
    %1228 = vmatpush1.msra.mxu0 0.0
    %1229 = vmatprep.subr.mxu0 0.0
    %1230 = vmatpush1.msra.mxu0 0.0
    %1231 = vmatprep.subr.mxu0 0.0
    %1232 = vmatpush1.msra.mxu0 0.0
    %1233 = vmatprep.subr.mxu0 0.0
    %1234 = vmatpush1.msra.mxu0 0.0
    %1235 = vmatprep.subr.mxu0 0.0
    %1236 = vmatpush1.msra.mxu0 0.0
    %1237 = vmatprep.subr.mxu0 0.0
    %1238 = vmatpush1.msra.mxu0 0.0
    %1239 = vmatprep.subr.mxu0 0.0
    %1240 = vmatpush1.msra.mxu0 0.0
    %1241 = vmatprep.subr.mxu0 0.0
    %1242 = vmatpush1.msra.mxu0 0.0
    %1243 = vmatprep.subr.mxu0 0.0
    %1244 = vmatpush1.msra.mxu0 0.0
    %1245 = vmatprep.subr.mxu0 0.0
    %1246 = vmatpush1.msra.mxu0 0.0
    %1247 = vmatprep.subr.mxu0 0.0
    %1248 = vmatpush1.msra.mxu0 0.0
    %1249 = vmatprep.subr.mxu0 0.0
    %1250 = vmatpush1.msra.mxu0 0.0
    %1251 = vmatprep.subr.mxu0 0.0
    %1252 = vmatpush1.msra.mxu0 0.0
    %1253 = vmatprep.subr.mxu0 0.0
    %1254 = vmatpush1.msra.mxu0 0.0
    %1255 = vmatprep.subr.mxu0 0.0
    %1256 = vmatpush1.msra.mxu0 0.0
    %1257 = vmatprep.subr.mxu0 0.0
    %1258 = vmatpush1.msra.mxu0 0.0
    %1259 = vmatprep.subr.mxu0 0.0
    %1260 = vmatpush1.msra.mxu0 0.0
    %1261 = vmatprep.subr.mxu0 0.0
    %1262 = vmatpush1.msra.mxu0 0.0
    %1263 = vmatprep.subr.mxu0 0.0
    %1264 = vmatpush1.msra.mxu0 0.0
    %1265 = vmatprep.subr.mxu0 0.0
    %1266 = vmatpush1.msra.mxu0 0.0
    %1267 = vmatprep.subr.mxu0 0.0
    %1268 = vmatpush1.msra.mxu0 0.0
    %1269 = vmatprep.mubr.f32.mxu0 0.0
    %1270 = vmatmul.mubr.f32.gmra.mrb[0].mxu0 %v914
    %v1271 = vpop.f32.mrb[0].mxu0
    %v1272 = vadd.f32 0.0, %v1271
    %v1273 = vpop.f32.mrb[0].mxu0
    %1274 = vdwg.mxu0
    %v1275 = vsub.f32 %v986, %v1202
    %v1276 = vsub.f32 %v986, %v1272
    %v1278 = vsel %vm755, %v1059, 0
    %1280 = vmatprep.subr.mxu0 0.0
    %1281 = vmatpush1.msra.mxu0 %v1275
    %1282 = vmatprep.subr.mxu0 0.0
    %1283 = vmatpush1.msra.mxu0 0.0
    %1284 = vmatprep.subr.mxu0 0.0
    %1285 = vmatpush1.msra.mxu0 0.0
    %1286 = vmatprep.subr.mxu0 0.0
    %1287 = vmatpush1.msra.mxu0 0.0
    %1288 = vmatprep.subr.mxu0 0.0
    %1289 = vmatpush1.msra.mxu0 0.0
    %1290 = vmatprep.subr.mxu0 0.0
    %1291 = vmatpush1.msra.mxu0 0.0
    %1292 = vmatprep.subr.mxu0 0.0
    %1293 = vmatpush1.msra.mxu0 0.0
    %1294 = vmatprep.subr.mxu0 0.0
    %1295 = vmatpush1.msra.mxu0 0.0
    %1296 = vmatprep.subr.mxu0 0.0
    %1297 = vmatpush1.msra.mxu0 0.0
    %1298 = vmatprep.subr.mxu0 0.0
    %1299 = vmatpush1.msra.mxu0 0.0
    %1300 = vmatprep.subr.mxu0 0.0
    %1301 = vmatpush1.msra.mxu0 0.0
    %1302 = vmatprep.subr.mxu0 0.0
    %1303 = vmatpush1.msra.mxu0 0.0
    %1304 = vmatprep.subr.mxu0 0.0
    %1305 = vmatpush1.msra.mxu0 0.0
    %1306 = vmatprep.subr.mxu0 0.0
    %1307 = vmatpush1.msra.mxu0 0.0
    %1308 = vmatprep.subr.mxu0 0.0
    %1309 = vmatpush1.msra.mxu0 0.0
    %1310 = vmatprep.subr.mxu0 0.0
    %1311 = vmatpush1.msra.mxu0 0.0
    %1312 = vmatprep.subr.mxu0 0.0
    %1313 = vmatpush1.msra.mxu0 0.0
    %1314 = vmatprep.subr.mxu0 0.0
    %1315 = vmatpush1.msra.mxu0 0.0
    %1316 = vmatprep.subr.mxu0 0.0
    %1317 = vmatpush1.msra.mxu0 0.0
    %1318 = vmatprep.subr.mxu0 0.0
    %1319 = vmatpush1.msra.mxu0 0.0
    %1320 = vmatprep.subr.mxu0 0.0
    %1321 = vmatpush1.msra.mxu0 0.0
    %1322 = vmatprep.subr.mxu0 0.0
    %1323 = vmatpush1.msra.mxu0 0.0
    %1324 = vmatprep.subr.mxu0 0.0
    %1325 = vmatpush1.msra.mxu0 0.0
    %1326 = vmatprep.subr.mxu0 0.0
    %1327 = vmatpush1.msra.mxu0 0.0
    %1328 = vmatprep.subr.mxu0 0.0
    %1329 = vmatpush1.msra.mxu0 0.0
    %1330 = vmatprep.subr.mxu0 0.0
    %1331 = vmatpush1.msra.mxu0 0.0
    %1332 = vmatprep.subr.mxu0 0.0
    %1333 = vmatpush1.msra.mxu0 0.0
    %1334 = vmatprep.subr.mxu0 0.0
    %1335 = vmatpush1.msra.mxu0 0.0
    %1336 = vmatprep.subr.mxu0 0.0
    %1337 = vmatpush1.msra.mxu0 0.0
    %1338 = vmatprep.subr.mxu0 0.0
    %1339 = vmatpush1.msra.mxu0 0.0
    %1340 = vmatprep.subr.mxu0 0.0
    %1341 = vmatpush1.msra.mxu0 0.0
    %1342 = vmatprep.subr.mxu0 0.0
    %1343 = vmatpush1.msra.mxu0 0.0
    %1344 = vmatprep.mubr.f32.mxu0 0.0
    %1345 = vmatmul.mubr.f32.gmra.mrb[0].mxu0 %v1278
    %v1346 = vpop.f32.mrb[0].mxu0
    %v1347 = vadd.f32 0.0, %v1346
    %v1348 = vpop.f32.mrb[0].mxu0
    %1349 = vdwg.mxu0
    %v1351 = vsel %vm755, %v1132, 0
    %1353 = vmatprep.subr.mxu0 0.0
    %1354 = vmatpush1.msra.mxu0 %v1276
    %1355 = vmatprep.subr.mxu0 0.0
    %1356 = vmatpush1.msra.mxu0 0.0
    %1357 = vmatprep.subr.mxu0 0.0
    %1358 = vmatpush1.msra.mxu0 0.0
    %1359 = vmatprep.subr.mxu0 0.0
    %1360 = vmatpush1.msra.mxu0 0.0
    %1361 = vmatprep.subr.mxu0 0.0
    %1362 = vmatpush1.msra.mxu0 0.0
    %1363 = vmatprep.subr.mxu0 0.0
    %1364 = vmatpush1.msra.mxu0 0.0
    %1365 = vmatprep.subr.mxu0 0.0
    %1366 = vmatpush1.msra.mxu0 0.0
    %1367 = vmatprep.subr.mxu0 0.0
    %1368 = vmatpush1.msra.mxu0 0.0
    %1369 = vmatprep.subr.mxu0 0.0
    %1370 = vmatpush1.msra.mxu0 0.0
    %1371 = vmatprep.subr.mxu0 0.0
    %1372 = vmatpush1.msra.mxu0 0.0
    %1373 = vmatprep.subr.mxu0 0.0
    %1374 = vmatpush1.msra.mxu0 0.0
    %1375 = vmatprep.subr.mxu0 0.0
    %1376 = vmatpush1.msra.mxu0 0.0
    %1377 = vmatprep.subr.mxu0 0.0
    %1378 = vmatpush1.msra.mxu0 0.0
    %1379 = vmatprep.subr.mxu0 0.0
    %1380 = vmatpush1.msra.mxu0 0.0
    %1381 = vmatprep.subr.mxu0 0.0
    %1382 = vmatpush1.msra.mxu0 0.0
    %1383 = vmatprep.subr.mxu0 0.0
    %1384 = vmatpush1.msra.mxu0 0.0
    %1385 = vmatprep.subr.mxu0 0.0
    %1386 = vmatpush1.msra.mxu0 0.0
    %1387 = vmatprep.subr.mxu0 0.0
    %1388 = vmatpush1.msra.mxu0 0.0
    %1389 = vmatprep.subr.mxu0 0.0
    %1390 = vmatpush1.msra.mxu0 0.0
    %1391 = vmatprep.subr.mxu0 0.0
    %1392 = vmatpush1.msra.mxu0 0.0
    %1393 = vmatprep.subr.mxu0 0.0
    %1394 = vmatpush1.msra.mxu0 0.0
    %1395 = vmatprep.subr.mxu0 0.0
    %1396 = vmatpush1.msra.mxu0 0.0
    %1397 = vmatprep.subr.mxu0 0.0
    %1398 = vmatpush1.msra.mxu0 0.0
    %1399 = vmatprep.subr.mxu0 0.0
    %1400 = vmatpush1.msra.mxu0 0.0
    %1401 = vmatprep.subr.mxu0 0.0
    %1402 = vmatpush1.msra.mxu0 0.0
    %1403 = vmatprep.subr.mxu0 0.0
    %1404 = vmatpush1.msra.mxu0 0.0
    %1405 = vmatprep.subr.mxu0 0.0
    %1406 = vmatpush1.msra.mxu0 0.0
    %1407 = vmatprep.subr.mxu0 0.0
    %1408 = vmatpush1.msra.mxu0 0.0
    %1409 = vmatprep.subr.mxu0 0.0
    %1410 = vmatpush1.msra.mxu0 0.0
    %1411 = vmatprep.subr.mxu0 0.0
    %1412 = vmatpush1.msra.mxu0 0.0
    %1413 = vmatprep.subr.mxu0 0.0
    %1414 = vmatpush1.msra.mxu0 0.0
    %1415 = vmatprep.subr.mxu0 0.0
    %1416 = vmatpush1.msra.mxu0 0.0
    %1417 = vmatprep.mubr.f32.mxu0 0.0
    %1418 = vmatmul.mubr.f32.gmra.mrb[0].mxu0 %v1351
    %v1419 = vpop.f32.mrb[0].mxu0
    %v1420 = vadd.f32 0.0, %v1419
    %v1421 = vpop.f32.mrb[0].mxu0
    %1422 = vdwg.mxu0
    %1423 = vmatprep.subr.mxu0 0.0
    %1424 = vmatpush1.msra.mxu0 %v1347
    %1425 = vmatprep.subr.mxu0 0.0
    %1426 = vmatpush1.msra.mxu0 0.0
    %1427 = vmatprep.subr.mxu0 0.0
    %1428 = vmatpush1.msra.mxu0 0.0
    %1429 = vmatprep.subr.mxu0 0.0
    %1430 = vmatpush1.msra.mxu0 0.0
    %1431 = vmatprep.subr.mxu0 0.0
    %1432 = vmatpush1.msra.mxu0 0.0
    %1433 = vmatprep.subr.mxu0 0.0
    %1434 = vmatpush1.msra.mxu0 0.0
    %1435 = vmatprep.subr.mxu0 0.0
    %1436 = vmatpush1.msra.mxu0 0.0
    %1437 = vmatprep.subr.mxu0 0.0
    %1438 = vmatpush1.msra.mxu0 0.0
    %1439 = vmatprep.subr.mxu0 0.0
    %1440 = vmatpush1.msra.mxu0 0.0
    %1441 = vmatprep.subr.mxu0 0.0
    %1442 = vmatpush1.msra.mxu0 0.0
    %1443 = vmatprep.subr.mxu0 0.0
    %1444 = vmatpush1.msra.mxu0 0.0
    %1445 = vmatprep.subr.mxu0 0.0
    %1446 = vmatpush1.msra.mxu0 0.0
    %1447 = vmatprep.subr.mxu0 0.0
    %1448 = vmatpush1.msra.mxu0 0.0
    %1449 = vmatprep.subr.mxu0 0.0
    %1450 = vmatpush1.msra.mxu0 0.0
    %1451 = vmatprep.subr.mxu0 0.0
    %1452 = vmatpush1.msra.mxu0 0.0
    %1453 = vmatprep.subr.mxu0 0.0
    %1454 = vmatpush1.msra.mxu0 0.0
    %1455 = vmatprep.subr.mxu0 0.0
    %1456 = vmatpush1.msra.mxu0 0.0
    %1457 = vmatprep.subr.mxu0 0.0
    %1458 = vmatpush1.msra.mxu0 0.0
    %1459 = vmatprep.subr.mxu0 0.0
    %1460 = vmatpush1.msra.mxu0 0.0
    %1461 = vmatprep.subr.mxu0 0.0
    %1462 = vmatpush1.msra.mxu0 0.0
    %1463 = vmatprep.subr.mxu0 0.0
    %1464 = vmatpush1.msra.mxu0 0.0
    %1465 = vmatprep.subr.mxu0 0.0
    %1466 = vmatpush1.msra.mxu0 0.0
    %1467 = vmatprep.subr.mxu0 0.0
    %1468 = vmatpush1.msra.mxu0 0.0
    %1469 = vmatprep.subr.mxu0 0.0
    %1470 = vmatpush1.msra.mxu0 0.0
    %1471 = vmatprep.subr.mxu0 0.0
    %1472 = vmatpush1.msra.mxu0 0.0
    %1473 = vmatprep.subr.mxu0 0.0
    %1474 = vmatpush1.msra.mxu0 0.0
    %1475 = vmatprep.subr.mxu0 0.0
    %1476 = vmatpush1.msra.mxu0 0.0
    %1477 = vmatprep.subr.mxu0 0.0
    %1478 = vmatpush1.msra.mxu0 0.0
    %1479 = vmatprep.subr.mxu0 0.0
    %1480 = vmatpush1.msra.mxu0 0.0
    %1481 = vmatprep.subr.mxu0 0.0
    %1482 = vmatpush1.msra.mxu0 0.0
    %1483 = vmatprep.subr.mxu0 0.0
    %1484 = vmatpush1.msra.mxu0 0.0
    %1485 = vmatprep.subr.mxu0 0.0
    %1486 = vmatpush1.msra.mxu0 0.0
    %1487 = vmatprep.mubr.f32.mxu0 0.0
    %1488 = vmatmul.mubr.f32.gmra.mrb[0].mxu0 %v841
    %v1489 = vpop.f32.mrb[0].mxu0
    %v1490 = vadd.f32 0.0, %v1489
    %v1491 = vpop.f32.mrb[0].mxu0
    %1492 = vdwg.mxu0
    %1493 = vmatprep.subr.mxu0 0.0
    %1494 = vmatpush1.msra.mxu0 %v1420
    %1495 = vmatprep.subr.mxu0 0.0
    %1496 = vmatpush1.msra.mxu0 0.0
    %1497 = vmatprep.subr.mxu0 0.0
    %1498 = vmatpush1.msra.mxu0 0.0
    %1499 = vmatprep.subr.mxu0 0.0
    %1500 = vmatpush1.msra.mxu0 0.0
    %1501 = vmatprep.subr.mxu0 0.0
    %1502 = vmatpush1.msra.mxu0 0.0
    %1503 = vmatprep.subr.mxu0 0.0
    %1504 = vmatpush1.msra.mxu0 0.0
    %1505 = vmatprep.subr.mxu0 0.0
    %1506 = vmatpush1.msra.mxu0 0.0
    %1507 = vmatprep.subr.mxu0 0.0
    %1508 = vmatpush1.msra.mxu0 0.0
    %1509 = vmatprep.subr.mxu0 0.0
    %1510 = vmatpush1.msra.mxu0 0.0
    %1511 = vmatprep.subr.mxu0 0.0
    %1512 = vmatpush1.msra.mxu0 0.0
    %1513 = vmatprep.subr.mxu0 0.0
    %1514 = vmatpush1.msra.mxu0 0.0
    %1515 = vmatprep.subr.mxu0 0.0
    %1516 = vmatpush1.msra.mxu0 0.0
    %1517 = vmatprep.subr.mxu0 0.0
    %1518 = vmatpush1.msra.mxu0 0.0
    %1519 = vmatprep.subr.mxu0 0.0
    %1520 = vmatpush1.msra.mxu0 0.0
    %1521 = vmatprep.subr.mxu0 0.0
    %1522 = vmatpush1.msra.mxu0 0.0
    %1523 = vmatprep.subr.mxu0 0.0
    %1524 = vmatpush1.msra.mxu0 0.0
    %1525 = vmatprep.subr.mxu0 0.0
    %1526 = vmatpush1.msra.mxu0 0.0
    %1527 = vmatprep.subr.mxu0 0.0
    %1528 = vmatpush1.msra.mxu0 0.0
    %1529 = vmatprep.subr.mxu0 0.0
    %1530 = vmatpush1.msra.mxu0 0.0
    %1531 = vmatprep.subr.mxu0 0.0
    %1532 = vmatpush1.msra.mxu0 0.0
    %1533 = vmatprep.subr.mxu0 0.0
    %1534 = vmatpush1.msra.mxu0 0.0
    %1535 = vmatprep.subr.mxu0 0.0
    %1536 = vmatpush1.msra.mxu0 0.0
    %1537 = vmatprep.subr.mxu0 0.0
    %1538 = vmatpush1.msra.mxu0 0.0
    %1539 = vmatprep.subr.mxu0 0.0
    %1540 = vmatpush1.msra.mxu0 0.0
    %1541 = vmatprep.subr.mxu0 0.0
    %1542 = vmatpush1.msra.mxu0 0.0
    %1543 = vmatprep.subr.mxu0 0.0
    %1544 = vmatpush1.msra.mxu0 0.0
    %1545 = vmatprep.subr.mxu0 0.0
    %1546 = vmatpush1.msra.mxu0 0.0
    %1547 = vmatprep.subr.mxu0 0.0
    %1548 = vmatpush1.msra.mxu0 0.0
    %1549 = vmatprep.subr.mxu0 0.0
    %1550 = vmatpush1.msra.mxu0 0.0
    %1551 = vmatprep.subr.mxu0 0.0
    %1552 = vmatpush1.msra.mxu0 0.0
    %1553 = vmatprep.subr.mxu0 0.0
    %1554 = vmatpush1.msra.mxu0 0.0
    %1555 = vmatprep.subr.mxu0 0.0
    %1556 = vmatpush1.msra.mxu0 0.0
    %1557 = vmatprep.mubr.f32.mxu0 0.0
    %1558 = vmatmul.mubr.f32.gmra.mrb[0].mxu0 %v914
    %v1559 = vpop.f32.mrb[0].mxu0
    %v1560 = vadd.f32 0.0, %v1559
    %v1561 = vpop.f32.mrb[0].mxu0
    %1562 = vdwg.mxu0
    %v1563 = vsub.f32 %v986, %v1490
    %v1564 = vsub.f32 %v986, %v1560
    %v1566 = vsel %vm755, %v1347, 0
    %1568 = vmatprep.subr.mxu0 0.0
    %1569 = vmatpush1.msra.mxu0 %v1563
    %1570 = vmatprep.subr.mxu0 0.0
    %1571 = vmatpush1.msra.mxu0 0.0
    %1572 = vmatprep.subr.mxu0 0.0
    %1573 = vmatpush1.msra.mxu0 0.0
    %1574 = vmatprep.subr.mxu0 0.0
    %1575 = vmatpush1.msra.mxu0 0.0
    %1576 = vmatprep.subr.mxu0 0.0
    %1577 = vmatpush1.msra.mxu0 0.0
    %1578 = vmatprep.subr.mxu0 0.0
    %1579 = vmatpush1.msra.mxu0 0.0
    %1580 = vmatprep.subr.mxu0 0.0
    %1581 = vmatpush1.msra.mxu0 0.0
    %1582 = vmatprep.subr.mxu0 0.0
    %1583 = vmatpush1.msra.mxu0 0.0
    %1584 = vmatprep.subr.mxu0 0.0
    %1585 = vmatpush1.msra.mxu0 0.0
    %1586 = vmatprep.subr.mxu0 0.0
    %1587 = vmatpush1.msra.mxu0 0.0
    %1588 = vmatprep.subr.mxu0 0.0
    %1589 = vmatpush1.msra.mxu0 0.0
    %1590 = vmatprep.subr.mxu0 0.0
    %1591 = vmatpush1.msra.mxu0 0.0
    %1592 = vmatprep.subr.mxu0 0.0
    %1593 = vmatpush1.msra.mxu0 0.0
    %1594 = vmatprep.subr.mxu0 0.0
    %1595 = vmatpush1.msra.mxu0 0.0
    %1596 = vmatprep.subr.mxu0 0.0
    %1597 = vmatpush1.msra.mxu0 0.0
    %1598 = vmatprep.subr.mxu0 0.0
    %1599 = vmatpush1.msra.mxu0 0.0
    %1600 = vmatprep.subr.mxu0 0.0
    %1601 = vmatpush1.msra.mxu0 0.0
    %1602 = vmatprep.subr.mxu0 0.0
    %1603 = vmatpush1.msra.mxu0 0.0
    %1604 = vmatprep.subr.mxu0 0.0
    %1605 = vmatpush1.msra.mxu0 0.0
    %1606 = vmatprep.subr.mxu0 0.0
    %1607 = vmatpush1.msra.mxu0 0.0
    %1608 = vmatprep.subr.mxu0 0.0
    %1609 = vmatpush1.msra.mxu0 0.0
    %1610 = vmatprep.subr.mxu0 0.0
    %1611 = vmatpush1.msra.mxu0 0.0
    %1612 = vmatprep.subr.mxu0 0.0
    %1613 = vmatpush1.msra.mxu0 0.0
    %1614 = vmatprep.subr.mxu0 0.0
    %1615 = vmatpush1.msra.mxu0 0.0
    %1616 = vmatprep.subr.mxu0 0.0
    %1617 = vmatpush1.msra.mxu0 0.0
    %1618 = vmatprep.subr.mxu0 0.0
    %1619 = vmatpush1.msra.mxu0 0.0
    %1620 = vmatprep.subr.mxu0 0.0
    %1621 = vmatpush1.msra.mxu0 0.0
    %1622 = vmatprep.subr.mxu0 0.0
    %1623 = vmatpush1.msra.mxu0 0.0
    %1624 = vmatprep.subr.mxu0 0.0
    %1625 = vmatpush1.msra.mxu0 0.0
    %1626 = vmatprep.subr.mxu0 0.0
    %1627 = vmatpush1.msra.mxu0 0.0
    %1628 = vmatprep.subr.mxu0 0.0
    %1629 = vmatpush1.msra.mxu0 0.0
    %1630 = vmatprep.subr.mxu0 0.0
    %1631 = vmatpush1.msra.mxu0 0.0
    %1632 = vmatprep.mubr.f32.mxu0 0.0
    %1633 = vmatmul.mubr.f32.gmra.mrb[0].mxu0 %v1566
    %v1634 = vpop.f32.mrb[0].mxu0
    %v1635 = vadd.f32 0.0, %v1634
    %v1636 = vpop.f32.mrb[0].mxu0
    %1637 = vdwg.mxu0
    %v1639 = vsel %vm755, %v1420, 0
    %1641 = vmatprep.subr.mxu0 0.0
    %1642 = vmatpush1.msra.mxu0 %v1564
    %1643 = vmatprep.subr.mxu0 0.0
    %1644 = vmatpush1.msra.mxu0 0.0
    %1645 = vmatprep.subr.mxu0 0.0
    %1646 = vmatpush1.msra.mxu0 0.0
    %1647 = vmatprep.subr.mxu0 0.0
    %1648 = vmatpush1.msra.mxu0 0.0
    %1649 = vmatprep.subr.mxu0 0.0
    %1650 = vmatpush1.msra.mxu0 0.0
    %1651 = vmatprep.subr.mxu0 0.0
    %1652 = vmatpush1.msra.mxu0 0.0
    %1653 = vmatprep.subr.mxu0 0.0
    %1654 = vmatpush1.msra.mxu0 0.0
    %1655 = vmatprep.subr.mxu0 0.0
    %1656 = vmatpush1.msra.mxu0 0.0
    %1657 = vmatprep.subr.mxu0 0.0
    %1658 = vmatpush1.msra.mxu0 0.0
    %1659 = vmatprep.subr.mxu0 0.0
    %1660 = vmatpush1.msra.mxu0 0.0
    %1661 = vmatprep.subr.mxu0 0.0
    %1662 = vmatpush1.msra.mxu0 0.0
    %1663 = vmatprep.subr.mxu0 0.0
    %1664 = vmatpush1.msra.mxu0 0.0
    %1665 = vmatprep.subr.mxu0 0.0
    %1666 = vmatpush1.msra.mxu0 0.0
    %1667 = vmatprep.subr.mxu0 0.0
    %1668 = vmatpush1.msra.mxu0 0.0
    %1669 = vmatprep.subr.mxu0 0.0
    %1670 = vmatpush1.msra.mxu0 0.0
    %1671 = vmatprep.subr.mxu0 0.0
    %1672 = vmatpush1.msra.mxu0 0.0
    %1673 = vmatprep.subr.mxu0 0.0
    %1674 = vmatpush1.msra.mxu0 0.0
    %1675 = vmatprep.subr.mxu0 0.0
    %1676 = vmatpush1.msra.mxu0 0.0
    %1677 = vmatprep.subr.mxu0 0.0
    %1678 = vmatpush1.msra.mxu0 0.0
    %1679 = vmatprep.subr.mxu0 0.0
    %1680 = vmatpush1.msra.mxu0 0.0
    %1681 = vmatprep.subr.mxu0 0.0
    %1682 = vmatpush1.msra.mxu0 0.0
    %1683 = vmatprep.subr.mxu0 0.0
    %1684 = vmatpush1.msra.mxu0 0.0
    %1685 = vmatprep.subr.mxu0 0.0
    %1686 = vmatpush1.msra.mxu0 0.0
    %1687 = vmatprep.subr.mxu0 0.0
    %1688 = vmatpush1.msra.mxu0 0.0
    %1689 = vmatprep.subr.mxu0 0.0
    %1690 = vmatpush1.msra.mxu0 0.0
    %1691 = vmatprep.subr.mxu0 0.0
    %1692 = vmatpush1.msra.mxu0 0.0
    %1693 = vmatprep.subr.mxu0 0.0
    %1694 = vmatpush1.msra.mxu0 0.0
    %1695 = vmatprep.subr.mxu0 0.0
    %1696 = vmatpush1.msra.mxu0 0.0
    %1697 = vmatprep.subr.mxu0 0.0
    %1698 = vmatpush1.msra.mxu0 0.0
    %1699 = vmatprep.subr.mxu0 0.0
    %1700 = vmatpush1.msra.mxu0 0.0
    %1701 = vmatprep.subr.mxu0 0.0
    %1702 = vmatpush1.msra.mxu0 0.0
    %1703 = vmatprep.subr.mxu0 0.0
    %1704 = vmatpush1.msra.mxu0 0.0
    %1705 = vmatprep.mubr.f32.mxu0 0.0
    %1706 = vmatmul.mubr.f32.gmra.mrb[0].mxu0 %v1639
    %v1707 = vpop.f32.mrb[0].mxu0
    %v1708 = vadd.f32 0.0, %v1707
    %v1709 = vpop.f32.mrb[0].mxu0
    %1710 = vdwg.mxu0
    %1711 = vmatprep.subr.mxu0 0.0
    %1712 = vmatpush1.msra.mxu0 %v1635
    %1713 = vmatprep.subr.mxu0 0.0
    %1714 = vmatpush1.msra.mxu0 0.0
    %1715 = vmatprep.subr.mxu0 0.0
    %1716 = vmatpush1.msra.mxu0 0.0
    %1717 = vmatprep.subr.mxu0 0.0
    %1718 = vmatpush1.msra.mxu0 0.0
    %1719 = vmatprep.subr.mxu0 0.0
    %1720 = vmatpush1.msra.mxu0 0.0
    %1721 = vmatprep.subr.mxu0 0.0
    %1722 = vmatpush1.msra.mxu0 0.0
    %1723 = vmatprep.subr.mxu0 0.0
    %1724 = vmatpush1.msra.mxu0 0.0
    %1725 = vmatprep.subr.mxu0 0.0
    %1726 = vmatpush1.msra.mxu0 0.0
    %1727 = vmatprep.subr.mxu0 0.0
    %1728 = vmatpush1.msra.mxu0 0.0
    %1729 = vmatprep.subr.mxu0 0.0
    %1730 = vmatpush1.msra.mxu0 0.0
    %1731 = vmatprep.subr.mxu0 0.0
    %1732 = vmatpush1.msra.mxu0 0.0
    %1733 = vmatprep.subr.mxu0 0.0
    %1734 = vmatpush1.msra.mxu0 0.0
    %1735 = vmatprep.subr.mxu0 0.0
    %1736 = vmatpush1.msra.mxu0 0.0
    %1737 = vmatprep.subr.mxu0 0.0
    %1738 = vmatpush1.msra.mxu0 0.0
    %1739 = vmatprep.subr.mxu0 0.0
    %1740 = vmatpush1.msra.mxu0 0.0
    %1741 = vmatprep.subr.mxu0 0.0
    %1742 = vmatpush1.msra.mxu0 0.0
    %1743 = vmatprep.subr.mxu0 0.0
    %1744 = vmatpush1.msra.mxu0 0.0
    %1745 = vmatprep.subr.mxu0 0.0
    %1746 = vmatpush1.msra.mxu0 0.0
    %1747 = vmatprep.subr.mxu0 0.0
    %1748 = vmatpush1.msra.mxu0 0.0
    %1749 = vmatprep.subr.mxu0 0.0
    %1750 = vmatpush1.msra.mxu0 0.0
    %1751 = vmatprep.subr.mxu0 0.0
    %1752 = vmatpush1.msra.mxu0 0.0
    %1753 = vmatprep.subr.mxu0 0.0
    %1754 = vmatpush1.msra.mxu0 0.0
    %1755 = vmatprep.subr.mxu0 0.0
    %1756 = vmatpush1.msra.mxu0 0.0
    %1757 = vmatprep.subr.mxu0 0.0
    %1758 = vmatpush1.msra.mxu0 0.0
    %1759 = vmatprep.subr.mxu0 0.0
    %1760 = vmatpush1.msra.mxu0 0.0
    %1761 = vmatprep.subr.mxu0 0.0
    %1762 = vmatpush1.msra.mxu0 0.0
    %1763 = vmatprep.subr.mxu0 0.0
    %1764 = vmatpush1.msra.mxu0 0.0
    %1765 = vmatprep.subr.mxu0 0.0
    %1766 = vmatpush1.msra.mxu0 0.0
    %1767 = vmatprep.subr.mxu0 0.0
    %1768 = vmatpush1.msra.mxu0 0.0
    %1769 = vmatprep.subr.mxu0 0.0
    %1770 = vmatpush1.msra.mxu0 0.0
    %1771 = vmatprep.subr.mxu0 0.0
    %1772 = vmatpush1.msra.mxu0 0.0
    %1773 = vmatprep.subr.mxu0 0.0
    %1774 = vmatpush1.msra.mxu0 0.0
    %1775 = vmatprep.mubr.f32.mxu0 0.0
    %1776 = vmatmul.mubr.f32.gmra.mrb[0].mxu0 %v841
    %v1777 = vpop.f32.mrb[0].mxu0
    %v1778 = vadd.f32 0.0, %v1777
    %v1779 = vpop.f32.mrb[0].mxu0
    %1780 = vdwg.mxu0
    %1781 = vmatprep.subr.mxu0 0.0
    %1782 = vmatpush1.msra.mxu0 %v1708
    %1783 = vmatprep.subr.mxu0 0.0
    %1784 = vmatpush1.msra.mxu0 0.0
    %1785 = vmatprep.subr.mxu0 0.0
    %1786 = vmatpush1.msra.mxu0 0.0
    %1787 = vmatprep.subr.mxu0 0.0
    %1788 = vmatpush1.msra.mxu0 0.0
    %1789 = vmatprep.subr.mxu0 0.0
    %1790 = vmatpush1.msra.mxu0 0.0
    %1791 = vmatprep.subr.mxu0 0.0
    %1792 = vmatpush1.msra.mxu0 0.0
    %1793 = vmatprep.subr.mxu0 0.0
    %1794 = vmatpush1.msra.mxu0 0.0
    %1795 = vmatprep.subr.mxu0 0.0
    %1796 = vmatpush1.msra.mxu0 0.0
    %1797 = vmatprep.subr.mxu0 0.0
    %1798 = vmatpush1.msra.mxu0 0.0
    %1799 = vmatprep.subr.mxu0 0.0
    %1800 = vmatpush1.msra.mxu0 0.0
    %1801 = vmatprep.subr.mxu0 0.0
    %1802 = vmatpush1.msra.mxu0 0.0
    %1803 = vmatprep.subr.mxu0 0.0
    %1804 = vmatpush1.msra.mxu0 0.0
    %1805 = vmatprep.subr.mxu0 0.0
    %1806 = vmatpush1.msra.mxu0 0.0
    %1807 = vmatprep.subr.mxu0 0.0
    %1808 = vmatpush1.msra.mxu0 0.0
    %1809 = vmatprep.subr.mxu0 0.0
    %1810 = vmatpush1.msra.mxu0 0.0
    %1811 = vmatprep.subr.mxu0 0.0
    %1812 = vmatpush1.msra.mxu0 0.0
    %1813 = vmatprep.subr.mxu0 0.0
    %1814 = vmatpush1.msra.mxu0 0.0
    %1815 = vmatprep.subr.mxu0 0.0
    %1816 = vmatpush1.msra.mxu0 0.0
    %1817 = vmatprep.subr.mxu0 0.0
    %1818 = vmatpush1.msra.mxu0 0.0
    %1819 = vmatprep.subr.mxu0 0.0
    %1820 = vmatpush1.msra.mxu0 0.0
    %1821 = vmatprep.subr.mxu0 0.0
    %1822 = vmatpush1.msra.mxu0 0.0
    %1823 = vmatprep.subr.mxu0 0.0
    %1824 = vmatpush1.msra.mxu0 0.0
    %1825 = vmatprep.subr.mxu0 0.0
    %1826 = vmatpush1.msra.mxu0 0.0
    %1827 = vmatprep.subr.mxu0 0.0
    %1828 = vmatpush1.msra.mxu0 0.0
    %1829 = vmatprep.subr.mxu0 0.0
    %1830 = vmatpush1.msra.mxu0 0.0
    %1831 = vmatprep.subr.mxu0 0.0
    %1832 = vmatpush1.msra.mxu0 0.0
    %1833 = vmatprep.subr.mxu0 0.0
    %1834 = vmatpush1.msra.mxu0 0.0
    %1835 = vmatprep.subr.mxu0 0.0
    %1836 = vmatpush1.msra.mxu0 0.0
    %1837 = vmatprep.subr.mxu0 0.0
    %1838 = vmatpush1.msra.mxu0 0.0
    %1839 = vmatprep.subr.mxu0 0.0
    %1840 = vmatpush1.msra.mxu0 0.0
    %1841 = vmatprep.subr.mxu0 0.0
    %1842 = vmatpush1.msra.mxu0 0.0
    %1843 = vmatprep.subr.mxu0 0.0
    %1844 = vmatpush1.msra.mxu0 0.0
    %1845 = vmatprep.mubr.f32.mxu0 0.0
    %1846 = vmatmul.mubr.f32.gmra.mrb[0].mxu0 %v914
    %v1847 = vpop.f32.mrb[0].mxu0
    %v1848 = vadd.f32 0.0, %v1847
    %v1849 = vpop.f32.mrb[0].mxu0
    %1850 = vdwg.mxu0
    %v1851 = vsub.f32 %v986, %v1778
    %v1852 = vsub.f32 %v986, %v1848
    %v1854 = vsel %vm755, %v1635, 0
    %1856 = vmatprep.subr.mxu0 0.0
    %1857 = vmatpush1.msra.mxu0 %v1851
    %1858 = vmatprep.subr.mxu0 0.0
    %1859 = vmatpush1.msra.mxu0 0.0
    %1860 = vmatprep.subr.mxu0 0.0
    %1861 = vmatpush1.msra.mxu0 0.0
    %1862 = vmatprep.subr.mxu0 0.0
    %1863 = vmatpush1.msra.mxu0 0.0
    %1864 = vmatprep.subr.mxu0 0.0
    %1865 = vmatpush1.msra.mxu0 0.0
    %1866 = vmatprep.subr.mxu0 0.0
    %1867 = vmatpush1.msra.mxu0 0.0
    %1868 = vmatprep.subr.mxu0 0.0
    %1869 = vmatpush1.msra.mxu0 0.0
    %1870 = vmatprep.subr.mxu0 0.0
    %1871 = vmatpush1.msra.mxu0 0.0
    %1872 = vmatprep.subr.mxu0 0.0
    %1873 = vmatpush1.msra.mxu0 0.0
    %1874 = vmatprep.subr.mxu0 0.0
    %1875 = vmatpush1.msra.mxu0 0.0
    %1876 = vmatprep.subr.mxu0 0.0
    %1877 = vmatpush1.msra.mxu0 0.0
    %1878 = vmatprep.subr.mxu0 0.0
    %1879 = vmatpush1.msra.mxu0 0.0
    %1880 = vmatprep.subr.mxu0 0.0
    %1881 = vmatpush1.msra.mxu0 0.0
    %1882 = vmatprep.subr.mxu0 0.0
    %1883 = vmatpush1.msra.mxu0 0.0
    %1884 = vmatprep.subr.mxu0 0.0
    %1885 = vmatpush1.msra.mxu0 0.0
    %1886 = vmatprep.subr.mxu0 0.0
    %1887 = vmatpush1.msra.mxu0 0.0
    %1888 = vmatprep.subr.mxu0 0.0
    %1889 = vmatpush1.msra.mxu0 0.0
    %1890 = vmatprep.subr.mxu0 0.0
    %1891 = vmatpush1.msra.mxu0 0.0
    %1892 = vmatprep.subr.mxu0 0.0
    %1893 = vmatpush1.msra.mxu0 0.0
    %1894 = vmatprep.subr.mxu0 0.0
    %1895 = vmatpush1.msra.mxu0 0.0
    %1896 = vmatprep.subr.mxu0 0.0
    %1897 = vmatpush1.msra.mxu0 0.0
    %1898 = vmatprep.subr.mxu0 0.0
    %1899 = vmatpush1.msra.mxu0 0.0
    %1900 = vmatprep.subr.mxu0 0.0
    %1901 = vmatpush1.msra.mxu0 0.0
    %1902 = vmatprep.subr.mxu0 0.0
    %1903 = vmatpush1.msra.mxu0 0.0
    %1904 = vmatprep.subr.mxu0 0.0
    %1905 = vmatpush1.msra.mxu0 0.0
    %1906 = vmatprep.subr.mxu0 0.0
    %1907 = vmatpush1.msra.mxu0 0.0
    %1908 = vmatprep.subr.mxu0 0.0
    %1909 = vmatpush1.msra.mxu0 0.0
    %1910 = vmatprep.subr.mxu0 0.0
    %1911 = vmatpush1.msra.mxu0 0.0
    %1912 = vmatprep.subr.mxu0 0.0
    %1913 = vmatpush1.msra.mxu0 0.0
    %1914 = vmatprep.subr.mxu0 0.0
    %1915 = vmatpush1.msra.mxu0 0.0
    %1916 = vmatprep.subr.mxu0 0.0
    %1917 = vmatpush1.msra.mxu0 0.0
    %1918 = vmatprep.subr.mxu0 0.0
    %1919 = vmatpush1.msra.mxu0 0.0
    %1920 = vmatprep.mubr.f32.mxu0 0.0
    %1921 = vmatmul.mubr.f32.gmra.mrb[0].mxu0 %v1854
    %v1922 = vpop.f32.mrb[0].mxu0
    %v1923 = vadd.f32 0.0, %v1922
    %v1924 = vpop.f32.mrb[0].mxu0
    %1925 = vdwg.mxu0
    %v1927 = vsel %vm755, %v1708, 0
    %1929 = vmatprep.subr.mxu0 0.0
    %1930 = vmatpush1.msra.mxu0 %v1852
    %1931 = vmatprep.subr.mxu0 0.0
    %1932 = vmatpush1.msra.mxu0 0.0
    %1933 = vmatprep.subr.mxu0 0.0
    %1934 = vmatpush1.msra.mxu0 0.0
    %1935 = vmatprep.subr.mxu0 0.0
    %1936 = vmatpush1.msra.mxu0 0.0
    %1937 = vmatprep.subr.mxu0 0.0
    %1938 = vmatpush1.msra.mxu0 0.0
    %1939 = vmatprep.subr.mxu0 0.0
    %1940 = vmatpush1.msra.mxu0 0.0
    %1941 = vmatprep.subr.mxu0 0.0
    %1942 = vmatpush1.msra.mxu0 0.0
    %1943 = vmatprep.subr.mxu0 0.0
    %1944 = vmatpush1.msra.mxu0 0.0
    %1945 = vmatprep.subr.mxu0 0.0
    %1946 = vmatpush1.msra.mxu0 0.0
    %1947 = vmatprep.subr.mxu0 0.0
    %1948 = vmatpush1.msra.mxu0 0.0
    %1949 = vmatprep.subr.mxu0 0.0
    %1950 = vmatpush1.msra.mxu0 0.0
    %1951 = vmatprep.subr.mxu0 0.0
    %1952 = vmatpush1.msra.mxu0 0.0
    %1953 = vmatprep.subr.mxu0 0.0
    %1954 = vmatpush1.msra.mxu0 0.0
    %1955 = vmatprep.subr.mxu0 0.0
    %1956 = vmatpush1.msra.mxu0 0.0
    %1957 = vmatprep.subr.mxu0 0.0
    %1958 = vmatpush1.msra.mxu0 0.0
    %1959 = vmatprep.subr.mxu0 0.0
    %1960 = vmatpush1.msra.mxu0 0.0
    %1961 = vmatprep.subr.mxu0 0.0
    %1962 = vmatpush1.msra.mxu0 0.0
    %1963 = vmatprep.subr.mxu0 0.0
    %1964 = vmatpush1.msra.mxu0 0.0
    %1965 = vmatprep.subr.mxu0 0.0
    %1966 = vmatpush1.msra.mxu0 0.0
    %1967 = vmatprep.subr.mxu0 0.0
    %1968 = vmatpush1.msra.mxu0 0.0
    %1969 = vmatprep.subr.mxu0 0.0
    %1970 = vmatpush1.msra.mxu0 0.0
    %1971 = vmatprep.subr.mxu0 0.0
    %1972 = vmatpush1.msra.mxu0 0.0
    %1973 = vmatprep.subr.mxu0 0.0
    %1974 = vmatpush1.msra.mxu0 0.0
    %1975 = vmatprep.subr.mxu0 0.0
    %1976 = vmatpush1.msra.mxu0 0.0
    %1977 = vmatprep.subr.mxu0 0.0
    %1978 = vmatpush1.msra.mxu0 0.0
    %1979 = vmatprep.subr.mxu0 0.0
    %1980 = vmatpush1.msra.mxu0 0.0
    %1981 = vmatprep.subr.mxu0 0.0
    %1982 = vmatpush1.msra.mxu0 0.0
    %1983 = vmatprep.subr.mxu0 0.0
    %1984 = vmatpush1.msra.mxu0 0.0
    %1985 = vmatprep.subr.mxu0 0.0
    %1986 = vmatpush1.msra.mxu0 0.0
    %1987 = vmatprep.subr.mxu0 0.0
    %1988 = vmatpush1.msra.mxu0 0.0
    %1989 = vmatprep.subr.mxu0 0.0
    %1990 = vmatpush1.msra.mxu0 0.0
    %1991 = vmatprep.subr.mxu0 0.0
    %1992 = vmatpush1.msra.mxu0 0.0
    %1993 = vmatprep.mubr.f32.mxu0 0.0
    %1994 = vmatmul.mubr.f32.gmra.mrb[0].mxu0 %v1927
    %v1995 = vpop.f32.mrb[0].mxu0
    %v1996 = vadd.f32 0.0, %v1995
    %v1997 = vpop.f32.mrb[0].mxu0
    %1998 = vdwg.mxu0
    %1999 = vmatprep.subr.mxu0 0.0
    %2000 = vmatpush1.msra.mxu0 %v1923
    %2001 = vmatprep.subr.mxu0 0.0
    %2002 = vmatpush1.msra.mxu0 0.0
    %2003 = vmatprep.subr.mxu0 0.0
    %2004 = vmatpush1.msra.mxu0 0.0
    %2005 = vmatprep.subr.mxu0 0.0
    %2006 = vmatpush1.msra.mxu0 0.0
    %2007 = vmatprep.subr.mxu0 0.0
    %2008 = vmatpush1.msra.mxu0 0.0
    %2009 = vmatprep.subr.mxu0 0.0
    %2010 = vmatpush1.msra.mxu0 0.0
    %2011 = vmatprep.subr.mxu0 0.0
    %2012 = vmatpush1.msra.mxu0 0.0
    %2013 = vmatprep.subr.mxu0 0.0
    %2014 = vmatpush1.msra.mxu0 0.0
    %2015 = vmatprep.subr.mxu0 0.0
    %2016 = vmatpush1.msra.mxu0 0.0
    %2017 = vmatprep.subr.mxu0 0.0
    %2018 = vmatpush1.msra.mxu0 0.0
    %2019 = vmatprep.subr.mxu0 0.0
    %2020 = vmatpush1.msra.mxu0 0.0
    %2021 = vmatprep.subr.mxu0 0.0
    %2022 = vmatpush1.msra.mxu0 0.0
    %2023 = vmatprep.subr.mxu0 0.0
    %2024 = vmatpush1.msra.mxu0 0.0
    %2025 = vmatprep.subr.mxu0 0.0
    %2026 = vmatpush1.msra.mxu0 0.0
    %2027 = vmatprep.subr.mxu0 0.0
    %2028 = vmatpush1.msra.mxu0 0.0
    %2029 = vmatprep.subr.mxu0 0.0
    %2030 = vmatpush1.msra.mxu0 0.0
    %2031 = vmatprep.subr.mxu0 0.0
    %2032 = vmatpush1.msra.mxu0 0.0
    %2033 = vmatprep.subr.mxu0 0.0
    %2034 = vmatpush1.msra.mxu0 0.0
    %2035 = vmatprep.subr.mxu0 0.0
    %2036 = vmatpush1.msra.mxu0 0.0
    %2037 = vmatprep.subr.mxu0 0.0
    %2038 = vmatpush1.msra.mxu0 0.0
    %2039 = vmatprep.subr.mxu0 0.0
    %2040 = vmatpush1.msra.mxu0 0.0
    %2041 = vmatprep.subr.mxu0 0.0
    %2042 = vmatpush1.msra.mxu0 0.0
    %2043 = vmatprep.subr.mxu0 0.0
    %2044 = vmatpush1.msra.mxu0 0.0
    %2045 = vmatprep.subr.mxu0 0.0
    %2046 = vmatpush1.msra.mxu0 0.0
    %2047 = vmatprep.subr.mxu0 0.0
    %2048 = vmatpush1.msra.mxu0 0.0
    %2049 = vmatprep.subr.mxu0 0.0
    %2050 = vmatpush1.msra.mxu0 0.0
    %2051 = vmatprep.subr.mxu0 0.0
    %2052 = vmatpush1.msra.mxu0 0.0
    %2053 = vmatprep.subr.mxu0 0.0
    %2054 = vmatpush1.msra.mxu0 0.0
    %2055 = vmatprep.subr.mxu0 0.0
    %2056 = vmatpush1.msra.mxu0 0.0
    %2057 = vmatprep.subr.mxu0 0.0
    %2058 = vmatpush1.msra.mxu0 0.0
    %2059 = vmatprep.subr.mxu0 0.0
    %2060 = vmatpush1.msra.mxu0 0.0
    %2061 = vmatprep.subr.mxu0 0.0
    %2062 = vmatpush1.msra.mxu0 0.0
    %2063 = vmatprep.mubr.f32.mxu0 0.0
    %2064 = vmatmul.mubr.f32.gmra.mrb[0].mxu0 %v841
    %v2065 = vpop.f32.mrb[0].mxu0
    %v2066 = vadd.f32 0.0, %v2065
    %v2067 = vpop.f32.mrb[0].mxu0
    %2068 = vdwg.mxu0
    %2069 = vmatprep.subr.mxu0 0.0
    %2070 = vmatpush1.msra.mxu0 %v1996
    %2071 = vmatprep.subr.mxu0 0.0
    %2072 = vmatpush1.msra.mxu0 0.0
    %2073 = vmatprep.subr.mxu0 0.0
    %2074 = vmatpush1.msra.mxu0 0.0
    %2075 = vmatprep.subr.mxu0 0.0
    %2076 = vmatpush1.msra.mxu0 0.0
    %2077 = vmatprep.subr.mxu0 0.0
    %2078 = vmatpush1.msra.mxu0 0.0
    %2079 = vmatprep.subr.mxu0 0.0
    %2080 = vmatpush1.msra.mxu0 0.0
    %2081 = vmatprep.subr.mxu0 0.0
    %2082 = vmatpush1.msra.mxu0 0.0
    %2083 = vmatprep.subr.mxu0 0.0
    %2084 = vmatpush1.msra.mxu0 0.0
    %2085 = vmatprep.subr.mxu0 0.0
    %2086 = vmatpush1.msra.mxu0 0.0
    %2087 = vmatprep.subr.mxu0 0.0
    %2088 = vmatpush1.msra.mxu0 0.0
    %2089 = vmatprep.subr.mxu0 0.0
    %2090 = vmatpush1.msra.mxu0 0.0
    %2091 = vmatprep.subr.mxu0 0.0
    %2092 = vmatpush1.msra.mxu0 0.0
    %2093 = vmatprep.subr.mxu0 0.0
    %2094 = vmatpush1.msra.mxu0 0.0
    %2095 = vmatprep.subr.mxu0 0.0
    %2096 = vmatpush1.msra.mxu0 0.0
    %2097 = vmatprep.subr.mxu0 0.0
    %2098 = vmatpush1.msra.mxu0 0.0
    %2099 = vmatprep.subr.mxu0 0.0
    %2100 = vmatpush1.msra.mxu0 0.0
    %2101 = vmatprep.subr.mxu0 0.0
    %2102 = vmatpush1.msra.mxu0 0.0
    %2103 = vmatprep.subr.mxu0 0.0
    %2104 = vmatpush1.msra.mxu0 0.0
    %2105 = vmatprep.subr.mxu0 0.0
    %2106 = vmatpush1.msra.mxu0 0.0
    %2107 = vmatprep.subr.mxu0 0.0
    %2108 = vmatpush1.msra.mxu0 0.0
    %2109 = vmatprep.subr.mxu0 0.0
    %2110 = vmatpush1.msra.mxu0 0.0
    %2111 = vmatprep.subr.mxu0 0.0
    %2112 = vmatpush1.msra.mxu0 0.0
    %2113 = vmatprep.subr.mxu0 0.0
    %2114 = vmatpush1.msra.mxu0 0.0
    %2115 = vmatprep.subr.mxu0 0.0
    %2116 = vmatpush1.msra.mxu0 0.0
    %2117 = vmatprep.subr.mxu0 0.0
    %2118 = vmatpush1.msra.mxu0 0.0
    %2119 = vmatprep.subr.mxu0 0.0
    %2120 = vmatpush1.msra.mxu0 0.0
    %2121 = vmatprep.subr.mxu0 0.0
    %2122 = vmatpush1.msra.mxu0 0.0
    %2123 = vmatprep.subr.mxu0 0.0
    %2124 = vmatpush1.msra.mxu0 0.0
    %2125 = vmatprep.subr.mxu0 0.0
    %2126 = vmatpush1.msra.mxu0 0.0
    %2127 = vmatprep.subr.mxu0 0.0
    %2128 = vmatpush1.msra.mxu0 0.0
    %2129 = vmatprep.subr.mxu0 0.0
    %2130 = vmatpush1.msra.mxu0 0.0
    %2131 = vmatprep.subr.mxu0 0.0
    %2132 = vmatpush1.msra.mxu0 0.0
    %2133 = vmatprep.mubr.f32.mxu0 0.0
    %2134 = vmatmul.mubr.f32.gmra.mrb[0].mxu0 %v914
    %v2135 = vpop.f32.mrb[0].mxu0
    %v2136 = vadd.f32 0.0, %v2135
    %v2137 = vpop.f32.mrb[0].mxu0
    %2138 = vdwg.mxu0
    %v2139 = vsub.f32 %v986, %v2066
    %v2140 = vsub.f32 %v986, %v2136
    %v2142 = vsel %vm755, %v1923, 0
    %2144 = vmatprep.subr.mxu0 0.0
    %2145 = vmatpush1.msra.mxu0 %v2139
    %2146 = vmatprep.subr.mxu0 0.0
    %2147 = vmatpush1.msra.mxu0 0.0
    %2148 = vmatprep.subr.mxu0 0.0
    %2149 = vmatpush1.msra.mxu0 0.0
    %2150 = vmatprep.subr.mxu0 0.0
    %2151 = vmatpush1.msra.mxu0 0.0
    %2152 = vmatprep.subr.mxu0 0.0
    %2153 = vmatpush1.msra.mxu0 0.0
    %2154 = vmatprep.subr.mxu0 0.0
    %2155 = vmatpush1.msra.mxu0 0.0
    %2156 = vmatprep.subr.mxu0 0.0
    %2157 = vmatpush1.msra.mxu0 0.0
    %2158 = vmatprep.subr.mxu0 0.0
    %2159 = vmatpush1.msra.mxu0 0.0
    %2160 = vmatprep.subr.mxu0 0.0
    %2161 = vmatpush1.msra.mxu0 0.0
    %2162 = vmatprep.subr.mxu0 0.0
    %2163 = vmatpush1.msra.mxu0 0.0
    %2164 = vmatprep.subr.mxu0 0.0
    %2165 = vmatpush1.msra.mxu0 0.0
    %2166 = vmatprep.subr.mxu0 0.0
    %2167 = vmatpush1.msra.mxu0 0.0
    %2168 = vmatprep.subr.mxu0 0.0
    %2169 = vmatpush1.msra.mxu0 0.0
    %2170 = vmatprep.subr.mxu0 0.0
    %2171 = vmatpush1.msra.mxu0 0.0
    %2172 = vmatprep.subr.mxu0 0.0
    %2173 = vmatpush1.msra.mxu0 0.0
    %2174 = vmatprep.subr.mxu0 0.0
    %2175 = vmatpush1.msra.mxu0 0.0
    %2176 = vmatprep.subr.mxu0 0.0
    %2177 = vmatpush1.msra.mxu0 0.0
    %2178 = vmatprep.subr.mxu0 0.0
    %2179 = vmatpush1.msra.mxu0 0.0
    %2180 = vmatprep.subr.mxu0 0.0
    %2181 = vmatpush1.msra.mxu0 0.0
    %2182 = vmatprep.subr.mxu0 0.0
    %2183 = vmatpush1.msra.mxu0 0.0
    %2184 = vmatprep.subr.mxu0 0.0
    %2185 = vmatpush1.msra.mxu0 0.0
    %2186 = vmatprep.subr.mxu0 0.0
    %2187 = vmatpush1.msra.mxu0 0.0
    %2188 = vmatprep.subr.mxu0 0.0
    %2189 = vmatpush1.msra.mxu0 0.0
    %2190 = vmatprep.subr.mxu0 0.0
    %2191 = vmatpush1.msra.mxu0 0.0
    %2192 = vmatprep.subr.mxu0 0.0
    %2193 = vmatpush1.msra.mxu0 0.0
    %2194 = vmatprep.subr.mxu0 0.0
    %2195 = vmatpush1.msra.mxu0 0.0
    %2196 = vmatprep.subr.mxu0 0.0
    %2197 = vmatpush1.msra.mxu0 0.0
    %2198 = vmatprep.subr.mxu0 0.0
    %2199 = vmatpush1.msra.mxu0 0.0
    %2200 = vmatprep.subr.mxu0 0.0
    %2201 = vmatpush1.msra.mxu0 0.0
    %2202 = vmatprep.subr.mxu0 0.0
    %2203 = vmatpush1.msra.mxu0 0.0
    %2204 = vmatprep.subr.mxu0 0.0
    %2205 = vmatpush1.msra.mxu0 0.0
    %2206 = vmatprep.subr.mxu0 0.0
    %2207 = vmatpush1.msra.mxu0 0.0
    %2208 = vmatprep.mubr.f32.mxu0 0.0
    %2209 = vmatmul.mubr.f32.gmra.mrb[0].mxu0 %v2142
    %v2210 = vpop.f32.mrb[0].mxu0
    %v2211 = vadd.f32 0.0, %v2210
    %v2212 = vpop.f32.mrb[0].mxu0
    %2213 = vdwg.mxu0
    %v2215 = vsel %vm755, %v1996, 0
    %2217 = vmatprep.subr.mxu0 0.0
    %2218 = vmatpush1.msra.mxu0 %v2140
    %2219 = vmatprep.subr.mxu0 0.0
    %2220 = vmatpush1.msra.mxu0 0.0
    %2221 = vmatprep.subr.mxu0 0.0
    %2222 = vmatpush1.msra.mxu0 0.0
    %2223 = vmatprep.subr.mxu0 0.0
    %2224 = vmatpush1.msra.mxu0 0.0
    %2225 = vmatprep.subr.mxu0 0.0
    %2226 = vmatpush1.msra.mxu0 0.0
    %2227 = vmatprep.subr.mxu0 0.0
    %2228 = vmatpush1.msra.mxu0 0.0
    %2229 = vmatprep.subr.mxu0 0.0
    %2230 = vmatpush1.msra.mxu0 0.0
    %2231 = vmatprep.subr.mxu0 0.0
    %2232 = vmatpush1.msra.mxu0 0.0
    %2233 = vmatprep.subr.mxu0 0.0
    %2234 = vmatpush1.msra.mxu0 0.0
    %2235 = vmatprep.subr.mxu0 0.0
    %2236 = vmatpush1.msra.mxu0 0.0
    %2237 = vmatprep.subr.mxu0 0.0
    %2238 = vmatpush1.msra.mxu0 0.0
    %2239 = vmatprep.subr.mxu0 0.0
    %2240 = vmatpush1.msra.mxu0 0.0
    %2241 = vmatprep.subr.mxu0 0.0
    %2242 = vmatpush1.msra.mxu0 0.0
    %2243 = vmatprep.subr.mxu0 0.0
    %2244 = vmatpush1.msra.mxu0 0.0
    %2245 = vmatprep.subr.mxu0 0.0
    %2246 = vmatpush1.msra.mxu0 0.0
    %2247 = vmatprep.subr.mxu0 0.0
    %2248 = vmatpush1.msra.mxu0 0.0
    %2249 = vmatprep.subr.mxu0 0.0
    %2250 = vmatpush1.msra.mxu0 0.0
    %2251 = vmatprep.subr.mxu0 0.0
    %2252 = vmatpush1.msra.mxu0 0.0
    %2253 = vmatprep.subr.mxu0 0.0
    %2254 = vmatpush1.msra.mxu0 0.0
    %2255 = vmatprep.subr.mxu0 0.0
    %2256 = vmatpush1.msra.mxu0 0.0
    %2257 = vmatprep.subr.mxu0 0.0
    %2258 = vmatpush1.msra.mxu0 0.0
    %2259 = vmatprep.subr.mxu0 0.0
    %2260 = vmatpush1.msra.mxu0 0.0
    %2261 = vmatprep.subr.mxu0 0.0
    %2262 = vmatpush1.msra.mxu0 0.0
    %2263 = vmatprep.subr.mxu0 0.0
    %2264 = vmatpush1.msra.mxu0 0.0
    %2265 = vmatprep.subr.mxu0 0.0
    %2266 = vmatpush1.msra.mxu0 0.0
    %2267 = vmatprep.subr.mxu0 0.0
    %2268 = vmatpush1.msra.mxu0 0.0
    %2269 = vmatprep.subr.mxu0 0.0
    %2270 = vmatpush1.msra.mxu0 0.0
    %2271 = vmatprep.subr.mxu0 0.0
    %2272 = vmatpush1.msra.mxu0 0.0
    %2273 = vmatprep.subr.mxu0 0.0
    %2274 = vmatpush1.msra.mxu0 0.0
    %2275 = vmatprep.subr.mxu0 0.0
    %2276 = vmatpush1.msra.mxu0 0.0
    %2277 = vmatprep.subr.mxu0 0.0
    %2278 = vmatpush1.msra.mxu0 0.0
    %2279 = vmatprep.subr.mxu0 0.0
    %2280 = vmatpush1.msra.mxu0 0.0
    %2281 = vmatprep.mubr.f32.mxu0 0.0
    %2282 = vmatmul.mubr.f32.gmra.mrb[0].mxu0 %v2215
    %v2283 = vpop.f32.mrb[0].mxu0
    %v2284 = vadd.f32 0.0, %v2283
    %v2285 = vpop.f32.mrb[0].mxu0
    %2286 = vdwg.mxu0
    %2287 = vmatprep.subr.mxu0 0.0
    %2288 = vmatpush1.msra.mxu0 %v2211
    %2289 = vmatprep.subr.mxu0 0.0
    %2290 = vmatpush1.msra.mxu0 0.0
    %2291 = vmatprep.subr.mxu0 0.0
    %2292 = vmatpush1.msra.mxu0 0.0
    %2293 = vmatprep.subr.mxu0 0.0
    %2294 = vmatpush1.msra.mxu0 0.0
    %2295 = vmatprep.subr.mxu0 0.0
    %2296 = vmatpush1.msra.mxu0 0.0
    %2297 = vmatprep.subr.mxu0 0.0
    %2298 = vmatpush1.msra.mxu0 0.0
    %2299 = vmatprep.subr.mxu0 0.0
    %2300 = vmatpush1.msra.mxu0 0.0
    %2301 = vmatprep.subr.mxu0 0.0
    %2302 = vmatpush1.msra.mxu0 0.0
    %2303 = vmatprep.subr.mxu0 0.0
    %2304 = vmatpush1.msra.mxu0 0.0
    %2305 = vmatprep.subr.mxu0 0.0
    %2306 = vmatpush1.msra.mxu0 0.0
    %2307 = vmatprep.subr.mxu0 0.0
    %2308 = vmatpush1.msra.mxu0 0.0
    %2309 = vmatprep.subr.mxu0 0.0
    %2310 = vmatpush1.msra.mxu0 0.0
    %2311 = vmatprep.subr.mxu0 0.0
    %2312 = vmatpush1.msra.mxu0 0.0
    %2313 = vmatprep.subr.mxu0 0.0
    %2314 = vmatpush1.msra.mxu0 0.0
    %2315 = vmatprep.subr.mxu0 0.0
    %2316 = vmatpush1.msra.mxu0 0.0
    %2317 = vmatprep.subr.mxu0 0.0
    %2318 = vmatpush1.msra.mxu0 0.0
    %2319 = vmatprep.subr.mxu0 0.0
    %2320 = vmatpush1.msra.mxu0 0.0
    %2321 = vmatprep.subr.mxu0 0.0
    %2322 = vmatpush1.msra.mxu0 0.0
    %2323 = vmatprep.subr.mxu0 0.0
    %2324 = vmatpush1.msra.mxu0 0.0
    %2325 = vmatprep.subr.mxu0 0.0
    %2326 = vmatpush1.msra.mxu0 0.0
    %2327 = vmatprep.subr.mxu0 0.0
    %2328 = vmatpush1.msra.mxu0 0.0
    %2329 = vmatprep.subr.mxu0 0.0
    %2330 = vmatpush1.msra.mxu0 0.0
    %2331 = vmatprep.subr.mxu0 0.0
    %2332 = vmatpush1.msra.mxu0 0.0
    %2333 = vmatprep.subr.mxu0 0.0
    %2334 = vmatpush1.msra.mxu0 0.0
    %2335 = vmatprep.subr.mxu0 0.0
    %2336 = vmatpush1.msra.mxu0 0.0
    %2337 = vmatprep.subr.mxu0 0.0
    %2338 = vmatpush1.msra.mxu0 0.0
    %2339 = vmatprep.subr.mxu0 0.0
    %2340 = vmatpush1.msra.mxu0 0.0
    %2341 = vmatprep.subr.mxu0 0.0
    %2342 = vmatpush1.msra.mxu0 0.0
    %2343 = vmatprep.subr.mxu0 0.0
    %2344 = vmatpush1.msra.mxu0 0.0
    %2345 = vmatprep.subr.mxu0 0.0
    %2346 = vmatpush1.msra.mxu0 0.0
    %2347 = vmatprep.subr.mxu0 0.0
    %2348 = vmatpush1.msra.mxu0 0.0
    %2349 = vmatprep.subr.mxu0 0.0
    %2350 = vmatpush1.msra.mxu0 0.0
    %2351 = vmatprep.mubr.f32.mxu0 0.0
    %2352 = vmatmul.mubr.f32.gmra.mrb[0].mxu0 %v841
    %v2353 = vpop.f32.mrb[0].mxu0
    %v2354 = vadd.f32 0.0, %v2353
    %v2355 = vpop.f32.mrb[0].mxu0
    %2356 = vdwg.mxu0
    %2357 = vmatprep.subr.mxu0 0.0
    %2358 = vmatpush1.msra.mxu0 %v2284
    %2359 = vmatprep.subr.mxu0 0.0
    %2360 = vmatpush1.msra.mxu0 0.0
    %2361 = vmatprep.subr.mxu0 0.0
    %2362 = vmatpush1.msra.mxu0 0.0
    %2363 = vmatprep.subr.mxu0 0.0
    %2364 = vmatpush1.msra.mxu0 0.0
    %2365 = vmatprep.subr.mxu0 0.0
    %2366 = vmatpush1.msra.mxu0 0.0
    %2367 = vmatprep.subr.mxu0 0.0
    %2368 = vmatpush1.msra.mxu0 0.0
    %2369 = vmatprep.subr.mxu0 0.0
    %2370 = vmatpush1.msra.mxu0 0.0
    %2371 = vmatprep.subr.mxu0 0.0
    %2372 = vmatpush1.msra.mxu0 0.0
    %2373 = vmatprep.subr.mxu0 0.0
    %2374 = vmatpush1.msra.mxu0 0.0
    %2375 = vmatprep.subr.mxu0 0.0
    %2376 = vmatpush1.msra.mxu0 0.0
    %2377 = vmatprep.subr.mxu0 0.0
    %2378 = vmatpush1.msra.mxu0 0.0
    %2379 = vmatprep.subr.mxu0 0.0
    %2380 = vmatpush1.msra.mxu0 0.0
    %2381 = vmatprep.subr.mxu0 0.0
    %2382 = vmatpush1.msra.mxu0 0.0
    %2383 = vmatprep.subr.mxu0 0.0
    %2384 = vmatpush1.msra.mxu0 0.0
    %2385 = vmatprep.subr.mxu0 0.0
    %2386 = vmatpush1.msra.mxu0 0.0
    %2387 = vmatprep.subr.mxu0 0.0
    %2388 = vmatpush1.msra.mxu0 0.0
    %2389 = vmatprep.subr.mxu0 0.0
    %2390 = vmatpush1.msra.mxu0 0.0
    %2391 = vmatprep.subr.mxu0 0.0
    %2392 = vmatpush1.msra.mxu0 0.0
    %2393 = vmatprep.subr.mxu0 0.0
    %2394 = vmatpush1.msra.mxu0 0.0
    %2395 = vmatprep.subr.mxu0 0.0
    %2396 = vmatpush1.msra.mxu0 0.0
    %2397 = vmatprep.subr.mxu0 0.0
    %2398 = vmatpush1.msra.mxu0 0.0
    %2399 = vmatprep.subr.mxu0 0.0
    %2400 = vmatpush1.msra.mxu0 0.0
    %2401 = vmatprep.subr.mxu0 0.0
    %2402 = vmatpush1.msra.mxu0 0.0
    %2403 = vmatprep.subr.mxu0 0.0
    %2404 = vmatpush1.msra.mxu0 0.0
    %2405 = vmatprep.subr.mxu0 0.0
    %2406 = vmatpush1.msra.mxu0 0.0
    %2407 = vmatprep.subr.mxu0 0.0
    %2408 = vmatpush1.msra.mxu0 0.0
    %2409 = vmatprep.subr.mxu0 0.0
    %2410 = vmatpush1.msra.mxu0 0.0
    %2411 = vmatprep.subr.mxu0 0.0
    %2412 = vmatpush1.msra.mxu0 0.0
    %2413 = vmatprep.subr.mxu0 0.0
    %2414 = vmatpush1.msra.mxu0 0.0
    %2415 = vmatprep.subr.mxu0 0.0
    %2416 = vmatpush1.msra.mxu0 0.0
    %2417 = vmatprep.subr.mxu0 0.0
    %2418 = vmatpush1.msra.mxu0 0.0
    %2419 = vmatprep.subr.mxu0 0.0
    %2420 = vmatpush1.msra.mxu0 0.0
    %2421 = vmatprep.mubr.f32.mxu0 0.0
    %2422 = vmatmul.mubr.f32.gmra.mrb[0].mxu0 %v914
    %v2423 = vpop.f32.mrb[0].mxu0
    %v2424 = vadd.f32 0.0, %v2423
    %v2425 = vpop.f32.mrb[0].mxu0
    %2426 = vdwg.mxu0
    %v2427 = vsub.f32 %v986, %v2354
    %v2428 = vsub.f32 %v986, %v2424
    %v2430 = vsel %vm755, %v2211, 0
    %2432 = vmatprep.subr.mxu0 0.0
    %2433 = vmatpush1.msra.mxu0 %v2427
    %2434 = vmatprep.subr.mxu0 0.0
    %2435 = vmatpush1.msra.mxu0 0.0
    %2436 = vmatprep.subr.mxu0 0.0
    %2437 = vmatpush1.msra.mxu0 0.0
    %2438 = vmatprep.subr.mxu0 0.0
    %2439 = vmatpush1.msra.mxu0 0.0
    %2440 = vmatprep.subr.mxu0 0.0
    %2441 = vmatpush1.msra.mxu0 0.0
    %2442 = vmatprep.subr.mxu0 0.0
    %2443 = vmatpush1.msra.mxu0 0.0
    %2444 = vmatprep.subr.mxu0 0.0
    %2445 = vmatpush1.msra.mxu0 0.0
    %2446 = vmatprep.subr.mxu0 0.0
    %2447 = vmatpush1.msra.mxu0 0.0
    %2448 = vmatprep.subr.mxu0 0.0
    %2449 = vmatpush1.msra.mxu0 0.0
    %2450 = vmatprep.subr.mxu0 0.0
    %2451 = vmatpush1.msra.mxu0 0.0
    %2452 = vmatprep.subr.mxu0 0.0
    %2453 = vmatpush1.msra.mxu0 0.0
    %2454 = vmatprep.subr.mxu0 0.0
    %2455 = vmatpush1.msra.mxu0 0.0
    %2456 = vmatprep.subr.mxu0 0.0
    %2457 = vmatpush1.msra.mxu0 0.0
    %2458 = vmatprep.subr.mxu0 0.0
    %2459 = vmatpush1.msra.mxu0 0.0
    %2460 = vmatprep.subr.mxu0 0.0
    %2461 = vmatpush1.msra.mxu0 0.0
    %2462 = vmatprep.subr.mxu0 0.0
    %2463 = vmatpush1.msra.mxu0 0.0
    %2464 = vmatprep.subr.mxu0 0.0
    %2465 = vmatpush1.msra.mxu0 0.0
    %2466 = vmatprep.subr.mxu0 0.0
    %2467 = vmatpush1.msra.mxu0 0.0
    %2468 = vmatprep.subr.mxu0 0.0
    %2469 = vmatpush1.msra.mxu0 0.0
    %2470 = vmatprep.subr.mxu0 0.0
    %2471 = vmatpush1.msra.mxu0 0.0
    %2472 = vmatprep.subr.mxu0 0.0
    %2473 = vmatpush1.msra.mxu0 0.0
    %2474 = vmatprep.subr.mxu0 0.0
    %2475 = vmatpush1.msra.mxu0 0.0
    %2476 = vmatprep.subr.mxu0 0.0
    %2477 = vmatpush1.msra.mxu0 0.0
    %2478 = vmatprep.subr.mxu0 0.0
    %2479 = vmatpush1.msra.mxu0 0.0
    %2480 = vmatprep.subr.mxu0 0.0
    %2481 = vmatpush1.msra.mxu0 0.0
    %2482 = vmatprep.subr.mxu0 0.0
    %2483 = vmatpush1.msra.mxu0 0.0
    %2484 = vmatprep.subr.mxu0 0.0
    %2485 = vmatpush1.msra.mxu0 0.0
    %2486 = vmatprep.subr.mxu0 0.0
    %2487 = vmatpush1.msra.mxu0 0.0
    %2488 = vmatprep.subr.mxu0 0.0
    %2489 = vmatpush1.msra.mxu0 0.0
    %2490 = vmatprep.subr.mxu0 0.0
    %2491 = vmatpush1.msra.mxu0 0.0
    %2492 = vmatprep.subr.mxu0 0.0
    %2493 = vmatpush1.msra.mxu0 0.0
    %2494 = vmatprep.subr.mxu0 0.0
    %2495 = vmatpush1.msra.mxu0 0.0
    %2496 = vmatprep.mubr.f32.mxu0 0.0
    %2497 = vmatmul.mubr.f32.gmra.mrb[0].mxu0 %v2430
    %v2498 = vpop.f32.mrb[0].mxu0
    %v2499 = vadd.f32 0.0, %v2498
    %v2500 = vpop.f32.mrb[0].mxu0
    %2501 = vdwg.mxu0
    %v2503 = vsel %vm755, %v2284, 0
    %2505 = vmatprep.subr.mxu0 0.0
    %2506 = vmatpush1.msra.mxu0 %v2428
    %2507 = vmatprep.subr.mxu0 0.0
    %2508 = vmatpush1.msra.mxu0 0.0
    %2509 = vmatprep.subr.mxu0 0.0
    %2510 = vmatpush1.msra.mxu0 0.0
    %2511 = vmatprep.subr.mxu0 0.0
    %2512 = vmatpush1.msra.mxu0 0.0
    %2513 = vmatprep.subr.mxu0 0.0
    %2514 = vmatpush1.msra.mxu0 0.0
    %2515 = vmatprep.subr.mxu0 0.0
    %2516 = vmatpush1.msra.mxu0 0.0
    %2517 = vmatprep.subr.mxu0 0.0
    %2518 = vmatpush1.msra.mxu0 0.0
    %2519 = vmatprep.subr.mxu0 0.0
    %2520 = vmatpush1.msra.mxu0 0.0
    %2521 = vmatprep.subr.mxu0 0.0
    %2522 = vmatpush1.msra.mxu0 0.0
    %2523 = vmatprep.subr.mxu0 0.0
    %2524 = vmatpush1.msra.mxu0 0.0
    %2525 = vmatprep.subr.mxu0 0.0
    %2526 = vmatpush1.msra.mxu0 0.0
    %2527 = vmatprep.subr.mxu0 0.0
    %2528 = vmatpush1.msra.mxu0 0.0
    %2529 = vmatprep.subr.mxu0 0.0
    %2530 = vmatpush1.msra.mxu0 0.0
    %2531 = vmatprep.subr.mxu0 0.0
    %2532 = vmatpush1.msra.mxu0 0.0
    %2533 = vmatprep.subr.mxu0 0.0
    %2534 = vmatpush1.msra.mxu0 0.0
    %2535 = vmatprep.subr.mxu0 0.0
    %2536 = vmatpush1.msra.mxu0 0.0
    %2537 = vmatprep.subr.mxu0 0.0
    %2538 = vmatpush1.msra.mxu0 0.0
    %2539 = vmatprep.subr.mxu0 0.0
    %2540 = vmatpush1.msra.mxu0 0.0
    %2541 = vmatprep.subr.mxu0 0.0
    %2542 = vmatpush1.msra.mxu0 0.0
    %2543 = vmatprep.subr.mxu0 0.0
    %2544 = vmatpush1.msra.mxu0 0.0
    %2545 = vmatprep.subr.mxu0 0.0
    %2546 = vmatpush1.msra.mxu0 0.0
    %2547 = vmatprep.subr.mxu0 0.0
    %2548 = vmatpush1.msra.mxu0 0.0
    %2549 = vmatprep.subr.mxu0 0.0
    %2550 = vmatpush1.msra.mxu0 0.0
    %2551 = vmatprep.subr.mxu0 0.0
    %2552 = vmatpush1.msra.mxu0 0.0
    %2553 = vmatprep.subr.mxu0 0.0
    %2554 = vmatpush1.msra.mxu0 0.0
    %2555 = vmatprep.subr.mxu0 0.0
    %2556 = vmatpush1.msra.mxu0 0.0
    %2557 = vmatprep.subr.mxu0 0.0
    %2558 = vmatpush1.msra.mxu0 0.0
    %2559 = vmatprep.subr.mxu0 0.0
    %2560 = vmatpush1.msra.mxu0 0.0
    %2561 = vmatprep.subr.mxu0 0.0
    %2562 = vmatpush1.msra.mxu0 0.0
    %2563 = vmatprep.subr.mxu0 0.0
    %2564 = vmatpush1.msra.mxu0 0.0
    %2565 = vmatprep.subr.mxu0 0.0
    %2566 = vmatpush1.msra.mxu0 0.0
    %2567 = vmatprep.subr.mxu0 0.0
    %2568 = vmatpush1.msra.mxu0 0.0
    %2569 = vmatprep.mubr.f32.mxu0 0.0
    %2570 = vmatmul.mubr.f32.gmra.mrb[0].mxu0 %v2503
    %v2571 = vpop.f32.mrb[0].mxu0
    %v2572 = vadd.f32 0.0, %v2571
    %v2573 = vpop.f32.mrb[0].mxu0
    %2574 = vdwg.mxu0
    %2575 = vmatprep.subr.mxu0 0.0
    %2576 = vmatpush1.msra.mxu0 %v2499
    %2577 = vmatprep.subr.mxu0 0.0
    %2578 = vmatpush1.msra.mxu0 0.0
    %2579 = vmatprep.subr.mxu0 0.0
    %2580 = vmatpush1.msra.mxu0 0.0
    %2581 = vmatprep.subr.mxu0 0.0
    %2582 = vmatpush1.msra.mxu0 0.0
    %2583 = vmatprep.subr.mxu0 0.0
    %2584 = vmatpush1.msra.mxu0 0.0
    %2585 = vmatprep.subr.mxu0 0.0
    %2586 = vmatpush1.msra.mxu0 0.0
    %2587 = vmatprep.subr.mxu0 0.0
    %2588 = vmatpush1.msra.mxu0 0.0
    %2589 = vmatprep.subr.mxu0 0.0
    %2590 = vmatpush1.msra.mxu0 0.0
    %2591 = vmatprep.subr.mxu0 0.0
    %2592 = vmatpush1.msra.mxu0 0.0
    %2593 = vmatprep.subr.mxu0 0.0
    %2594 = vmatpush1.msra.mxu0 0.0
    %2595 = vmatprep.subr.mxu0 0.0
    %2596 = vmatpush1.msra.mxu0 0.0
    %2597 = vmatprep.subr.mxu0 0.0
    %2598 = vmatpush1.msra.mxu0 0.0
    %2599 = vmatprep.subr.mxu0 0.0
    %2600 = vmatpush1.msra.mxu0 0.0
    %2601 = vmatprep.subr.mxu0 0.0
    %2602 = vmatpush1.msra.mxu0 0.0
    %2603 = vmatprep.subr.mxu0 0.0
    %2604 = vmatpush1.msra.mxu0 0.0
    %2605 = vmatprep.subr.mxu0 0.0
    %2606 = vmatpush1.msra.mxu0 0.0
    %2607 = vmatprep.subr.mxu0 0.0
    %2608 = vmatpush1.msra.mxu0 0.0
    %2609 = vmatprep.subr.mxu0 0.0
    %2610 = vmatpush1.msra.mxu0 0.0
    %2611 = vmatprep.subr.mxu0 0.0
    %2612 = vmatpush1.msra.mxu0 0.0
    %2613 = vmatprep.subr.mxu0 0.0
    %2614 = vmatpush1.msra.mxu0 0.0
    %2615 = vmatprep.subr.mxu0 0.0
    %2616 = vmatpush1.msra.mxu0 0.0
    %2617 = vmatprep.subr.mxu0 0.0
    %2618 = vmatpush1.msra.mxu0 0.0
    %2619 = vmatprep.subr.mxu0 0.0
    %2620 = vmatpush1.msra.mxu0 0.0
    %2621 = vmatprep.subr.mxu0 0.0
    %2622 = vmatpush1.msra.mxu0 0.0
    %2623 = vmatprep.subr.mxu0 0.0
    %2624 = vmatpush1.msra.mxu0 0.0
    %2625 = vmatprep.subr.mxu0 0.0
    %2626 = vmatpush1.msra.mxu0 0.0
    %2627 = vmatprep.subr.mxu0 0.0
    %2628 = vmatpush1.msra.mxu0 0.0
    %2629 = vmatprep.subr.mxu0 0.0
    %2630 = vmatpush1.msra.mxu0 0.0
    %2631 = vmatprep.subr.mxu0 0.0
    %2632 = vmatpush1.msra.mxu0 0.0
    %2633 = vmatprep.subr.mxu0 0.0
    %2634 = vmatpush1.msra.mxu0 0.0
    %2635 = vmatprep.subr.mxu0 0.0
    %2636 = vmatpush1.msra.mxu0 0.0
    %2637 = vmatprep.subr.mxu0 0.0
    %2638 = vmatpush1.msra.mxu0 0.0
    %2639 = vmatprep.mubr.f32.mxu0 0.0
    %2640 = vmatmul.mubr.f32.gmra.mrb[0].mxu0 %v841
    %v2641 = vpop.f32.mrb[0].mxu0
    %v2642 = vadd.f32 0.0, %v2641
    %v2643 = vpop.f32.mrb[0].mxu0
    %2644 = vdwg.mxu0
    %2645 = vmatprep.subr.mxu0 0.0
    %2646 = vmatpush1.msra.mxu0 %v2572
    %2647 = vmatprep.subr.mxu0 0.0
    %2648 = vmatpush1.msra.mxu0 0.0
    %2649 = vmatprep.subr.mxu0 0.0
    %2650 = vmatpush1.msra.mxu0 0.0
    %2651 = vmatprep.subr.mxu0 0.0
    %2652 = vmatpush1.msra.mxu0 0.0
    %2653 = vmatprep.subr.mxu0 0.0
    %2654 = vmatpush1.msra.mxu0 0.0
    %2655 = vmatprep.subr.mxu0 0.0
    %2656 = vmatpush1.msra.mxu0 0.0
    %2657 = vmatprep.subr.mxu0 0.0
    %2658 = vmatpush1.msra.mxu0 0.0
    %2659 = vmatprep.subr.mxu0 0.0
    %2660 = vmatpush1.msra.mxu0 0.0
    %2661 = vmatprep.subr.mxu0 0.0
    %2662 = vmatpush1.msra.mxu0 0.0
    %2663 = vmatprep.subr.mxu0 0.0
    %2664 = vmatpush1.msra.mxu0 0.0
    %2665 = vmatprep.subr.mxu0 0.0
    %2666 = vmatpush1.msra.mxu0 0.0
    %2667 = vmatprep.subr.mxu0 0.0
    %2668 = vmatpush1.msra.mxu0 0.0
    %2669 = vmatprep.subr.mxu0 0.0
    %2670 = vmatpush1.msra.mxu0 0.0
    %2671 = vmatprep.subr.mxu0 0.0
    %2672 = vmatpush1.msra.mxu0 0.0
    %2673 = vmatprep.subr.mxu0 0.0
    %2674 = vmatpush1.msra.mxu0 0.0
    %2675 = vmatprep.subr.mxu0 0.0
    %2676 = vmatpush1.msra.mxu0 0.0
    %2677 = vmatprep.subr.mxu0 0.0
    %2678 = vmatpush1.msra.mxu0 0.0
    %2679 = vmatprep.subr.mxu0 0.0
    %2680 = vmatpush1.msra.mxu0 0.0
    %2681 = vmatprep.subr.mxu0 0.0
    %2682 = vmatpush1.msra.mxu0 0.0
    %2683 = vmatprep.subr.mxu0 0.0
    %2684 = vmatpush1.msra.mxu0 0.0
    %2685 = vmatprep.subr.mxu0 0.0
    %2686 = vmatpush1.msra.mxu0 0.0
    %2687 = vmatprep.subr.mxu0 0.0
    %2688 = vmatpush1.msra.mxu0 0.0
    %2689 = vmatprep.subr.mxu0 0.0
    %2690 = vmatpush1.msra.mxu0 0.0
    %2691 = vmatprep.subr.mxu0 0.0
    %2692 = vmatpush1.msra.mxu0 0.0
    %2693 = vmatprep.subr.mxu0 0.0
    %2694 = vmatpush1.msra.mxu0 0.0
    %2695 = vmatprep.subr.mxu0 0.0
    %2696 = vmatpush1.msra.mxu0 0.0
    %2697 = vmatprep.subr.mxu0 0.0
    %2698 = vmatpush1.msra.mxu0 0.0
    %2699 = vmatprep.subr.mxu0 0.0
    %2700 = vmatpush1.msra.mxu0 0.0
    %2701 = vmatprep.subr.mxu0 0.0
    %2702 = vmatpush1.msra.mxu0 0.0
    %2703 = vmatprep.subr.mxu0 0.0
    %2704 = vmatpush1.msra.mxu0 0.0
    %2705 = vmatprep.subr.mxu0 0.0
    %2706 = vmatpush1.msra.mxu0 0.0
    %2707 = vmatprep.subr.mxu0 0.0
    %2708 = vmatpush1.msra.mxu0 0.0
    %2709 = vmatprep.mubr.f32.mxu0 0.0
    %2710 = vmatmul.mubr.f32.gmra.mrb[0].mxu0 %v914
    %v2711 = vpop.f32.mrb[0].mxu0
    %v2712 = vadd.f32 0.0, %v2711
    %v2713 = vpop.f32.mrb[0].mxu0
    %2714 = vdwg.mxu0
    %v2715 = vsub.f32 %v986, %v2642
    %v2716 = vsub.f32 %v986, %v2712
    %v2718 = vsel %vm755, %v2499, 0
    %2720 = vmatprep.subr.mxu0 0.0
    %2721 = vmatpush1.msra.mxu0 %v2715
    %2722 = vmatprep.subr.mxu0 0.0
    %2723 = vmatpush1.msra.mxu0 0.0
    %2724 = vmatprep.subr.mxu0 0.0
    %2725 = vmatpush1.msra.mxu0 0.0
    %2726 = vmatprep.subr.mxu0 0.0
    %2727 = vmatpush1.msra.mxu0 0.0
    %2728 = vmatprep.subr.mxu0 0.0
    %2729 = vmatpush1.msra.mxu0 0.0
    %2730 = vmatprep.subr.mxu0 0.0
    %2731 = vmatpush1.msra.mxu0 0.0
    %2732 = vmatprep.subr.mxu0 0.0
    %2733 = vmatpush1.msra.mxu0 0.0
    %2734 = vmatprep.subr.mxu0 0.0
    %2735 = vmatpush1.msra.mxu0 0.0
    %2736 = vmatprep.subr.mxu0 0.0
    %2737 = vmatpush1.msra.mxu0 0.0
    %2738 = vmatprep.subr.mxu0 0.0
    %2739 = vmatpush1.msra.mxu0 0.0
    %2740 = vmatprep.subr.mxu0 0.0
    %2741 = vmatpush1.msra.mxu0 0.0
    %2742 = vmatprep.subr.mxu0 0.0
    %2743 = vmatpush1.msra.mxu0 0.0
    %2744 = vmatprep.subr.mxu0 0.0
    %2745 = vmatpush1.msra.mxu0 0.0
    %2746 = vmatprep.subr.mxu0 0.0
    %2747 = vmatpush1.msra.mxu0 0.0
    %2748 = vmatprep.subr.mxu0 0.0
    %2749 = vmatpush1.msra.mxu0 0.0
    %2750 = vmatprep.subr.mxu0 0.0
    %2751 = vmatpush1.msra.mxu0 0.0
    %2752 = vmatprep.subr.mxu0 0.0
    %2753 = vmatpush1.msra.mxu0 0.0
    %2754 = vmatprep.subr.mxu0 0.0
    %2755 = vmatpush1.msra.mxu0 0.0
    %2756 = vmatprep.subr.mxu0 0.0
    %2757 = vmatpush1.msra.mxu0 0.0
    %2758 = vmatprep.subr.mxu0 0.0
    %2759 = vmatpush1.msra.mxu0 0.0
    %2760 = vmatprep.subr.mxu0 0.0
    %2761 = vmatpush1.msra.mxu0 0.0
    %2762 = vmatprep.subr.mxu0 0.0
    %2763 = vmatpush1.msra.mxu0 0.0
    %2764 = vmatprep.subr.mxu0 0.0
    %2765 = vmatpush1.msra.mxu0 0.0
    %2766 = vmatprep.subr.mxu0 0.0
    %2767 = vmatpush1.msra.mxu0 0.0
    %2768 = vmatprep.subr.mxu0 0.0
    %2769 = vmatpush1.msra.mxu0 0.0
    %2770 = vmatprep.subr.mxu0 0.0
    %2771 = vmatpush1.msra.mxu0 0.0
    %2772 = vmatprep.subr.mxu0 0.0
    %2773 = vmatpush1.msra.mxu0 0.0
    %2774 = vmatprep.subr.mxu0 0.0
    %2775 = vmatpush1.msra.mxu0 0.0
    %2776 = vmatprep.subr.mxu0 0.0
    %2777 = vmatpush1.msra.mxu0 0.0
    %2778 = vmatprep.subr.mxu0 0.0
    %2779 = vmatpush1.msra.mxu0 0.0
    %2780 = vmatprep.subr.mxu0 0.0
    %2781 = vmatpush1.msra.mxu0 0.0
    %2782 = vmatprep.subr.mxu0 0.0
    %2783 = vmatpush1.msra.mxu0 0.0
    %2784 = vmatprep.mubr.f32.mxu0 0.0
    %2785 = vmatmul.mubr.f32.gmra.mrb[0].mxu0 %v2718
    %v2786 = vpop.f32.mrb[0].mxu0
    %v2787 = vadd.f32 0.0, %v2786
    %v2788 = vpop.f32.mrb[0].mxu0
    %2789 = vdwg.mxu0
    %v2791 = vsel %vm755, %v2572, 0
    %2793 = vmatprep.subr.mxu0 0.0
    %2794 = vmatpush1.msra.mxu0 %v2716
    %2795 = vmatprep.subr.mxu0 0.0
    %2796 = vmatpush1.msra.mxu0 0.0
    %2797 = vmatprep.subr.mxu0 0.0
    %2798 = vmatpush1.msra.mxu0 0.0
    %2799 = vmatprep.subr.mxu0 0.0
    %2800 = vmatpush1.msra.mxu0 0.0
    %2801 = vmatprep.subr.mxu0 0.0
    %2802 = vmatpush1.msra.mxu0 0.0
    %2803 = vmatprep.subr.mxu0 0.0
    %2804 = vmatpush1.msra.mxu0 0.0
    %2805 = vmatprep.subr.mxu0 0.0
    %2806 = vmatpush1.msra.mxu0 0.0
    %2807 = vmatprep.subr.mxu0 0.0
    %2808 = vmatpush1.msra.mxu0 0.0
    %2809 = vmatprep.subr.mxu0 0.0
    %2810 = vmatpush1.msra.mxu0 0.0
    %2811 = vmatprep.subr.mxu0 0.0
    %2812 = vmatpush1.msra.mxu0 0.0
    %2813 = vmatprep.subr.mxu0 0.0
    %2814 = vmatpush1.msra.mxu0 0.0
    %2815 = vmatprep.subr.mxu0 0.0
    %2816 = vmatpush1.msra.mxu0 0.0
    %2817 = vmatprep.subr.mxu0 0.0
    %2818 = vmatpush1.msra.mxu0 0.0
    %2819 = vmatprep.subr.mxu0 0.0
    %2820 = vmatpush1.msra.mxu0 0.0
    %2821 = vmatprep.subr.mxu0 0.0
    %2822 = vmatpush1.msra.mxu0 0.0
    %2823 = vmatprep.subr.mxu0 0.0
    %2824 = vmatpush1.msra.mxu0 0.0
    %2825 = vmatprep.subr.mxu0 0.0
    %2826 = vmatpush1.msra.mxu0 0.0
    %2827 = vmatprep.subr.mxu0 0.0
    %2828 = vmatpush1.msra.mxu0 0.0
    %2829 = vmatprep.subr.mxu0 0.0
    %2830 = vmatpush1.msra.mxu0 0.0
    %2831 = vmatprep.subr.mxu0 0.0
    %2832 = vmatpush1.msra.mxu0 0.0
    %2833 = vmatprep.subr.mxu0 0.0
    %2834 = vmatpush1.msra.mxu0 0.0
    %2835 = vmatprep.subr.mxu0 0.0
    %2836 = vmatpush1.msra.mxu0 0.0
    %2837 = vmatprep.subr.mxu0 0.0
    %2838 = vmatpush1.msra.mxu0 0.0
    %2839 = vmatprep.subr.mxu0 0.0
    %2840 = vmatpush1.msra.mxu0 0.0
    %2841 = vmatprep.subr.mxu0 0.0
    %2842 = vmatpush1.msra.mxu0 0.0
    %2843 = vmatprep.subr.mxu0 0.0
    %2844 = vmatpush1.msra.mxu0 0.0
    %2845 = vmatprep.subr.mxu0 0.0
    %2846 = vmatpush1.msra.mxu0 0.0
    %2847 = vmatprep.subr.mxu0 0.0
    %2848 = vmatpush1.msra.mxu0 0.0
    %2849 = vmatprep.subr.mxu0 0.0
    %2850 = vmatpush1.msra.mxu0 0.0
    %2851 = vmatprep.subr.mxu0 0.0
    %2852 = vmatpush1.msra.mxu0 0.0
    %2853 = vmatprep.subr.mxu0 0.0
    %2854 = vmatpush1.msra.mxu0 0.0
    %2855 = vmatprep.subr.mxu0 0.0
    %2856 = vmatpush1.msra.mxu0 0.0
    %2857 = vmatprep.mubr.f32.mxu0 0.0
    %2858 = vmatmul.mubr.f32.gmra.mrb[0].mxu0 %v2791
    %v2859 = vpop.f32.mrb[0].mxu0
    %v2860 = vadd.f32 0.0, %v2859
    %v2861 = vpop.f32.mrb[0].mxu0
    %2862 = vdwg.mxu0
    %2863 = vmatprep.subr.mxu0 0.0
    %2864 = vmatpush1.msra.mxu0 %v2787
    %2865 = vmatprep.subr.mxu0 0.0
    %2866 = vmatpush1.msra.mxu0 0.0
    %2867 = vmatprep.subr.mxu0 0.0
    %2868 = vmatpush1.msra.mxu0 0.0
    %2869 = vmatprep.subr.mxu0 0.0
    %2870 = vmatpush1.msra.mxu0 0.0
    %2871 = vmatprep.subr.mxu0 0.0
    %2872 = vmatpush1.msra.mxu0 0.0
    %2873 = vmatprep.subr.mxu0 0.0
    %2874 = vmatpush1.msra.mxu0 0.0
    %2875 = vmatprep.subr.mxu0 0.0
    %2876 = vmatpush1.msra.mxu0 0.0
    %2877 = vmatprep.subr.mxu0 0.0
    %2878 = vmatpush1.msra.mxu0 0.0
    %2879 = vmatprep.subr.mxu0 0.0
    %2880 = vmatpush1.msra.mxu0 0.0
    %2881 = vmatprep.subr.mxu0 0.0
    %2882 = vmatpush1.msra.mxu0 0.0
    %2883 = vmatprep.subr.mxu0 0.0
    %2884 = vmatpush1.msra.mxu0 0.0
    %2885 = vmatprep.subr.mxu0 0.0
    %2886 = vmatpush1.msra.mxu0 0.0
    %2887 = vmatprep.subr.mxu0 0.0
    %2888 = vmatpush1.msra.mxu0 0.0
    %2889 = vmatprep.subr.mxu0 0.0
    %2890 = vmatpush1.msra.mxu0 0.0
    %2891 = vmatprep.subr.mxu0 0.0
    %2892 = vmatpush1.msra.mxu0 0.0
    %2893 = vmatprep.subr.mxu0 0.0
    %2894 = vmatpush1.msra.mxu0 0.0
    %2895 = vmatprep.subr.mxu0 0.0
    %2896 = vmatpush1.msra.mxu0 0.0
    %2897 = vmatprep.subr.mxu0 0.0
    %2898 = vmatpush1.msra.mxu0 0.0
    %2899 = vmatprep.subr.mxu0 0.0
    %2900 = vmatpush1.msra.mxu0 0.0
    %2901 = vmatprep.subr.mxu0 0.0
    %2902 = vmatpush1.msra.mxu0 0.0
    %2903 = vmatprep.subr.mxu0 0.0
    %2904 = vmatpush1.msra.mxu0 0.0
    %2905 = vmatprep.subr.mxu0 0.0
    %2906 = vmatpush1.msra.mxu0 0.0
    %2907 = vmatprep.subr.mxu0 0.0
    %2908 = vmatpush1.msra.mxu0 0.0
    %2909 = vmatprep.subr.mxu0 0.0
    %2910 = vmatpush1.msra.mxu0 0.0
    %2911 = vmatprep.subr.mxu0 0.0
    %2912 = vmatpush1.msra.mxu0 0.0
    %2913 = vmatprep.subr.mxu0 0.0
    %2914 = vmatpush1.msra.mxu0 0.0
    %2915 = vmatprep.subr.mxu0 0.0
    %2916 = vmatpush1.msra.mxu0 0.0
    %2917 = vmatprep.subr.mxu0 0.0
    %2918 = vmatpush1.msra.mxu0 0.0
    %2919 = vmatprep.subr.mxu0 0.0
    %2920 = vmatpush1.msra.mxu0 0.0
    %2921 = vmatprep.subr.mxu0 0.0
    %2922 = vmatpush1.msra.mxu0 0.0
    %2923 = vmatprep.subr.mxu0 0.0
    %2924 = vmatpush1.msra.mxu0 0.0
    %2925 = vmatprep.subr.mxu0 0.0
    %2926 = vmatpush1.msra.mxu0 0.0
    %2927 = vmatprep.mubr.f32.mxu0 0.0
    %2928 = vmatmul.mubr.f32.gmra.mrb[0].mxu0 %v841
    %v2929 = vpop.f32.mrb[0].mxu0
    %v2930 = vadd.f32 0.0, %v2929
    %v2931 = vpop.f32.mrb[0].mxu0
    %2932 = vdwg.mxu0
    %2933 = vmatprep.subr.mxu0 0.0
    %2934 = vmatpush1.msra.mxu0 %v2860
    %2935 = vmatprep.subr.mxu0 0.0
    %2936 = vmatpush1.msra.mxu0 0.0
    %2937 = vmatprep.subr.mxu0 0.0
    %2938 = vmatpush1.msra.mxu0 0.0
    %2939 = vmatprep.subr.mxu0 0.0
    %2940 = vmatpush1.msra.mxu0 0.0
    %2941 = vmatprep.subr.mxu0 0.0
    %2942 = vmatpush1.msra.mxu0 0.0
    %2943 = vmatprep.subr.mxu0 0.0
    %2944 = vmatpush1.msra.mxu0 0.0
    %2945 = vmatprep.subr.mxu0 0.0
    %2946 = vmatpush1.msra.mxu0 0.0
    %2947 = vmatprep.subr.mxu0 0.0
    %2948 = vmatpush1.msra.mxu0 0.0
    %2949 = vmatprep.subr.mxu0 0.0
    %2950 = vmatpush1.msra.mxu0 0.0
    %2951 = vmatprep.subr.mxu0 0.0
    %2952 = vmatpush1.msra.mxu0 0.0
    %2953 = vmatprep.subr.mxu0 0.0
    %2954 = vmatpush1.msra.mxu0 0.0
    %2955 = vmatprep.subr.mxu0 0.0
    %2956 = vmatpush1.msra.mxu0 0.0
    %2957 = vmatprep.subr.mxu0 0.0
    %2958 = vmatpush1.msra.mxu0 0.0
    %2959 = vmatprep.subr.mxu0 0.0
    %2960 = vmatpush1.msra.mxu0 0.0
    %2961 = vmatprep.subr.mxu0 0.0
    %2962 = vmatpush1.msra.mxu0 0.0
    %2963 = vmatprep.subr.mxu0 0.0
    %2964 = vmatpush1.msra.mxu0 0.0
    %2965 = vmatprep.subr.mxu0 0.0
    %2966 = vmatpush1.msra.mxu0 0.0
    %2967 = vmatprep.subr.mxu0 0.0
    %2968 = vmatpush1.msra.mxu0 0.0
    %2969 = vmatprep.subr.mxu0 0.0
    %2970 = vmatpush1.msra.mxu0 0.0
    %2971 = vmatprep.subr.mxu0 0.0
    %2972 = vmatpush1.msra.mxu0 0.0
    %2973 = vmatprep.subr.mxu0 0.0
    %2974 = vmatpush1.msra.mxu0 0.0
    %2975 = vmatprep.subr.mxu0 0.0
    %2976 = vmatpush1.msra.mxu0 0.0
    %2977 = vmatprep.subr.mxu0 0.0
    %2978 = vmatpush1.msra.mxu0 0.0
    %2979 = vmatprep.subr.mxu0 0.0
    %2980 = vmatpush1.msra.mxu0 0.0
    %2981 = vmatprep.subr.mxu0 0.0
    %2982 = vmatpush1.msra.mxu0 0.0
    %2983 = vmatprep.subr.mxu0 0.0
    %2984 = vmatpush1.msra.mxu0 0.0
    %2985 = vmatprep.subr.mxu0 0.0
    %2986 = vmatpush1.msra.mxu0 0.0
    %2987 = vmatprep.subr.mxu0 0.0
    %2988 = vmatpush1.msra.mxu0 0.0
    %2989 = vmatprep.subr.mxu0 0.0
    %2990 = vmatpush1.msra.mxu0 0.0
    %2991 = vmatprep.subr.mxu0 0.0
    %2992 = vmatpush1.msra.mxu0 0.0
    %2993 = vmatprep.subr.mxu0 0.0
    %2994 = vmatpush1.msra.mxu0 0.0
    %2995 = vmatprep.subr.mxu0 0.0
    %2996 = vmatpush1.msra.mxu0 0.0
    %2997 = vmatprep.mubr.f32.mxu0 0.0
    %2998 = vmatmul.mubr.f32.gmra.mrb[0].mxu0 %v914
    %v2999 = vpop.f32.mrb[0].mxu0
    %v3000 = vadd.f32 0.0, %v2999
    %v3001 = vpop.f32.mrb[0].mxu0
    %3002 = vdwg.mxu0
    %v3003 = vsub.f32 %v986, %v2930
    %v3004 = vsub.f32 %v986, %v3000
    %v3006 = vsel %vm755, %v2787, 0
    %3008 = vmatprep.subr.mxu0 0.0
    %3009 = vmatpush1.msra.mxu0 %v3003
    %3010 = vmatprep.subr.mxu0 0.0
    %3011 = vmatpush1.msra.mxu0 0.0
    %3012 = vmatprep.subr.mxu0 0.0
    %3013 = vmatpush1.msra.mxu0 0.0
    %3014 = vmatprep.subr.mxu0 0.0
    %3015 = vmatpush1.msra.mxu0 0.0
    %3016 = vmatprep.subr.mxu0 0.0
    %3017 = vmatpush1.msra.mxu0 0.0
    %3018 = vmatprep.subr.mxu0 0.0
    %3019 = vmatpush1.msra.mxu0 0.0
    %3020 = vmatprep.subr.mxu0 0.0
    %3021 = vmatpush1.msra.mxu0 0.0
    %3022 = vmatprep.subr.mxu0 0.0
    %3023 = vmatpush1.msra.mxu0 0.0
    %3024 = vmatprep.subr.mxu0 0.0
    %3025 = vmatpush1.msra.mxu0 0.0
    %3026 = vmatprep.subr.mxu0 0.0
    %3027 = vmatpush1.msra.mxu0 0.0
    %3028 = vmatprep.subr.mxu0 0.0
    %3029 = vmatpush1.msra.mxu0 0.0
    %3030 = vmatprep.subr.mxu0 0.0
    %3031 = vmatpush1.msra.mxu0 0.0
    %3032 = vmatprep.subr.mxu0 0.0
    %3033 = vmatpush1.msra.mxu0 0.0
    %3034 = vmatprep.subr.mxu0 0.0
    %3035 = vmatpush1.msra.mxu0 0.0
    %3036 = vmatprep.subr.mxu0 0.0
    %3037 = vmatpush1.msra.mxu0 0.0
    %3038 = vmatprep.subr.mxu0 0.0
    %3039 = vmatpush1.msra.mxu0 0.0
    %3040 = vmatprep.subr.mxu0 0.0
    %3041 = vmatpush1.msra.mxu0 0.0
    %3042 = vmatprep.subr.mxu0 0.0
    %3043 = vmatpush1.msra.mxu0 0.0
    %3044 = vmatprep.subr.mxu0 0.0
    %3045 = vmatpush1.msra.mxu0 0.0
    %3046 = vmatprep.subr.mxu0 0.0
    %3047 = vmatpush1.msra.mxu0 0.0
    %3048 = vmatprep.subr.mxu0 0.0
    %3049 = vmatpush1.msra.mxu0 0.0
    %3050 = vmatprep.subr.mxu0 0.0
    %3051 = vmatpush1.msra.mxu0 0.0
    %3052 = vmatprep.subr.mxu0 0.0
    %3053 = vmatpush1.msra.mxu0 0.0
    %3054 = vmatprep.subr.mxu0 0.0
    %3055 = vmatpush1.msra.mxu0 0.0
    %3056 = vmatprep.subr.mxu0 0.0
    %3057 = vmatpush1.msra.mxu0 0.0
    %3058 = vmatprep.subr.mxu0 0.0
    %3059 = vmatpush1.msra.mxu0 0.0
    %3060 = vmatprep.subr.mxu0 0.0
    %3061 = vmatpush1.msra.mxu0 0.0
    %3062 = vmatprep.subr.mxu0 0.0
    %3063 = vmatpush1.msra.mxu0 0.0
    %3064 = vmatprep.subr.mxu0 0.0
    %3065 = vmatpush1.msra.mxu0 0.0
    %3066 = vmatprep.subr.mxu0 0.0
    %3067 = vmatpush1.msra.mxu0 0.0
    %3068 = vmatprep.subr.mxu0 0.0
    %3069 = vmatpush1.msra.mxu0 0.0
    %3070 = vmatprep.subr.mxu0 0.0
    %3071 = vmatpush1.msra.mxu0 0.0
    %3072 = vmatprep.mubr.f32.mxu0 0.0
    %3073 = vmatmul.mubr.f32.gmra.mrb[0].mxu0 %v3006
    %v3074 = vpop.f32.mrb[0].mxu0
    %v3075 = vadd.f32 0.0, %v3074
    %v3076 = vpop.f32.mrb[0].mxu0
    %3077 = vdwg.mxu0
    %v3079 = vsel %vm755, %v2860, 0
    %3081 = vmatprep.subr.mxu0 0.0
    %3082 = vmatpush1.msra.mxu0 %v3004
    %3083 = vmatprep.subr.mxu0 0.0
    %3084 = vmatpush1.msra.mxu0 0.0
    %3085 = vmatprep.subr.mxu0 0.0
    %3086 = vmatpush1.msra.mxu0 0.0
    %3087 = vmatprep.subr.mxu0 0.0
    %3088 = vmatpush1.msra.mxu0 0.0
    %3089 = vmatprep.subr.mxu0 0.0
    %3090 = vmatpush1.msra.mxu0 0.0
    %3091 = vmatprep.subr.mxu0 0.0
    %3092 = vmatpush1.msra.mxu0 0.0
    %3093 = vmatprep.subr.mxu0 0.0
    %3094 = vmatpush1.msra.mxu0 0.0
    %3095 = vmatprep.subr.mxu0 0.0
    %3096 = vmatpush1.msra.mxu0 0.0
    %3097 = vmatprep.subr.mxu0 0.0
    %3098 = vmatpush1.msra.mxu0 0.0
    %3099 = vmatprep.subr.mxu0 0.0
    %3100 = vmatpush1.msra.mxu0 0.0
    %3101 = vmatprep.subr.mxu0 0.0
    %3102 = vmatpush1.msra.mxu0 0.0
    %3103 = vmatprep.subr.mxu0 0.0
    %3104 = vmatpush1.msra.mxu0 0.0
    %3105 = vmatprep.subr.mxu0 0.0
    %3106 = vmatpush1.msra.mxu0 0.0
    %3107 = vmatprep.subr.mxu0 0.0
    %3108 = vmatpush1.msra.mxu0 0.0
    %3109 = vmatprep.subr.mxu0 0.0
    %3110 = vmatpush1.msra.mxu0 0.0
    %3111 = vmatprep.subr.mxu0 0.0
    %3112 = vmatpush1.msra.mxu0 0.0
    %3113 = vmatprep.subr.mxu0 0.0
    %3114 = vmatpush1.msra.mxu0 0.0
    %3115 = vmatprep.subr.mxu0 0.0
    %3116 = vmatpush1.msra.mxu0 0.0
    %3117 = vmatprep.subr.mxu0 0.0
    %3118 = vmatpush1.msra.mxu0 0.0
    %3119 = vmatprep.subr.mxu0 0.0
    %3120 = vmatpush1.msra.mxu0 0.0
    %3121 = vmatprep.subr.mxu0 0.0
    %3122 = vmatpush1.msra.mxu0 0.0
    %3123 = vmatprep.subr.mxu0 0.0
    %3124 = vmatpush1.msra.mxu0 0.0
    %3125 = vmatprep.subr.mxu0 0.0
    %3126 = vmatpush1.msra.mxu0 0.0
    %3127 = vmatprep.subr.mxu0 0.0
    %3128 = vmatpush1.msra.mxu0 0.0
    %3129 = vmatprep.subr.mxu0 0.0
    %3130 = vmatpush1.msra.mxu0 0.0
    %3131 = vmatprep.subr.mxu0 0.0
    %3132 = vmatpush1.msra.mxu0 0.0
    %3133 = vmatprep.subr.mxu0 0.0
    %3134 = vmatpush1.msra.mxu0 0.0
    %3135 = vmatprep.subr.mxu0 0.0
    %3136 = vmatpush1.msra.mxu0 0.0
    %3137 = vmatprep.subr.mxu0 0.0
    %3138 = vmatpush1.msra.mxu0 0.0
    %3139 = vmatprep.subr.mxu0 0.0
    %3140 = vmatpush1.msra.mxu0 0.0
    %3141 = vmatprep.subr.mxu0 0.0
    %3142 = vmatpush1.msra.mxu0 0.0
    %3143 = vmatprep.subr.mxu0 0.0
    %3144 = vmatpush1.msra.mxu0 0.0
    %3145 = vmatprep.mubr.f32.mxu0 0.0
    %3146 = vmatmul.mubr.f32.gmra.mrb[0].mxu0 %v3079
    %v3147 = vpop.f32.mrb[0].mxu0
    %v3148 = vadd.f32 0.0, %v3147
    %v3149 = vpop.f32.mrb[0].mxu0
    %3150 = vdwg.mxu0
    %3151 = vmatprep.subr.mxu0 0.0
    %3152 = vmatpush1.msra.mxu0 %v3075
    %3153 = vmatprep.subr.mxu0 0.0
    %3154 = vmatpush1.msra.mxu0 0.0
    %3155 = vmatprep.subr.mxu0 0.0
    %3156 = vmatpush1.msra.mxu0 0.0
    %3157 = vmatprep.subr.mxu0 0.0
    %3158 = vmatpush1.msra.mxu0 0.0
    %3159 = vmatprep.subr.mxu0 0.0
    %3160 = vmatpush1.msra.mxu0 0.0
    %3161 = vmatprep.subr.mxu0 0.0
    %3162 = vmatpush1.msra.mxu0 0.0
    %3163 = vmatprep.subr.mxu0 0.0
    %3164 = vmatpush1.msra.mxu0 0.0
    %3165 = vmatprep.subr.mxu0 0.0
    %3166 = vmatpush1.msra.mxu0 0.0
    %3167 = vmatprep.subr.mxu0 0.0
    %3168 = vmatpush1.msra.mxu0 0.0
    %3169 = vmatprep.subr.mxu0 0.0
    %3170 = vmatpush1.msra.mxu0 0.0
    %3171 = vmatprep.subr.mxu0 0.0
    %3172 = vmatpush1.msra.mxu0 0.0
    %3173 = vmatprep.subr.mxu0 0.0
    %3174 = vmatpush1.msra.mxu0 0.0
    %3175 = vmatprep.subr.mxu0 0.0
    %3176 = vmatpush1.msra.mxu0 0.0
    %3177 = vmatprep.subr.mxu0 0.0
    %3178 = vmatpush1.msra.mxu0 0.0
    %3179 = vmatprep.subr.mxu0 0.0
    %3180 = vmatpush1.msra.mxu0 0.0
    %3181 = vmatprep.subr.mxu0 0.0
    %3182 = vmatpush1.msra.mxu0 0.0
    %3183 = vmatprep.subr.mxu0 0.0
    %3184 = vmatpush1.msra.mxu0 0.0
    %3185 = vmatprep.subr.mxu0 0.0
    %3186 = vmatpush1.msra.mxu0 0.0
    %3187 = vmatprep.subr.mxu0 0.0
    %3188 = vmatpush1.msra.mxu0 0.0
    %3189 = vmatprep.subr.mxu0 0.0
    %3190 = vmatpush1.msra.mxu0 0.0
    %3191 = vmatprep.subr.mxu0 0.0
    %3192 = vmatpush1.msra.mxu0 0.0
    %3193 = vmatprep.subr.mxu0 0.0
    %3194 = vmatpush1.msra.mxu0 0.0
    %3195 = vmatprep.subr.mxu0 0.0
    %3196 = vmatpush1.msra.mxu0 0.0
    %3197 = vmatprep.subr.mxu0 0.0
    %3198 = vmatpush1.msra.mxu0 0.0
    %3199 = vmatprep.subr.mxu0 0.0
    %3200 = vmatpush1.msra.mxu0 0.0
    %3201 = vmatprep.subr.mxu0 0.0
    %3202 = vmatpush1.msra.mxu0 0.0
    %3203 = vmatprep.subr.mxu0 0.0
    %3204 = vmatpush1.msra.mxu0 0.0
    %3205 = vmatprep.subr.mxu0 0.0
    %3206 = vmatpush1.msra.mxu0 0.0
    %3207 = vmatprep.subr.mxu0 0.0
    %3208 = vmatpush1.msra.mxu0 0.0
    %3209 = vmatprep.subr.mxu0 0.0
    %3210 = vmatpush1.msra.mxu0 0.0
    %3211 = vmatprep.subr.mxu0 0.0
    %3212 = vmatpush1.msra.mxu0 0.0
    %3213 = vmatprep.subr.mxu0 0.0
    %3214 = vmatpush1.msra.mxu0 0.0
    %3215 = vmatprep.mubr.f32.mxu0 0.0
    %3216 = vmatmul.mubr.f32.gmra.mrb[0].mxu0 %v841
    %v3217 = vpop.f32.mrb[0].mxu0
    %v3218 = vadd.f32 0.0, %v3217
    %v3219 = vpop.f32.mrb[0].mxu0
    %3220 = vdwg.mxu0
    %3221 = vmatprep.subr.mxu0 0.0
    %3222 = vmatpush1.msra.mxu0 %v3148
    %3223 = vmatprep.subr.mxu0 0.0
    %3224 = vmatpush1.msra.mxu0 0.0
    %3225 = vmatprep.subr.mxu0 0.0
    %3226 = vmatpush1.msra.mxu0 0.0
    %3227 = vmatprep.subr.mxu0 0.0
    %3228 = vmatpush1.msra.mxu0 0.0
    %3229 = vmatprep.subr.mxu0 0.0
    %3230 = vmatpush1.msra.mxu0 0.0
    %3231 = vmatprep.subr.mxu0 0.0
    %3232 = vmatpush1.msra.mxu0 0.0
    %3233 = vmatprep.subr.mxu0 0.0
    %3234 = vmatpush1.msra.mxu0 0.0
    %3235 = vmatprep.subr.mxu0 0.0
    %3236 = vmatpush1.msra.mxu0 0.0
    %3237 = vmatprep.subr.mxu0 0.0
    %3238 = vmatpush1.msra.mxu0 0.0
    %3239 = vmatprep.subr.mxu0 0.0
    %3240 = vmatpush1.msra.mxu0 0.0
    %3241 = vmatprep.subr.mxu0 0.0
    %3242 = vmatpush1.msra.mxu0 0.0
    %3243 = vmatprep.subr.mxu0 0.0
    %3244 = vmatpush1.msra.mxu0 0.0
    %3245 = vmatprep.subr.mxu0 0.0
    %3246 = vmatpush1.msra.mxu0 0.0
    %3247 = vmatprep.subr.mxu0 0.0
    %3248 = vmatpush1.msra.mxu0 0.0
    %3249 = vmatprep.subr.mxu0 0.0
    %3250 = vmatpush1.msra.mxu0 0.0
    %3251 = vmatprep.subr.mxu0 0.0
    %3252 = vmatpush1.msra.mxu0 0.0
    %3253 = vmatprep.subr.mxu0 0.0
    %3254 = vmatpush1.msra.mxu0 0.0
    %3255 = vmatprep.subr.mxu0 0.0
    %3256 = vmatpush1.msra.mxu0 0.0
    %3257 = vmatprep.subr.mxu0 0.0
    %3258 = vmatpush1.msra.mxu0 0.0
    %3259 = vmatprep.subr.mxu0 0.0
    %3260 = vmatpush1.msra.mxu0 0.0
    %3261 = vmatprep.subr.mxu0 0.0
    %3262 = vmatpush1.msra.mxu0 0.0
    %3263 = vmatprep.subr.mxu0 0.0
    %3264 = vmatpush1.msra.mxu0 0.0
    %3265 = vmatprep.subr.mxu0 0.0
    %3266 = vmatpush1.msra.mxu0 0.0
    %3267 = vmatprep.subr.mxu0 0.0
    %3268 = vmatpush1.msra.mxu0 0.0
    %3269 = vmatprep.subr.mxu0 0.0
    %3270 = vmatpush1.msra.mxu0 0.0
    %3271 = vmatprep.subr.mxu0 0.0
    %3272 = vmatpush1.msra.mxu0 0.0
    %3273 = vmatprep.subr.mxu0 0.0
    %3274 = vmatpush1.msra.mxu0 0.0
    %3275 = vmatprep.subr.mxu0 0.0
    %3276 = vmatpush1.msra.mxu0 0.0
    %3277 = vmatprep.subr.mxu0 0.0
    %3278 = vmatpush1.msra.mxu0 0.0
    %3279 = vmatprep.subr.mxu0 0.0
    %3280 = vmatpush1.msra.mxu0 0.0
    %3281 = vmatprep.subr.mxu0 0.0
    %3282 = vmatpush1.msra.mxu0 0.0
    %3283 = vmatprep.subr.mxu0 0.0
    %3284 = vmatpush1.msra.mxu0 0.0
    %3285 = vmatprep.mubr.f32.mxu0 0.0
    %3286 = vmatmul.mubr.f32.gmra.mrb[0].mxu0 %v914
    %v3287 = vpop.f32.mrb[0].mxu0
    %v3288 = vadd.f32 0.0, %v3287
    %v3289 = vpop.f32.mrb[0].mxu0
    %3290 = vdwg.mxu0
    %v3291 = vsub.f32 %v986, %v3218
    %v3292 = vsub.f32 %v986, %v3288
    %v3294 = vsel %vm755, %v3075, 0
    %3296 = vmatprep.subr.mxu0 0.0
    %3297 = vmatpush1.msra.mxu0 %v3291
    %3298 = vmatprep.subr.mxu0 0.0
    %3299 = vmatpush1.msra.mxu0 0.0
    %3300 = vmatprep.subr.mxu0 0.0
    %3301 = vmatpush1.msra.mxu0 0.0
    %3302 = vmatprep.subr.mxu0 0.0
    %3303 = vmatpush1.msra.mxu0 0.0
    %3304 = vmatprep.subr.mxu0 0.0
    %3305 = vmatpush1.msra.mxu0 0.0
    %3306 = vmatprep.subr.mxu0 0.0
    %3307 = vmatpush1.msra.mxu0 0.0
    %3308 = vmatprep.subr.mxu0 0.0
    %3309 = vmatpush1.msra.mxu0 0.0
    %3310 = vmatprep.subr.mxu0 0.0
    %3311 = vmatpush1.msra.mxu0 0.0
    %3312 = vmatprep.subr.mxu0 0.0
    %3313 = vmatpush1.msra.mxu0 0.0
    %3314 = vmatprep.subr.mxu0 0.0
    %3315 = vmatpush1.msra.mxu0 0.0
    %3316 = vmatprep.subr.mxu0 0.0
    %3317 = vmatpush1.msra.mxu0 0.0
    %3318 = vmatprep.subr.mxu0 0.0
    %3319 = vmatpush1.msra.mxu0 0.0
    %3320 = vmatprep.subr.mxu0 0.0
    %3321 = vmatpush1.msra.mxu0 0.0
    %3322 = vmatprep.subr.mxu0 0.0
    %3323 = vmatpush1.msra.mxu0 0.0
    %3324 = vmatprep.subr.mxu0 0.0
    %3325 = vmatpush1.msra.mxu0 0.0
    %3326 = vmatprep.subr.mxu0 0.0
    %3327 = vmatpush1.msra.mxu0 0.0
    %3328 = vmatprep.subr.mxu0 0.0
    %3329 = vmatpush1.msra.mxu0 0.0
    %3330 = vmatprep.subr.mxu0 0.0
    %3331 = vmatpush1.msra.mxu0 0.0
    %3332 = vmatprep.subr.mxu0 0.0
    %3333 = vmatpush1.msra.mxu0 0.0
    %3334 = vmatprep.subr.mxu0 0.0
    %3335 = vmatpush1.msra.mxu0 0.0
    %3336 = vmatprep.subr.mxu0 0.0
    %3337 = vmatpush1.msra.mxu0 0.0
    %3338 = vmatprep.subr.mxu0 0.0
    %3339 = vmatpush1.msra.mxu0 0.0
    %3340 = vmatprep.subr.mxu0 0.0
    %3341 = vmatpush1.msra.mxu0 0.0
    %3342 = vmatprep.subr.mxu0 0.0
    %3343 = vmatpush1.msra.mxu0 0.0
    %3344 = vmatprep.subr.mxu0 0.0
    %3345 = vmatpush1.msra.mxu0 0.0
    %3346 = vmatprep.subr.mxu0 0.0
    %3347 = vmatpush1.msra.mxu0 0.0
    %3348 = vmatprep.subr.mxu0 0.0
    %3349 = vmatpush1.msra.mxu0 0.0
    %3350 = vmatprep.subr.mxu0 0.0
    %3351 = vmatpush1.msra.mxu0 0.0
    %3352 = vmatprep.subr.mxu0 0.0
    %3353 = vmatpush1.msra.mxu0 0.0
    %3354 = vmatprep.subr.mxu0 0.0
    %3355 = vmatpush1.msra.mxu0 0.0
    %3356 = vmatprep.subr.mxu0 0.0
    %3357 = vmatpush1.msra.mxu0 0.0
    %3358 = vmatprep.subr.mxu0 0.0
    %3359 = vmatpush1.msra.mxu0 0.0
    %3360 = vmatprep.mubr.f32.mxu0 0.0
    %3361 = vmatmul.mubr.f32.gmra.mrb[0].mxu0 %v3294
    %v3362 = vpop.f32.mrb[0].mxu0
    %v3363 = vadd.f32 0.0, %v3362
    %v3364 = vpop.f32.mrb[0].mxu0
    %3365 = vdwg.mxu0
    %v3367 = vsel %vm755, %v3148, 0
    %3369 = vmatprep.subr.mxu0 0.0
    %3370 = vmatpush1.msra.mxu0 %v3292
    %3371 = vmatprep.subr.mxu0 0.0
    %3372 = vmatpush1.msra.mxu0 0.0
    %3373 = vmatprep.subr.mxu0 0.0
    %3374 = vmatpush1.msra.mxu0 0.0
    %3375 = vmatprep.subr.mxu0 0.0
    %3376 = vmatpush1.msra.mxu0 0.0
    %3377 = vmatprep.subr.mxu0 0.0
    %3378 = vmatpush1.msra.mxu0 0.0
    %3379 = vmatprep.subr.mxu0 0.0
    %3380 = vmatpush1.msra.mxu0 0.0
    %3381 = vmatprep.subr.mxu0 0.0
    %3382 = vmatpush1.msra.mxu0 0.0
    %3383 = vmatprep.subr.mxu0 0.0
    %3384 = vmatpush1.msra.mxu0 0.0
    %3385 = vmatprep.subr.mxu0 0.0
    %3386 = vmatpush1.msra.mxu0 0.0
    %3387 = vmatprep.subr.mxu0 0.0
    %3388 = vmatpush1.msra.mxu0 0.0
    %3389 = vmatprep.subr.mxu0 0.0
    %3390 = vmatpush1.msra.mxu0 0.0
    %3391 = vmatprep.subr.mxu0 0.0
    %3392 = vmatpush1.msra.mxu0 0.0
    %3393 = vmatprep.subr.mxu0 0.0
    %3394 = vmatpush1.msra.mxu0 0.0
    %3395 = vmatprep.subr.mxu0 0.0
    %3396 = vmatpush1.msra.mxu0 0.0
    %3397 = vmatprep.subr.mxu0 0.0
    %3398 = vmatpush1.msra.mxu0 0.0
    %3399 = vmatprep.subr.mxu0 0.0
    %3400 = vmatpush1.msra.mxu0 0.0
    %3401 = vmatprep.subr.mxu0 0.0
    %3402 = vmatpush1.msra.mxu0 0.0
    %3403 = vmatprep.subr.mxu0 0.0
    %3404 = vmatpush1.msra.mxu0 0.0
    %3405 = vmatprep.subr.mxu0 0.0
    %3406 = vmatpush1.msra.mxu0 0.0
    %3407 = vmatprep.subr.mxu0 0.0
    %3408 = vmatpush1.msra.mxu0 0.0
    %3409 = vmatprep.subr.mxu0 0.0
    %3410 = vmatpush1.msra.mxu0 0.0
    %3411 = vmatprep.subr.mxu0 0.0
    %3412 = vmatpush1.msra.mxu0 0.0
    %3413 = vmatprep.subr.mxu0 0.0
    %3414 = vmatpush1.msra.mxu0 0.0
    %3415 = vmatprep.subr.mxu0 0.0
    %3416 = vmatpush1.msra.mxu0 0.0
    %3417 = vmatprep.subr.mxu0 0.0
    %3418 = vmatpush1.msra.mxu0 0.0
    %3419 = vmatprep.subr.mxu0 0.0
    %3420 = vmatpush1.msra.mxu0 0.0
    %3421 = vmatprep.subr.mxu0 0.0
    %3422 = vmatpush1.msra.mxu0 0.0
    %3423 = vmatprep.subr.mxu0 0.0
    %3424 = vmatpush1.msra.mxu0 0.0
    %3425 = vmatprep.subr.mxu0 0.0
    %3426 = vmatpush1.msra.mxu0 0.0
    %3427 = vmatprep.subr.mxu0 0.0
    %3428 = vmatpush1.msra.mxu0 0.0
    %3429 = vmatprep.subr.mxu0 0.0
    %3430 = vmatpush1.msra.mxu0 0.0
    %3431 = vmatprep.subr.mxu0 0.0
    %3432 = vmatpush1.msra.mxu0 0.0
    %3433 = vmatprep.mubr.f32.mxu0 0.0
    %3434 = vmatmul.mubr.f32.gmra.mrb[0].mxu0 %v3367
    %v3435 = vpop.f32.mrb[0].mxu0
    %v3436 = vadd.f32 0.0, %v3435
    %v3437 = vpop.f32.mrb[0].mxu0
    %3438 = vdwg.mxu0
    %3439 = vmatprep.subr.mxu0 0.0
    %3440 = vmatpush1.msra.mxu0 %v3363
    %3441 = vmatprep.subr.mxu0 0.0
    %3442 = vmatpush1.msra.mxu0 0.0
    %3443 = vmatprep.subr.mxu0 0.0
    %3444 = vmatpush1.msra.mxu0 0.0
    %3445 = vmatprep.subr.mxu0 0.0
    %3446 = vmatpush1.msra.mxu0 0.0
    %3447 = vmatprep.subr.mxu0 0.0
    %3448 = vmatpush1.msra.mxu0 0.0
    %3449 = vmatprep.subr.mxu0 0.0
    %3450 = vmatpush1.msra.mxu0 0.0
    %3451 = vmatprep.subr.mxu0 0.0
    %3452 = vmatpush1.msra.mxu0 0.0
    %3453 = vmatprep.subr.mxu0 0.0
    %3454 = vmatpush1.msra.mxu0 0.0
    %3455 = vmatprep.subr.mxu0 0.0
    %3456 = vmatpush1.msra.mxu0 0.0
    %3457 = vmatprep.subr.mxu0 0.0
    %3458 = vmatpush1.msra.mxu0 0.0
    %3459 = vmatprep.subr.mxu0 0.0
    %3460 = vmatpush1.msra.mxu0 0.0
    %3461 = vmatprep.subr.mxu0 0.0
    %3462 = vmatpush1.msra.mxu0 0.0
    %3463 = vmatprep.subr.mxu0 0.0
    %3464 = vmatpush1.msra.mxu0 0.0
    %3465 = vmatprep.subr.mxu0 0.0
    %3466 = vmatpush1.msra.mxu0 0.0
    %3467 = vmatprep.subr.mxu0 0.0
    %3468 = vmatpush1.msra.mxu0 0.0
    %3469 = vmatprep.subr.mxu0 0.0
    %3470 = vmatpush1.msra.mxu0 0.0
    %3471 = vmatprep.subr.mxu0 0.0
    %3472 = vmatpush1.msra.mxu0 0.0
    %3473 = vmatprep.subr.mxu0 0.0
    %3474 = vmatpush1.msra.mxu0 0.0
    %3475 = vmatprep.subr.mxu0 0.0
    %3476 = vmatpush1.msra.mxu0 0.0
    %3477 = vmatprep.subr.mxu0 0.0
    %3478 = vmatpush1.msra.mxu0 0.0
    %3479 = vmatprep.subr.mxu0 0.0
    %3480 = vmatpush1.msra.mxu0 0.0
    %3481 = vmatprep.subr.mxu0 0.0
    %3482 = vmatpush1.msra.mxu0 0.0
    %3483 = vmatprep.subr.mxu0 0.0
    %3484 = vmatpush1.msra.mxu0 0.0
    %3485 = vmatprep.subr.mxu0 0.0
    %3486 = vmatpush1.msra.mxu0 0.0
    %3487 = vmatprep.subr.mxu0 0.0
    %3488 = vmatpush1.msra.mxu0 0.0
    %3489 = vmatprep.subr.mxu0 0.0
    %3490 = vmatpush1.msra.mxu0 0.0
    %3491 = vmatprep.subr.mxu0 0.0
    %3492 = vmatpush1.msra.mxu0 0.0
    %3493 = vmatprep.subr.mxu0 0.0
    %3494 = vmatpush1.msra.mxu0 0.0
    %3495 = vmatprep.subr.mxu0 0.0
    %3496 = vmatpush1.msra.mxu0 0.0
    %3497 = vmatprep.subr.mxu0 0.0
    %3498 = vmatpush1.msra.mxu0 0.0
    %3499 = vmatprep.subr.mxu0 0.0
    %3500 = vmatpush1.msra.mxu0 0.0
    %3501 = vmatprep.subr.mxu0 0.0
    %3502 = vmatpush1.msra.mxu0 0.0
    %3503 = vmatprep.mubr.f32.mxu0 0.0
    %3504 = vmatmul.mubr.f32.gmra.mrb[0].mxu0 %v841
    %v3505 = vpop.f32.mrb[0].mxu0
    %v3506 = vadd.f32 0.0, %v3505
    %v3507 = vpop.f32.mrb[0].mxu0
    %3508 = vdwg.mxu0
    %3509 = vmatprep.subr.mxu0 0.0
    %3510 = vmatpush1.msra.mxu0 %v3436
    %3511 = vmatprep.subr.mxu0 0.0
    %3512 = vmatpush1.msra.mxu0 0.0
    %3513 = vmatprep.subr.mxu0 0.0
    %3514 = vmatpush1.msra.mxu0 0.0
    %3515 = vmatprep.subr.mxu0 0.0
    %3516 = vmatpush1.msra.mxu0 0.0
    %3517 = vmatprep.subr.mxu0 0.0
    %3518 = vmatpush1.msra.mxu0 0.0
    %3519 = vmatprep.subr.mxu0 0.0
    %3520 = vmatpush1.msra.mxu0 0.0
    %3521 = vmatprep.subr.mxu0 0.0
    %3522 = vmatpush1.msra.mxu0 0.0
    %3523 = vmatprep.subr.mxu0 0.0
    %3524 = vmatpush1.msra.mxu0 0.0
    %3525 = vmatprep.subr.mxu0 0.0
    %3526 = vmatpush1.msra.mxu0 0.0
    %3527 = vmatprep.subr.mxu0 0.0
    %3528 = vmatpush1.msra.mxu0 0.0
    %3529 = vmatprep.subr.mxu0 0.0
    %3530 = vmatpush1.msra.mxu0 0.0
    %3531 = vmatprep.subr.mxu0 0.0
    %3532 = vmatpush1.msra.mxu0 0.0
    %3533 = vmatprep.subr.mxu0 0.0
    %3534 = vmatpush1.msra.mxu0 0.0
    %3535 = vmatprep.subr.mxu0 0.0
    %3536 = vmatpush1.msra.mxu0 0.0
    %3537 = vmatprep.subr.mxu0 0.0
    %3538 = vmatpush1.msra.mxu0 0.0
    %3539 = vmatprep.subr.mxu0 0.0
    %3540 = vmatpush1.msra.mxu0 0.0
    %3541 = vmatprep.subr.mxu0 0.0
    %3542 = vmatpush1.msra.mxu0 0.0
    %3543 = vmatprep.subr.mxu0 0.0
    %3544 = vmatpush1.msra.mxu0 0.0
    %3545 = vmatprep.subr.mxu0 0.0
    %3546 = vmatpush1.msra.mxu0 0.0
    %3547 = vmatprep.subr.mxu0 0.0
    %3548 = vmatpush1.msra.mxu0 0.0
    %3549 = vmatprep.subr.mxu0 0.0
    %3550 = vmatpush1.msra.mxu0 0.0
    %3551 = vmatprep.subr.mxu0 0.0
    %3552 = vmatpush1.msra.mxu0 0.0
    %3553 = vmatprep.subr.mxu0 0.0
    %3554 = vmatpush1.msra.mxu0 0.0
    %3555 = vmatprep.subr.mxu0 0.0
    %3556 = vmatpush1.msra.mxu0 0.0
    %3557 = vmatprep.subr.mxu0 0.0
    %3558 = vmatpush1.msra.mxu0 0.0
    %3559 = vmatprep.subr.mxu0 0.0
    %3560 = vmatpush1.msra.mxu0 0.0
    %3561 = vmatprep.subr.mxu0 0.0
    %3562 = vmatpush1.msra.mxu0 0.0
    %3563 = vmatprep.subr.mxu0 0.0
    %3564 = vmatpush1.msra.mxu0 0.0
    %3565 = vmatprep.subr.mxu0 0.0
    %3566 = vmatpush1.msra.mxu0 0.0
    %3567 = vmatprep.subr.mxu0 0.0
    %3568 = vmatpush1.msra.mxu0 0.0
    %3569 = vmatprep.subr.mxu0 0.0
    %3570 = vmatpush1.msra.mxu0 0.0
    %3571 = vmatprep.subr.mxu0 0.0
    %3572 = vmatpush1.msra.mxu0 0.0
    %3573 = vmatprep.mubr.f32.mxu0 0.0
    %3574 = vmatmul.mubr.f32.gmra.mrb[0].mxu0 %v914
    %v3575 = vpop.f32.mrb[0].mxu0
    %v3576 = vadd.f32 0.0, %v3575
    %v3577 = vpop.f32.mrb[0].mxu0
    %3578 = vdwg.mxu0
    %v3579 = vsub.f32 %v986, %v3506
    %v3580 = vsub.f32 %v986, %v3576
    %v3582 = vsel %vm755, %v3363, 0
    %3584 = vmatprep.subr.mxu0 0.0
    %3585 = vmatpush1.msra.mxu0 %v3579
    %3586 = vmatprep.subr.mxu0 0.0
    %3587 = vmatpush1.msra.mxu0 0.0
    %3588 = vmatprep.subr.mxu0 0.0
    %3589 = vmatpush1.msra.mxu0 0.0
    %3590 = vmatprep.subr.mxu0 0.0
    %3591 = vmatpush1.msra.mxu0 0.0
    %3592 = vmatprep.subr.mxu0 0.0
    %3593 = vmatpush1.msra.mxu0 0.0
    %3594 = vmatprep.subr.mxu0 0.0
    %3595 = vmatpush1.msra.mxu0 0.0
    %3596 = vmatprep.subr.mxu0 0.0
    %3597 = vmatpush1.msra.mxu0 0.0
    %3598 = vmatprep.subr.mxu0 0.0
    %3599 = vmatpush1.msra.mxu0 0.0
    %3600 = vmatprep.subr.mxu0 0.0
    %3601 = vmatpush1.msra.mxu0 0.0
    %3602 = vmatprep.subr.mxu0 0.0
    %3603 = vmatpush1.msra.mxu0 0.0
    %3604 = vmatprep.subr.mxu0 0.0
    %3605 = vmatpush1.msra.mxu0 0.0
    %3606 = vmatprep.subr.mxu0 0.0
    %3607 = vmatpush1.msra.mxu0 0.0
    %3608 = vmatprep.subr.mxu0 0.0
    %3609 = vmatpush1.msra.mxu0 0.0
    %3610 = vmatprep.subr.mxu0 0.0
    %3611 = vmatpush1.msra.mxu0 0.0
    %3612 = vmatprep.subr.mxu0 0.0
    %3613 = vmatpush1.msra.mxu0 0.0
    %3614 = vmatprep.subr.mxu0 0.0
    %3615 = vmatpush1.msra.mxu0 0.0
    %3616 = vmatprep.subr.mxu0 0.0
    %3617 = vmatpush1.msra.mxu0 0.0
    %3618 = vmatprep.subr.mxu0 0.0
    %3619 = vmatpush1.msra.mxu0 0.0
    %3620 = vmatprep.subr.mxu0 0.0
    %3621 = vmatpush1.msra.mxu0 0.0
    %3622 = vmatprep.subr.mxu0 0.0
    %3623 = vmatpush1.msra.mxu0 0.0
    %3624 = vmatprep.subr.mxu0 0.0
    %3625 = vmatpush1.msra.mxu0 0.0
    %3626 = vmatprep.subr.mxu0 0.0
    %3627 = vmatpush1.msra.mxu0 0.0
    %3628 = vmatprep.subr.mxu0 0.0
    %3629 = vmatpush1.msra.mxu0 0.0
    %3630 = vmatprep.subr.mxu0 0.0
    %3631 = vmatpush1.msra.mxu0 0.0
    %3632 = vmatprep.subr.mxu0 0.0
    %3633 = vmatpush1.msra.mxu0 0.0
    %3634 = vmatprep.subr.mxu0 0.0
    %3635 = vmatpush1.msra.mxu0 0.0
    %3636 = vmatprep.subr.mxu0 0.0
    %3637 = vmatpush1.msra.mxu0 0.0
    %3638 = vmatprep.subr.mxu0 0.0
    %3639 = vmatpush1.msra.mxu0 0.0
    %3640 = vmatprep.subr.mxu0 0.0
    %3641 = vmatpush1.msra.mxu0 0.0
    %3642 = vmatprep.subr.mxu0 0.0
    %3643 = vmatpush1.msra.mxu0 0.0
    %3644 = vmatprep.subr.mxu0 0.0
    %3645 = vmatpush1.msra.mxu0 0.0
    %3646 = vmatprep.subr.mxu0 0.0
    %3647 = vmatpush1.msra.mxu0 0.0
    %3648 = vmatprep.mubr.f32.mxu0 0.0
    %3649 = vmatmul.mubr.f32.gmra.mrb[0].mxu0 %v3582
    %v3650 = vpop.f32.mrb[0].mxu0
    %v3651 = vadd.f32 0.0, %v3650
    %v3652 = vpop.f32.mrb[0].mxu0
    %3653 = vdwg.mxu0
    %v3655 = vsel %vm755, %v3436, 0
    %3657 = vmatprep.subr.mxu0 0.0
    %3658 = vmatpush1.msra.mxu0 %v3580
    %3659 = vmatprep.subr.mxu0 0.0
    %3660 = vmatpush1.msra.mxu0 0.0
    %3661 = vmatprep.subr.mxu0 0.0
    %3662 = vmatpush1.msra.mxu0 0.0
    %3663 = vmatprep.subr.mxu0 0.0
    %3664 = vmatpush1.msra.mxu0 0.0
    %3665 = vmatprep.subr.mxu0 0.0
    %3666 = vmatpush1.msra.mxu0 0.0
    %3667 = vmatprep.subr.mxu0 0.0
    %3668 = vmatpush1.msra.mxu0 0.0
    %3669 = vmatprep.subr.mxu0 0.0
    %3670 = vmatpush1.msra.mxu0 0.0
    %3671 = vmatprep.subr.mxu0 0.0
    %3672 = vmatpush1.msra.mxu0 0.0
    %3673 = vmatprep.subr.mxu0 0.0
    %3674 = vmatpush1.msra.mxu0 0.0
    %3675 = vmatprep.subr.mxu0 0.0
    %3676 = vmatpush1.msra.mxu0 0.0
    %3677 = vmatprep.subr.mxu0 0.0
    %3678 = vmatpush1.msra.mxu0 0.0
    %3679 = vmatprep.subr.mxu0 0.0
    %3680 = vmatpush1.msra.mxu0 0.0
    %3681 = vmatprep.subr.mxu0 0.0
    %3682 = vmatpush1.msra.mxu0 0.0
    %3683 = vmatprep.subr.mxu0 0.0
    %3684 = vmatpush1.msra.mxu0 0.0
    %3685 = vmatprep.subr.mxu0 0.0
    %3686 = vmatpush1.msra.mxu0 0.0
    %3687 = vmatprep.subr.mxu0 0.0
    %3688 = vmatpush1.msra.mxu0 0.0
    %3689 = vmatprep.subr.mxu0 0.0
    %3690 = vmatpush1.msra.mxu0 0.0
    %3691 = vmatprep.subr.mxu0 0.0
    %3692 = vmatpush1.msra.mxu0 0.0
    %3693 = vmatprep.subr.mxu0 0.0
    %3694 = vmatpush1.msra.mxu0 0.0
    %3695 = vmatprep.subr.mxu0 0.0
    %3696 = vmatpush1.msra.mxu0 0.0
    %3697 = vmatprep.subr.mxu0 0.0
    %3698 = vmatpush1.msra.mxu0 0.0
    %3699 = vmatprep.subr.mxu0 0.0
    %3700 = vmatpush1.msra.mxu0 0.0
    %3701 = vmatprep.subr.mxu0 0.0
    %3702 = vmatpush1.msra.mxu0 0.0
    %3703 = vmatprep.subr.mxu0 0.0
    %3704 = vmatpush1.msra.mxu0 0.0
    %3705 = vmatprep.subr.mxu0 0.0
    %3706 = vmatpush1.msra.mxu0 0.0
    %3707 = vmatprep.subr.mxu0 0.0
    %3708 = vmatpush1.msra.mxu0 0.0
    %3709 = vmatprep.subr.mxu0 0.0
    %3710 = vmatpush1.msra.mxu0 0.0
    %3711 = vmatprep.subr.mxu0 0.0
    %3712 = vmatpush1.msra.mxu0 0.0
    %3713 = vmatprep.subr.mxu0 0.0
    %3714 = vmatpush1.msra.mxu0 0.0
    %3715 = vmatprep.subr.mxu0 0.0
    %3716 = vmatpush1.msra.mxu0 0.0
    %3717 = vmatprep.subr.mxu0 0.0
    %3718 = vmatpush1.msra.mxu0 0.0
    %3719 = vmatprep.subr.mxu0 0.0
    %3720 = vmatpush1.msra.mxu0 0.0
    %3721 = vmatprep.mubr.f32.mxu0 0.0
    %3722 = vmatmul.mubr.f32.gmra.mrb[0].mxu0 %v3655
    %v3723 = vpop.f32.mrb[0].mxu0
    %v3724 = vadd.f32 0.0, %v3723
    %v3725 = vpop.f32.mrb[0].mxu0
    %3726 = vdwg.mxu0
    %v3727 = vmul.f32 %v3651, %v809
    %v3728 = vsel %vm755, %v3727, 0.0
    %3729 = vadd.xlane.f32.xlu0 %v3728
    %v3730 = vpop.xlane.xlu0 %3729
    %v3731 = vrot.slane %v3730, 4
    %v3732 = vadd.f32 %v3730, %v3731
    %v3733 = vrot.slane %v3732, 2
    %v3734 = vadd.f32 %v3732, %v3733
    %v3735 = vrot.slane %v3734, 1
    %v3736 = vadd.f32 %v3734, %v3735
    %s3737 = vtos %v3736
    %v3738 = vmul.f32 %v3724, %v808
    %v3739 = vsel %vm755, %v3738, 0.0
    %3740 = vadd.xlane.f32.xlu0 %v3739
    %v3741 = vpop.xlane.xlu0 %3740
    %v3742 = vrot.slane %v3741, 4
    %v3743 = vadd.f32 %v3741, %v3742
    %v3744 = vrot.slane %v3743, 2
    %v3745 = vadd.f32 %v3743, %v3744
    %v3746 = vrot.slane %v3745, 1
    %v3747 = vadd.f32 %v3745, %v3746
    %s3748 = vtos %v3747
    %s3749 = sadd.f32 %s3737, %s3748
    %s3750 = smul.f32 %s3749, 0.5
    %s3751 = ssub.f32 %s3750, 8.0
    %s3752 = scalar_lea.smem [#allocation4], 0
    %3753 = sst [smem:[%s3752]] %s3751
    %v3754 = vld [vmem:[%s3] sm:$0xff]
    %v3755 = vld [vmem:[%s3 + $0x8] sm:$0xff]
    %v3756 = vld [vmem:[%s3 + $0x10] sm:$0xff]
    %v3757 = vld [vmem:[%s3 + $0x18] sm:$0xff]
    %v3758 = vld [vmem:[%s3 + $0x20] sm:$0xff]
    %v3759 = vld [vmem:[%s3 + $0x28] sm:$0xff]
    %v3760 = vld [vmem:[%s3 + $0x30] sm:$0xff]
    %v3761 = vld [vmem:[%s3 + $0x38] sm:$0xff]
    %s3762 = scalar_lea.vmem %s3, 64
    %v3763 = vld [vmem:[%s3762] sm:$0xff]
    %v3764 = vld [vmem:[%s3762 + $0x8] sm:$0xff]
    %v3765 = vld [vmem:[%s3762 + $0x10] sm:$0xff]
    %v3766 = vld [vmem:[%s3762 + $0x18] sm:$0xff]
    %v3767 = vld [vmem:[%s3762 + $0x20] sm:$0xff]
    %v3768 = vld [vmem:[%s3762 + $0x28] sm:$0xff]
    %v3769 = vld [vmem:[%s3762 + $0x30] sm:$0xff]
    %v3770 = vld [vmem:[%s3762 + $0x38] sm:$0xff]
    %vm3771 = vcmask 261120
    %v3773 = vsel %vm3771, %v3763, 0
    %v3776 = vsel %vm3771, %v3764, 0
    %v3779 = vsel %vm3771, %v3765, 0
    %v3782 = vsel %vm3771, %v3766, 0
    %v3785 = vsel %vm3771, %v3767, 0
    %v3788 = vsel %vm3771, %v3768, 0
    %v3791 = vsel %vm3771, %v3769, 0
    %v3794 = vsel %vm3771, %v3770, 0
    %3796 = vmatprep.subr.mxu0 0.0
    %3797 = vmatpush1.msra.mxu0 %v151
    %3798 = vmatprep.subr.mxu0 0.0
    %3799 = vmatpush1.msra.mxu0 %v157
    %3800 = vmatprep.subr.mxu0 0.0
    %3801 = vmatpush1.msra.mxu0 %v163
    %3802 = vmatprep.subr.mxu0 0.0
    %3803 = vmatpush1.msra.mxu0 %v169
    %3804 = vmatprep.subr.mxu0 0.0
    %3805 = vmatpush1.msra.mxu0 0.0
    %3806 = vmatprep.subr.mxu0 0.0
    %3807 = vmatpush1.msra.mxu0 0.0
    %3808 = vmatprep.subr.mxu0 0.0
    %3809 = vmatpush1.msra.mxu0 0.0
    %3810 = vmatprep.subr.mxu0 0.0
    %3811 = vmatpush1.msra.mxu0 0.0
    %3812 = vmatprep.subr.mxu0 0.0
    %3813 = vmatpush1.msra.mxu0 0.0
    %3814 = vmatprep.subr.mxu0 0.0
    %3815 = vmatpush1.msra.mxu0 0.0
    %3816 = vmatprep.subr.mxu0 0.0
    %3817 = vmatpush1.msra.mxu0 0.0
    %3818 = vmatprep.subr.mxu0 0.0
    %3819 = vmatpush1.msra.mxu0 0.0
    %3820 = vmatprep.subr.mxu0 0.0
    %3821 = vmatpush1.msra.mxu0 0.0
    %3822 = vmatprep.subr.mxu0 0.0
    %3823 = vmatpush1.msra.mxu0 0.0
    %3824 = vmatprep.subr.mxu0 0.0
    %3825 = vmatpush1.msra.mxu0 0.0
    %3826 = vmatprep.subr.mxu0 0.0
    %3827 = vmatpush1.msra.mxu0 0.0
    %3828 = vmatprep.subr.mxu0 0.0
    %3829 = vmatpush1.msra.mxu0 0.0
    %3830 = vmatprep.subr.mxu0 0.0
    %3831 = vmatpush1.msra.mxu0 0.0
    %3832 = vmatprep.subr.mxu0 0.0
    %3833 = vmatpush1.msra.mxu0 0.0
    %3834 = vmatprep.subr.mxu0 0.0
    %3835 = vmatpush1.msra.mxu0 0.0
    %3836 = vmatprep.subr.mxu0 0.0
    %3837 = vmatpush1.msra.mxu0 0.0
    %3838 = vmatprep.subr.mxu0 0.0
    %3839 = vmatpush1.msra.mxu0 0.0
    %3840 = vmatprep.subr.mxu0 0.0
    %3841 = vmatpush1.msra.mxu0 0.0
    %3842 = vmatprep.subr.mxu0 0.0
    %3843 = vmatpush1.msra.mxu0 0.0
    %3844 = vmatprep.subr.mxu0 0.0
    %3845 = vmatpush1.msra.mxu0 0.0
    %3846 = vmatprep.subr.mxu0 0.0
    %3847 = vmatpush1.msra.mxu0 0.0
    %3848 = vmatprep.subr.mxu0 0.0
    %3849 = vmatpush1.msra.mxu0 0.0
    %3850 = vmatprep.subr.mxu0 0.0
    %3851 = vmatpush1.msra.mxu0 0.0
    %3852 = vmatprep.subr.mxu0 0.0
    %3853 = vmatpush1.msra.mxu0 0.0
    %3854 = vmatprep.subr.mxu0 0.0
    %3855 = vmatpush1.msra.mxu0 0.0
    %3856 = vmatprep.subr.mxu0 0.0
    %3857 = vmatpush1.msra.mxu0 0.0
    %3858 = vmatprep.subr.mxu0 0.0
    %3859 = vmatpush1.msra.mxu0 0.0
    %3860 = vmatprep.mubr.f32.mxu0 0.0
    %3861 = vmatmul.mubr.f32.gmra.mrb[0].mxu0 %v3773
    %v3862 = vpop.f32.mrb[0].mxu0
    %v3863 = vadd.f32 0.0, %v3862
    %v3864 = vpop.f32.mrb[0].mxu0
    %3865 = vmatprep.mubr.f32.mxu0 0.0
    %3866 = vmatmul.mubr.f32.gmra.mrb[0].mxu0 %v3776
    %v3867 = vpop.f32.mrb[0].mxu0
    %v3868 = vadd.f32 0.0, %v3867
    %v3869 = vpop.f32.mrb[0].mxu0
    %3870 = vmatprep.mubr.f32.mxu0 0.0
    %3871 = vmatmul.mubr.f32.gmra.mrb[0].mxu0 %v3779
    %v3872 = vpop.f32.mrb[0].mxu0
    %v3873 = vadd.f32 0.0, %v3872
    %v3874 = vpop.f32.mrb[0].mxu0
    %3875 = vmatprep.mubr.f32.mxu0 0.0
    %3876 = vmatmul.mubr.f32.gmra.mrb[0].mxu0 %v3782
    %v3877 = vpop.f32.mrb[0].mxu0
    %v3878 = vadd.f32 0.0, %v3877
    %v3879 = vpop.f32.mrb[0].mxu0
    %3880 = vmatprep.mubr.f32.mxu0 0.0
    %3881 = vmatmul.mubr.f32.gmra.mrb[0].mxu0 %v3785
    %v3882 = vpop.f32.mrb[0].mxu0
    %v3883 = vadd.f32 0.0, %v3882
    %v3884 = vpop.f32.mrb[0].mxu0
    %3885 = vmatprep.mubr.f32.mxu0 0.0
    %3886 = vmatmul.mubr.f32.gmra.mrb[0].mxu0 %v3788
    %v3887 = vpop.f32.mrb[0].mxu0
    %v3888 = vadd.f32 0.0, %v3887
    %v3889 = vpop.f32.mrb[0].mxu0
    %3890 = vmatprep.mubr.f32.mxu0 0.0
    %3891 = vmatmul.mubr.f32.gmra.mrb[0].mxu0 %v3791
    %v3892 = vpop.f32.mrb[0].mxu0
    %v3893 = vadd.f32 0.0, %v3892
    %v3894 = vpop.f32.mrb[0].mxu0
    %3895 = vmatprep.mubr.f32.mxu0 0.0
    %3896 = vmatmul.mubr.f32.gmra.mrb[0].mxu0 %v3794
    %v3897 = vpop.f32.mrb[0].mxu0
    %v3898 = vadd.f32 0.0, %v3897
    %v3899 = vpop.f32.mrb[0].mxu0
    %3900 = vdwg.mxu0
    %v3902 = vsel %vm3771, %v3754, 0
    %v3905 = vsel %vm3771, %v3755, 0
    %v3908 = vsel %vm3771, %v3756, 0
    %v3911 = vsel %vm3771, %v3757, 0
    %v3914 = vsel %vm3771, %v3758, 0
    %v3917 = vsel %vm3771, %v3759, 0
    %v3920 = vsel %vm3771, %v3760, 0
    %v3923 = vsel %vm3771, %v3761, 0
    %3925 = vmatprep.subr.mxu0 0.0
    %3926 = vmatpush1.msra.mxu0 %v149
    %3927 = vmatprep.subr.mxu0 0.0
    %3928 = vmatpush1.msra.mxu0 %v155
    %3929 = vmatprep.subr.mxu0 0.0
    %3930 = vmatpush1.msra.mxu0 %v161
    %3931 = vmatprep.subr.mxu0 0.0
    %3932 = vmatpush1.msra.mxu0 %v167
    %3933 = vmatprep.subr.mxu0 0.0
    %3934 = vmatpush1.msra.mxu0 0.0
    %3935 = vmatprep.subr.mxu0 0.0
    %3936 = vmatpush1.msra.mxu0 0.0
    %3937 = vmatprep.subr.mxu0 0.0
    %3938 = vmatpush1.msra.mxu0 0.0
    %3939 = vmatprep.subr.mxu0 0.0
    %3940 = vmatpush1.msra.mxu0 0.0
    %3941 = vmatprep.subr.mxu0 0.0
    %3942 = vmatpush1.msra.mxu0 0.0
    %3943 = vmatprep.subr.mxu0 0.0
    %3944 = vmatpush1.msra.mxu0 0.0
    %3945 = vmatprep.subr.mxu0 0.0
    %3946 = vmatpush1.msra.mxu0 0.0
    %3947 = vmatprep.subr.mxu0 0.0
    %3948 = vmatpush1.msra.mxu0 0.0
    %3949 = vmatprep.subr.mxu0 0.0
    %3950 = vmatpush1.msra.mxu0 0.0
    %3951 = vmatprep.subr.mxu0 0.0
    %3952 = vmatpush1.msra.mxu0 0.0
    %3953 = vmatprep.subr.mxu0 0.0
    %3954 = vmatpush1.msra.mxu0 0.0
    %3955 = vmatprep.subr.mxu0 0.0
    %3956 = vmatpush1.msra.mxu0 0.0
    %3957 = vmatprep.subr.mxu0 0.0
    %3958 = vmatpush1.msra.mxu0 0.0
    %3959 = vmatprep.subr.mxu0 0.0
    %3960 = vmatpush1.msra.mxu0 0.0
    %3961 = vmatprep.subr.mxu0 0.0
    %3962 = vmatpush1.msra.mxu0 0.0
    %3963 = vmatprep.subr.mxu0 0.0
    %3964 = vmatpush1.msra.mxu0 0.0
    %3965 = vmatprep.subr.mxu0 0.0
    %3966 = vmatpush1.msra.mxu0 0.0
    %3967 = vmatprep.subr.mxu0 0.0
    %3968 = vmatpush1.msra.mxu0 0.0
    %3969 = vmatprep.subr.mxu0 0.0
    %3970 = vmatpush1.msra.mxu0 0.0
    %3971 = vmatprep.subr.mxu0 0.0
    %3972 = vmatpush1.msra.mxu0 0.0
    %3973 = vmatprep.subr.mxu0 0.0
    %3974 = vmatpush1.msra.mxu0 0.0
    %3975 = vmatprep.subr.mxu0 0.0
    %3976 = vmatpush1.msra.mxu0 0.0
    %3977 = vmatprep.subr.mxu0 0.0
    %3978 = vmatpush1.msra.mxu0 0.0
    %3979 = vmatprep.subr.mxu0 0.0
    %3980 = vmatpush1.msra.mxu0 0.0
    %3981 = vmatprep.subr.mxu0 0.0
    %3982 = vmatpush1.msra.mxu0 0.0
    %3983 = vmatprep.subr.mxu0 0.0
    %3984 = vmatpush1.msra.mxu0 0.0
    %3985 = vmatprep.subr.mxu0 0.0
    %3986 = vmatpush1.msra.mxu0 0.0
    %3987 = vmatprep.subr.mxu0 0.0
    %3988 = vmatpush1.msra.mxu0 0.0
    %3989 = vmatprep.mubr.f32.mxu0 0.0
    %3990 = vmatmul.mubr.f32.gmra.mrb[0].mxu0 %v3902
    %v3991 = vpop.f32.mrb[0].mxu0
    %v3992 = vadd.f32 %v3863, %v3991
    %v3993 = vpop.f32.mrb[0].mxu0
    %3994 = vmatprep.mubr.f32.mxu0 0.0
    %3995 = vmatmul.mubr.f32.gmra.mrb[0].mxu0 %v3905
    %v3996 = vpop.f32.mrb[0].mxu0
    %v3997 = vadd.f32 %v3868, %v3996
    %v3998 = vpop.f32.mrb[0].mxu0
    %3999 = vmatprep.mubr.f32.mxu0 0.0
    %4000 = vmatmul.mubr.f32.gmra.mrb[0].mxu0 %v3908
    %v4001 = vpop.f32.mrb[0].mxu0
    %v4002 = vadd.f32 %v3873, %v4001
    %v4003 = vpop.f32.mrb[0].mxu0
    %4004 = vmatprep.mubr.f32.mxu0 0.0
    %4005 = vmatmul.mubr.f32.gmra.mrb[0].mxu0 %v3911
    %v4006 = vpop.f32.mrb[0].mxu0
    %v4007 = vadd.f32 %v3878, %v4006
    %v4008 = vpop.f32.mrb[0].mxu0
    %4009 = vmatprep.mubr.f32.mxu0 0.0
    %4010 = vmatmul.mubr.f32.gmra.mrb[0].mxu0 %v3914
    %v4011 = vpop.f32.mrb[0].mxu0
    %v4012 = vadd.f32 %v3883, %v4011
    %v4013 = vpop.f32.mrb[0].mxu0
    %4014 = vmatprep.mubr.f32.mxu0 0.0
    %4015 = vmatmul.mubr.f32.gmra.mrb[0].mxu0 %v3917
    %v4016 = vpop.f32.mrb[0].mxu0
    %v4017 = vadd.f32 %v3888, %v4016
    %v4018 = vpop.f32.mrb[0].mxu0
    %4019 = vmatprep.mubr.f32.mxu0 0.0
    %4020 = vmatmul.mubr.f32.gmra.mrb[0].mxu0 %v3920
    %v4021 = vpop.f32.mrb[0].mxu0
    %v4022 = vadd.f32 %v3893, %v4021
    %v4023 = vpop.f32.mrb[0].mxu0
    %4024 = vmatprep.mubr.f32.mxu0 0.0
    %4025 = vmatmul.mubr.f32.gmra.mrb[0].mxu0 %v3923
    %v4026 = vpop.f32.mrb[0].mxu0
    %v4027 = vadd.f32 %v3898, %v4026
    %v4028 = vpop.f32.mrb[0].mxu0
    %4029 = vdwg.mxu0
    %vm4030 = vcmp.gt.f32.partialorder %v3992, 0.0
    %vm4031 = vcmp.gt.f32.partialorder %v3997, 0.0
    %vm4032 = vcmp.gt.f32.partialorder %v4002, 0.0
    %vm4033 = vcmp.gt.f32.partialorder %v4007, 0.0
    %vm4034 = vcmp.gt.f32.partialorder %v4012, 0.0
    %vm4035 = vcmp.gt.f32.partialorder %v4017, 0.0
    %vm4036 = vcmp.gt.f32.partialorder %v4022, 0.0
    %vm4037 = vcmp.gt.f32.partialorder %v4027, 0.0
    %v4038 = vmin.f32 %v3992, 0.0
    %v4039 = vmin.f32 %v3997, 0.0
    %v4040 = vmin.f32 %v4002, 0.0
    %v4041 = vmin.f32 %v4007, 0.0
    %v4042 = vmin.f32 %v4012, 0.0
    %v4043 = vmin.f32 %v4017, 0.0
    %v4044 = vmin.f32 %v4022, 0.0
    %v4045 = vmin.f32 %v4027, 0.0
    %v4046 = vmul.f32 %v4038, 1.442695
    %v4047 = vpow.pop %v4046
    %v4048 = vmul.f32 %v4039, 1.442695
    %v4049 = vpow.pop %v4048
    %v4050 = vmul.f32 %v4040, 1.442695
    %v4051 = vpow.pop %v4050
    %v4052 = vmul.f32 %v4041, 1.442695
    %v4053 = vpow.pop %v4052
    %v4054 = vmul.f32 %v4042, 1.442695
    %v4055 = vpow.pop %v4054
    %v4056 = vmul.f32 %v4043, 1.442695
    %v4057 = vpow.pop %v4056
    %v4058 = vmul.f32 %v4044, 1.442695
    %v4059 = vpow.pop %v4058
    %v4060 = vmul.f32 %v4045, 1.442695
    %v4061 = vpow.pop %v4060
    %v4062 = vsub.f32 %v4047, 1.0
    %v4063 = vsub.f32 %v4049, 1.0
    %v4064 = vsub.f32 %v4051, 1.0
    %v4065 = vsub.f32 %v4053, 1.0
    %v4066 = vsub.f32 %v4055, 1.0
    %v4067 = vsub.f32 %v4057, 1.0
    %v4068 = vsub.f32 %v4059, 1.0
    %v4069 = vsub.f32 %v4061, 1.0
    %v4070 = vsel %vm4030, %v3992, %v4062
    %v4071 = vsel %vm4031, %v3997, %v4063
    %v4072 = vsel %vm4032, %v4002, %v4064
    %v4073 = vsel %vm4033, %v4007, %v4065
    %v4074 = vsel %vm4034, %v4012, %v4066
    %v4075 = vsel %vm4035, %v4017, %v4067
    %v4076 = vsel %vm4036, %v4022, %v4068
    %v4077 = vsel %vm4037, %v4027, %v4069
    %v4078 = vld [vmem:[%s4] sm:$0xff]
    %v4079 = vld [vmem:[%s4 + $0x8] sm:$0xff]
    %v4080 = vld [vmem:[%s4 + $0x10] sm:$0xff]
    %v4081 = vld [vmem:[%s4 + $0x18] sm:$0xff]
    %v4082 = vld [vmem:[%s4 + $0x20] sm:$0xff]
    %v4083 = vld [vmem:[%s4 + $0x28] sm:$0xff]
    %v4084 = vld [vmem:[%s4 + $0x30] sm:$0xff]
    %v4085 = vld [vmem:[%s4 + $0x38] sm:$0xff]
    %v4086 = vld [vmem:[%s4 + $0x40] sm:$0xff]
    %v4087 = vld [vmem:[%s4 + $0x48] sm:$0xff]
    %v4088 = vld [vmem:[%s4 + $0x50] sm:$0xff]
    %v4089 = vld [vmem:[%s4 + $0x58] sm:$0xff]
    %v4090 = vld [vmem:[%s4 + $0x60] sm:$0xff]
    %v4091 = vld [vmem:[%s4 + $0x68] sm:$0xff]
    %v4092 = vld [vmem:[%s4 + $0x70] sm:$0xff]
    %v4093 = vld [vmem:[%s4 + $0x78] sm:$0xff]
    %4094 = vmatprep.subr.mxu0 0.0
    %4095 = vmatpush1.msra.mxu0 %v4078
    %4096 = vmatprep.subr.mxu0 0.0
    %4097 = vmatpush1.msra.mxu0 %v4079
    %4098 = vmatprep.subr.mxu0 0.0
    %4099 = vmatpush1.msra.mxu0 %v4080
    %4100 = vmatprep.subr.mxu0 0.0
    %4101 = vmatpush1.msra.mxu0 %v4081
    %4102 = vmatprep.subr.mxu0 0.0
    %4103 = vmatpush1.msra.mxu0 %v4082
    %4104 = vmatprep.subr.mxu0 0.0
    %4105 = vmatpush1.msra.mxu0 %v4083
    %4106 = vmatprep.subr.mxu0 0.0
    %4107 = vmatpush1.msra.mxu0 %v4084
    %4108 = vmatprep.subr.mxu0 0.0
    %4109 = vmatpush1.msra.mxu0 %v4085
    %4110 = vmatprep.subr.mxu0 0.0
    %4111 = vmatpush1.msra.mxu0 %v4086
    %4112 = vmatprep.subr.mxu0 0.0
    %4113 = vmatpush1.msra.mxu0 %v4087
    %4114 = vmatprep.subr.mxu0 0.0
    %4115 = vmatpush1.msra.mxu0 %v4088
    %4116 = vmatprep.subr.mxu0 0.0
    %4117 = vmatpush1.msra.mxu0 %v4089
    %4118 = vmatprep.subr.mxu0 0.0
    %4119 = vmatpush1.msra.mxu0 %v4090
    %4120 = vmatprep.subr.mxu0 0.0
    %4121 = vmatpush1.msra.mxu0 %v4091
    %4122 = vmatprep.subr.mxu0 0.0
    %4123 = vmatpush1.msra.mxu0 %v4092
    %4124 = vmatprep.subr.mxu0 0.0
    %4125 = vmatpush1.msra.mxu0 %v4093
    %4126 = vmatprep.subr.mxu0 0.0
    %4127 = vmatpush1.msra.mxu0 0.0
    %4128 = vmatprep.subr.mxu0 0.0
    %4129 = vmatpush1.msra.mxu0 0.0
    %4130 = vmatprep.subr.mxu0 0.0
    %4131 = vmatpush1.msra.mxu0 0.0
    %4132 = vmatprep.subr.mxu0 0.0
    %4133 = vmatpush1.msra.mxu0 0.0
    %4134 = vmatprep.subr.mxu0 0.0
    %4135 = vmatpush1.msra.mxu0 0.0
    %4136 = vmatprep.subr.mxu0 0.0
    %4137 = vmatpush1.msra.mxu0 0.0
    %4138 = vmatprep.subr.mxu0 0.0
    %4139 = vmatpush1.msra.mxu0 0.0
    %4140 = vmatprep.subr.mxu0 0.0
    %4141 = vmatpush1.msra.mxu0 0.0
    %4142 = vmatprep.subr.mxu0 0.0
    %4143 = vmatpush1.msra.mxu0 0.0
    %4144 = vmatprep.subr.mxu0 0.0
    %4145 = vmatpush1.msra.mxu0 0.0
    %4146 = vmatprep.subr.mxu0 0.0
    %4147 = vmatpush1.msra.mxu0 0.0
    %4148 = vmatprep.subr.mxu0 0.0
    %4149 = vmatpush1.msra.mxu0 0.0
    %4150 = vmatprep.subr.mxu0 0.0
    %4151 = vmatpush1.msra.mxu0 0.0
    %4152 = vmatprep.subr.mxu0 0.0
    %4153 = vmatpush1.msra.mxu0 0.0
    %4154 = vmatprep.subr.mxu0 0.0
    %4155 = vmatpush1.msra.mxu0 0.0
    %4156 = vmatprep.subr.mxu0 0.0
    %4157 = vmatpush1.msra.mxu0 0.0
    %4158 = vmatprep.mubr.f32.mxu0 0.0
    %4159 = vmatmul.mubr.f32.gmra.mrb[0].mxu0 %v4070
    %v4160 = vpop.f32.mrb[0].mxu0
    %v4161 = vadd.f32 0.0, %v4160
    %v4162 = vpop.f32.mrb[0].mxu0
    %4163 = vmatprep.mubr.f32.mxu0 0.0
    %4164 = vmatmul.mubr.f32.gmra.mrb[0].mxu0 %v4071
    %v4165 = vpop.f32.mrb[0].mxu0
    %v4166 = vadd.f32 0.0, %v4165
    %v4167 = vpop.f32.mrb[0].mxu0
    %4168 = vmatprep.mubr.f32.mxu0 0.0
    %4169 = vmatmul.mubr.f32.gmra.mrb[0].mxu0 %v4072
    %v4170 = vpop.f32.mrb[0].mxu0
    %v4171 = vadd.f32 0.0, %v4170
    %v4172 = vpop.f32.mrb[0].mxu0
    %4173 = vmatprep.mubr.f32.mxu0 0.0
    %4174 = vmatmul.mubr.f32.gmra.mrb[0].mxu0 %v4073
    %v4175 = vpop.f32.mrb[0].mxu0
    %v4176 = vadd.f32 0.0, %v4175
    %v4177 = vpop.f32.mrb[0].mxu0
    %4178 = vmatprep.mubr.f32.mxu0 0.0
    %4179 = vmatmul.mubr.f32.gmra.mrb[0].mxu0 %v4074
    %v4180 = vpop.f32.mrb[0].mxu0
    %v4181 = vadd.f32 0.0, %v4180
    %v4182 = vpop.f32.mrb[0].mxu0
    %4183 = vmatprep.mubr.f32.mxu0 0.0
    %4184 = vmatmul.mubr.f32.gmra.mrb[0].mxu0 %v4075
    %v4185 = vpop.f32.mrb[0].mxu0
    %v4186 = vadd.f32 0.0, %v4185
    %v4187 = vpop.f32.mrb[0].mxu0
    %4188 = vmatprep.mubr.f32.mxu0 0.0
    %4189 = vmatmul.mubr.f32.gmra.mrb[0].mxu0 %v4076
    %v4190 = vpop.f32.mrb[0].mxu0
    %v4191 = vadd.f32 0.0, %v4190
    %v4192 = vpop.f32.mrb[0].mxu0
    %4193 = vmatprep.mubr.f32.mxu0 0.0
    %4194 = vmatmul.mubr.f32.gmra.mrb[0].mxu0 %v4077
    %v4195 = vpop.f32.mrb[0].mxu0
    %v4196 = vadd.f32 0.0, %v4195
    %v4197 = vpop.f32.mrb[0].mxu0
    %4198 = vdwg.mxu0
    %v4199 = vld [vmem:[%s6] sm:$0xf]
    %v4200 = vld [vmem:[%s5] sm:$0xff]
    %v4201 = vld [vmem:[%s5 + $0x8] sm:$0xff]
    %v4202 = vld [vmem:[%s5 + $0x10] sm:$0xff]
    %v4203 = vld [vmem:[%s5 + $0x18] sm:$0xff]
    %v4204 = vld [vmem:[%s5 + $0x20] sm:$0xff]
    %v4205 = vld [vmem:[%s5 + $0x28] sm:$0xff]
    %v4206 = vld [vmem:[%s5 + $0x30] sm:$0xff]
    %v4207 = vld [vmem:[%s5 + $0x38] sm:$0xff]
    %v4208 = vmul.f32 %v4161, %v4200
    %v4209 = vmul.f32 %v4166, %v4201
    %v4210 = vmul.f32 %v4161, %v4202
    %v4211 = vmul.f32 %v4166, %v4203
    %v4212 = vmul.f32 %v4161, %v4204
    %v4213 = vmul.f32 %v4166, %v4205
    %v4214 = vmul.f32 %v4161, %v4206
    %v4215 = vmul.f32 %v4166, %v4207
    %v4216 = vmul.f32 %v4171, %v4200
    %v4217 = vmul.f32 %v4176, %v4201
    %v4218 = vmul.f32 %v4171, %v4202
    %v4219 = vmul.f32 %v4176, %v4203
    %v4220 = vmul.f32 %v4171, %v4204
    %v4221 = vmul.f32 %v4176, %v4205
    %v4222 = vmul.f32 %v4171, %v4206
    %v4223 = vmul.f32 %v4176, %v4207
    %v4224 = vmul.f32 %v4181, %v4200
    %v4225 = vmul.f32 %v4186, %v4201
    %v4226 = vmul.f32 %v4181, %v4202
    %v4227 = vmul.f32 %v4186, %v4203
    %v4228 = vmul.f32 %v4181, %v4204
    %v4229 = vmul.f32 %v4186, %v4205
    %v4230 = vmul.f32 %v4181, %v4206
    %v4231 = vmul.f32 %v4186, %v4207
    %v4232 = vmul.f32 %v4191, %v4200
    %v4233 = vmul.f32 %v4196, %v4201
    %v4234 = vmul.f32 %v4191, %v4202
    %v4235 = vmul.f32 %v4196, %v4203
    %v4236 = vmul.f32 %v4191, %v4204
    %v4237 = vmul.f32 %v4196, %v4205
    %v4238 = vmul.f32 %v4191, %v4206
    %v4239 = vmul.f32 %v4196, %v4207
    %vm4240 = vcmask 130048
    %v4241 = vsel %vm4240, %v4208, 0.0
    %4242 = vadd.xlane.f32.xlu0 %v4241
    %v4243 = vpop.xlane.xlu0 %4242
    %v4244 = vsel %vm4240, %v4209, 0.0
    %4245 = vadd.xlane.f32.xlu0 %v4244
    %v4246 = vpop.xlane.xlu0 %4245
    %v4247 = vsel %vm4240, %v4210, 0.0
    %4248 = vadd.xlane.f32.xlu0 %v4247
    %v4249 = vpop.xlane.xlu0 %4248
    %v4250 = vsel %vm4240, %v4211, 0.0
    %4251 = vadd.xlane.f32.xlu0 %v4250
    %v4252 = vpop.xlane.xlu0 %4251
    %v4253 = vsel %vm4240, %v4212, 0.0
    %4254 = vadd.xlane.f32.xlu0 %v4253
    %v4255 = vpop.xlane.xlu0 %4254
    %v4256 = vsel %vm4240, %v4213, 0.0
    %4257 = vadd.xlane.f32.xlu0 %v4256
    %v4258 = vpop.xlane.xlu0 %4257
    %v4259 = vsel %vm4240, %v4214, 0.0
    %4260 = vadd.xlane.f32.xlu0 %v4259
    %v4261 = vpop.xlane.xlu0 %4260
    %v4262 = vsel %vm4240, %v4215, 0.0
    %4263 = vadd.xlane.f32.xlu0 %v4262
    %v4264 = vpop.xlane.xlu0 %4263
    %v4265 = vsel %vm4240, %v4216, 0.0
    %4266 = vadd.xlane.f32.xlu0 %v4265
    %v4267 = vpop.xlane.xlu0 %4266
    %v4268 = vsel %vm4240, %v4217, 0.0
    %4269 = vadd.xlane.f32.xlu0 %v4268
    %v4270 = vpop.xlane.xlu0 %4269
    %v4271 = vsel %vm4240, %v4218, 0.0
    %4272 = vadd.xlane.f32.xlu0 %v4271
    %v4273 = vpop.xlane.xlu0 %4272
    %v4274 = vsel %vm4240, %v4219, 0.0
    %4275 = vadd.xlane.f32.xlu0 %v4274
    %v4276 = vpop.xlane.xlu0 %4275
    %v4277 = vsel %vm4240, %v4220, 0.0
    %4278 = vadd.xlane.f32.xlu0 %v4277
    %v4279 = vpop.xlane.xlu0 %4278
    %v4280 = vsel %vm4240, %v4221, 0.0
    %4281 = vadd.xlane.f32.xlu0 %v4280
    %v4282 = vpop.xlane.xlu0 %4281
    %v4283 = vsel %vm4240, %v4222, 0.0
    %4284 = vadd.xlane.f32.xlu0 %v4283
    %v4285 = vpop.xlane.xlu0 %4284
    %v4286 = vsel %vm4240, %v4223, 0.0
    %4287 = vadd.xlane.f32.xlu0 %v4286
    %v4288 = vpop.xlane.xlu0 %4287
    %v4289 = vsel %vm4240, %v4224, 0.0
    %4290 = vadd.xlane.f32.xlu0 %v4289
    %v4291 = vpop.xlane.xlu0 %4290
    %v4292 = vsel %vm4240, %v4225, 0.0
    %4293 = vadd.xlane.f32.xlu0 %v4292
    %v4294 = vpop.xlane.xlu0 %4293
    %v4295 = vsel %vm4240, %v4226, 0.0
    %4296 = vadd.xlane.f32.xlu0 %v4295
    %v4297 = vpop.xlane.xlu0 %4296
    %v4298 = vsel %vm4240, %v4227, 0.0
    %4299 = vadd.xlane.f32.xlu0 %v4298
    %v4300 = vpop.xlane.xlu0 %4299
    %v4301 = vsel %vm4240, %v4228, 0.0
    %4302 = vadd.xlane.f32.xlu0 %v4301
    %v4303 = vpop.xlane.xlu0 %4302
    %v4304 = vsel %vm4240, %v4229, 0.0
    %4305 = vadd.xlane.f32.xlu0 %v4304
    %v4306 = vpop.xlane.xlu0 %4305
    %v4307 = vsel %vm4240, %v4230, 0.0
    %4308 = vadd.xlane.f32.xlu0 %v4307
    %v4309 = vpop.xlane.xlu0 %4308
    %v4310 = vsel %vm4240, %v4231, 0.0
    %4311 = vadd.xlane.f32.xlu0 %v4310
    %v4312 = vpop.xlane.xlu0 %4311
    %v4313 = vsel %vm4240, %v4232, 0.0
    %4314 = vadd.xlane.f32.xlu0 %v4313
    %v4315 = vpop.xlane.xlu0 %4314
    %v4316 = vsel %vm4240, %v4233, 0.0
    %4317 = vadd.xlane.f32.xlu0 %v4316
    %v4318 = vpop.xlane.xlu0 %4317
    %v4319 = vsel %vm4240, %v4234, 0.0
    %4320 = vadd.xlane.f32.xlu0 %v4319
    %v4321 = vpop.xlane.xlu0 %4320
    %v4322 = vsel %vm4240, %v4235, 0.0
    %4323 = vadd.xlane.f32.xlu0 %v4322
    %v4324 = vpop.xlane.xlu0 %4323
    %v4325 = vsel %vm4240, %v4236, 0.0
    %4326 = vadd.xlane.f32.xlu0 %v4325
    %v4327 = vpop.xlane.xlu0 %4326
    %v4328 = vsel %vm4240, %v4237, 0.0
    %4329 = vadd.xlane.f32.xlu0 %v4328
    %v4330 = vpop.xlane.xlu0 %4329
    %v4331 = vsel %vm4240, %v4238, 0.0
    %4332 = vadd.xlane.f32.xlu0 %v4331
    %v4333 = vpop.xlane.xlu0 %4332
    %v4334 = vsel %vm4240, %v4239, 0.0
    %4335 = vadd.xlane.f32.xlu0 %v4334
    %v4336 = vpop.xlane.xlu0 %4335
    %v4369 = vlaneseq
    %v4370 = vshrl.u32 %v4369, 7
    %v4371 = vsub.s32 %v775, %v4370
    %v4372 = vrot.slane %v4243, %v4371
    %v4373 = vadd.s32 %v775, 4294967288
    %v4374 = vlaneseq
    %v4375 = vshrl.u32 %v4374, 7
    %v4376 = vsub.s32 %v4373, %v4375
    %v4377 = vrot.slane %v4246, %v4376
    %vm4378 = vcmask 130112
    %v4379 = vsel %vm4378, %v4377, %v4372
    %v4380 = vlaneseq
    %v4381 = vshrl.u32 %v4380, 7
    %v4382 = vsub.s32 %v775, %v4381
    %v4383 = vrot.slane %v4249, %v4382
    %v4384 = vlaneseq
    %v4385 = vshrl.u32 %v4384, 7
    %v4386 = vsub.s32 %v4373, %v4385
    %v4387 = vrot.slane %v4252, %v4386
    %v4388 = vsel %vm4378, %v4387, %v4383
    %v4389 = vlaneseq
    %v4390 = vshrl.u32 %v4389, 7
    %v4391 = vsub.s32 %v775, %v4390
    %v4392 = vrot.slane %v4255, %v4391
    %v4393 = vlaneseq
    %v4394 = vshrl.u32 %v4393, 7
    %v4395 = vsub.s32 %v4373, %v4394
    %v4396 = vrot.slane %v4258, %v4395
    %v4397 = vsel %vm4378, %v4396, %v4392
    %v4398 = vlaneseq
    %v4399 = vshrl.u32 %v4398, 7
    %v4400 = vsub.s32 %v775, %v4399
    %v4401 = vrot.slane %v4261, %v4400
    %v4402 = vlaneseq
    %v4403 = vshrl.u32 %v4402, 7
    %v4404 = vsub.s32 %v4373, %v4403
    %v4405 = vrot.slane %v4264, %v4404
    %v4406 = vsel %vm4378, %v4405, %v4401
    %v4407 = vlaneseq
    %v4408 = vshrl.u32 %v4407, 7
    %v4409 = vsub.s32 %v775, %v4408
    %v4410 = vrot.slane %v4267, %v4409
    %v4411 = vlaneseq
    %v4412 = vshrl.u32 %v4411, 7
    %v4413 = vsub.s32 %v4373, %v4412
    %v4414 = vrot.slane %v4270, %v4413
    %v4415 = vsel %vm4378, %v4414, %v4410
    %v4416 = vlaneseq
    %v4417 = vshrl.u32 %v4416, 7
    %v4418 = vsub.s32 %v775, %v4417
    %v4419 = vrot.slane %v4273, %v4418
    %v4420 = vlaneseq
    %v4421 = vshrl.u32 %v4420, 7
    %v4422 = vsub.s32 %v4373, %v4421
    %v4423 = vrot.slane %v4276, %v4422
    %v4424 = vsel %vm4378, %v4423, %v4419
    %v4425 = vlaneseq
    %v4426 = vshrl.u32 %v4425, 7
    %v4427 = vsub.s32 %v775, %v4426
    %v4428 = vrot.slane %v4279, %v4427
    %v4429 = vlaneseq
    %v4430 = vshrl.u32 %v4429, 7
    %v4431 = vsub.s32 %v4373, %v4430
    %v4432 = vrot.slane %v4282, %v4431
    %v4433 = vsel %vm4378, %v4432, %v4428
    %v4434 = vlaneseq
    %v4435 = vshrl.u32 %v4434, 7
    %v4436 = vsub.s32 %v775, %v4435
    %v4437 = vrot.slane %v4285, %v4436
    %v4438 = vlaneseq
    %v4439 = vshrl.u32 %v4438, 7
    %v4440 = vsub.s32 %v4373, %v4439
    %v4441 = vrot.slane %v4288, %v4440
    %v4442 = vsel %vm4378, %v4441, %v4437
    %v4443 = vlaneseq
    %v4444 = vshrl.u32 %v4443, 7
    %v4445 = vsub.s32 %v775, %v4444
    %v4446 = vrot.slane %v4291, %v4445
    %v4447 = vlaneseq
    %v4448 = vshrl.u32 %v4447, 7
    %v4449 = vsub.s32 %v4373, %v4448
    %v4450 = vrot.slane %v4294, %v4449
    %v4451 = vsel %vm4378, %v4450, %v4446
    %v4452 = vlaneseq
    %v4453 = vshrl.u32 %v4452, 7
    %v4454 = vsub.s32 %v775, %v4453
    %v4455 = vrot.slane %v4297, %v4454
    %v4456 = vlaneseq
    %v4457 = vshrl.u32 %v4456, 7
    %v4458 = vsub.s32 %v4373, %v4457
    %v4459 = vrot.slane %v4300, %v4458
    %v4460 = vsel %vm4378, %v4459, %v4455
    %v4461 = vlaneseq
    %v4462 = vshrl.u32 %v4461, 7
    %v4463 = vsub.s32 %v775, %v4462
    %v4464 = vrot.slane %v4303, %v4463
    %v4465 = vlaneseq
    %v4466 = vshrl.u32 %v4465, 7
    %v4467 = vsub.s32 %v4373, %v4466
    %v4468 = vrot.slane %v4306, %v4467
    %v4469 = vsel %vm4378, %v4468, %v4464
    %v4470 = vlaneseq
    %v4471 = vshrl.u32 %v4470, 7
    %v4472 = vsub.s32 %v775, %v4471
    %v4473 = vrot.slane %v4309, %v4472
    %v4474 = vlaneseq
    %v4475 = vshrl.u32 %v4474, 7
    %v4476 = vsub.s32 %v4373, %v4475
    %v4477 = vrot.slane %v4312, %v4476
    %v4478 = vsel %vm4378, %v4477, %v4473
    %v4479 = vlaneseq
    %v4480 = vshrl.u32 %v4479, 7
    %v4481 = vsub.s32 %v775, %v4480
    %v4482 = vrot.slane %v4315, %v4481
    %v4483 = vlaneseq
    %v4484 = vshrl.u32 %v4483, 7
    %v4485 = vsub.s32 %v4373, %v4484
    %v4486 = vrot.slane %v4318, %v4485
    %v4487 = vsel %vm4378, %v4486, %v4482
    %v4488 = vlaneseq
    %v4489 = vshrl.u32 %v4488, 7
    %v4490 = vsub.s32 %v775, %v4489
    %v4491 = vrot.slane %v4321, %v4490
    %v4492 = vlaneseq
    %v4493 = vshrl.u32 %v4492, 7
    %v4494 = vsub.s32 %v4373, %v4493
    %v4495 = vrot.slane %v4324, %v4494
    %v4496 = vsel %vm4378, %v4495, %v4491
    %v4497 = vlaneseq
    %v4498 = vshrl.u32 %v4497, 7
    %v4499 = vsub.s32 %v775, %v4498
    %v4500 = vrot.slane %v4327, %v4499
    %v4501 = vlaneseq
    %v4502 = vshrl.u32 %v4501, 7
    %v4503 = vsub.s32 %v4373, %v4502
    %v4504 = vrot.slane %v4330, %v4503
    %v4505 = vsel %vm4378, %v4504, %v4500
    %v4506 = vlaneseq
    %v4507 = vshrl.u32 %v4506, 7
    %v4508 = vsub.s32 %v775, %v4507
    %v4509 = vrot.slane %v4333, %v4508
    %v4510 = vlaneseq
    %v4511 = vshrl.u32 %v4510, 7
    %v4512 = vsub.s32 %v4373, %v4511
    %v4513 = vrot.slane %v4336, %v4512
    %v4514 = vsel %vm4378, %v4513, %v4509
    %vm4515 = vcmask 1041409
    %v4516 = vsel %vm4515, %v4388, %v4379
    %vm4517 = vcmask 1042434
    %v4518 = vsel %vm4517, %v4397, %v4516
    %vm4519 = vcmask 1043459
    %v4520 = vsel %vm4519, %v4406, %v4518
    %v4521 = vsel %vm4515, %v4424, %v4415
    %v4522 = vsel %vm4517, %v4433, %v4521
    %v4523 = vsel %vm4519, %v4442, %v4522
    %v4524 = vsel %vm4515, %v4460, %v4451
    %v4525 = vsel %vm4517, %v4469, %v4524
    %v4526 = vsel %vm4519, %v4478, %v4525
    %v4527 = vsel %vm4515, %v4496, %v4487
    %v4528 = vsel %vm4517, %v4505, %v4527
    %v4529 = vsel %vm4519, %v4514, %v4528
    %vm4534 = vcmask 125952
    %v4535 = vsel %vm4534, %v4520, 0.0
    %4536 = vadd.xlane.f32.xlu0 %v4535
    %v4537 = vpop.xlane.xlu0 %4536
    %v4538 = vsel %vm4534, %v4523, 0.0
    %4539 = vadd.xlane.f32.xlu0 %v4538
    %v4540 = vpop.xlane.xlu0 %4539
    %v4541 = vsel %vm4534, %v4526, 0.0
    %4542 = vadd.xlane.f32.xlu0 %v4541
    %v4543 = vpop.xlane.xlu0 %4542
    %v4544 = vsel %vm4534, %v4529, 0.0
    %4545 = vadd.xlane.f32.xlu0 %v4544
    %v4546 = vpop.xlane.xlu0 %4545
    %v4548 = vlaneseq
    %v4549 = vshrl.u32 %v4548, 7
    %v4550 = vsub.s32 0, %v4549
    %v4551 = vrot.slane %v4199, %v4550
    %4553 = vbcast.lane.b32.xlu0 %v4551, 256
    %v4554 = vpop.permute.xlu0 %4553
    %v4555 = vlaneseq
    %v4556 = vshrl.u32 %v4555, 7
    %v4557 = vsub.s32 1, %v4556
    %v4558 = vrot.slane %v4199, %v4557
    %4560 = vbcast.lane.b32.xlu0 %v4558, 256
    %v4561 = vpop.permute.xlu0 %4560
    %v4562 = vlaneseq
    %v4563 = vshrl.u32 %v4562, 7
    %v4564 = vsub.s32 2, %v4563
    %v4565 = vrot.slane %v4199, %v4564
    %4567 = vbcast.lane.b32.xlu0 %v4565, 256
    %v4568 = vpop.permute.xlu0 %4567
    %v4569 = vlaneseq
    %v4570 = vshrl.u32 %v4569, 7
    %v4571 = vsub.s32 3, %v4570
    %v4572 = vrot.slane %v4199, %v4571
    %4574 = vbcast.lane.b32.xlu0 %v4572, 256
    %v4575 = vpop.permute.xlu0 %4574
    %v4580 = vadd.f32 %v4537, %v4554
    %v4581 = vadd.f32 %v4540, %v4561
    %v4582 = vadd.f32 %v4543, %v4568
    %v4583 = vadd.f32 %v4546, %v4575
    %4588 = vset.pattern.permute.xlu0 0
    %4589 = vperm.xlu0 %4588, %v4580
    %v4590 = vpop.permute.xlu0 %4589
    %4591 = vset.pattern.permute.xlu0 0
    %4592 = vperm.xlu0 %4591, %v4581
    %v4593 = vpop.permute.xlu0 %4592
    %4594 = vset.pattern.permute.xlu0 0
    %4595 = vperm.xlu0 %4594, %v4582
    %v4596 = vpop.permute.xlu0 %4595
    %4597 = vset.pattern.permute.xlu0 0
    %4598 = vperm.xlu0 %4597, %v4583
    %v4599 = vpop.permute.xlu0 %4598
    %v4600 = vlaneseq
    %v4601 = vshrl.u32 %v4600, 7
    %v4602 = vsub.s32 %v775, %v4601
    %v4603 = vrot.slane %v4590, %v4602
    %v4604 = vlaneseq
    %v4605 = vshrl.u32 %v4604, 7
    %v4606 = vsub.s32 %v775, %v4605
    %v4607 = vrot.slane %v4593, %v4606
    %v4608 = vlaneseq
    %v4609 = vshrl.u32 %v4608, 7
    %v4610 = vsub.s32 %v775, %v4609
    %v4611 = vrot.slane %v4596, %v4610
    %v4612 = vlaneseq
    %v4613 = vshrl.u32 %v4612, 7
    %v4614 = vsub.s32 %v775, %v4613
    %v4615 = vrot.slane %v4599, %v4614
    %v4616 = vsel %vm4515, %v4607, %v4603
    %v4617 = vsel %vm4517, %v4611, %v4616
    %v4618 = vsel %vm4519, %v4615, %v4617
    %vm4620 = vcmask 27648
    %v4621 = vsel %vm4620, %v4618, -inf
    %4622 = vmax.xlane.f32.xlu0 %v4621
    %v4623 = vpop.xlane.xlu0 %4622
    %v4625 = vlaneseq
    %v4626 = vshrl.u32 %v4625, 7
    %v4627 = vsub.s32 0, %v4626
    %v4628 = vrot.slane %v4623, %v4627
    %v4629 = vlaneseq
    %v4630 = vshrl.u32 %v4629, 7
    %v4631 = vsub.s32 1, %v4630
    %v4632 = vrot.slane %v4623, %v4631
    %v4633 = vlaneseq
    %v4634 = vshrl.u32 %v4633, 7
    %v4635 = vsub.s32 2, %v4634
    %v4636 = vrot.slane %v4623, %v4635
    %v4637 = vlaneseq
    %v4638 = vshrl.u32 %v4637, 7
    %v4639 = vsub.s32 3, %v4638
    %v4640 = vrot.slane %v4623, %v4639
    %v4645 = vsub.f32 %v4580, %v4628
    %v4646 = vsub.f32 %v4581, %v4632
    %v4647 = vsub.f32 %v4582, %v4636
    %v4648 = vsub.f32 %v4583, %v4640
    %v4649 = vmul.f32 %v4645, 1.442695
    %v4650 = vpow.pop %v4649
    %v4651 = vmul.f32 %v4646, 1.442695
    %v4652 = vpow.pop %v4651
    %v4653 = vmul.f32 %v4647, 1.442695
    %v4654 = vpow.pop %v4653
    %v4655 = vmul.f32 %v4648, 1.442695
    %v4656 = vpow.pop %v4655
    %4661 = vset.pattern.permute.xlu0 0
    %4662 = vperm.xlu0 %4661, %v4650
    %v4663 = vpop.permute.xlu0 %4662
    %4664 = vset.pattern.permute.xlu0 0
    %4665 = vperm.xlu0 %4664, %v4652
    %v4666 = vpop.permute.xlu0 %4665
    %4667 = vset.pattern.permute.xlu0 0
    %4668 = vperm.xlu0 %4667, %v4654
    %v4669 = vpop.permute.xlu0 %4668
    %4670 = vset.pattern.permute.xlu0 0
    %4671 = vperm.xlu0 %4670, %v4656
    %v4672 = vpop.permute.xlu0 %4671
    %v4673 = vlaneseq
    %v4674 = vshrl.u32 %v4673, 7
    %v4675 = vsub.s32 %v775, %v4674
    %v4676 = vrot.slane %v4663, %v4675
    %v4677 = vlaneseq
    %v4678 = vshrl.u32 %v4677, 7
    %v4679 = vsub.s32 %v775, %v4678
    %v4680 = vrot.slane %v4666, %v4679
    %v4681 = vlaneseq
    %v4682 = vshrl.u32 %v4681, 7
    %v4683 = vsub.s32 %v775, %v4682
    %v4684 = vrot.slane %v4669, %v4683
    %v4685 = vlaneseq
    %v4686 = vshrl.u32 %v4685, 7
    %v4687 = vsub.s32 %v775, %v4686
    %v4688 = vrot.slane %v4672, %v4687
    %v4689 = vsel %vm4515, %v4680, %v4676
    %v4690 = vsel %vm4517, %v4684, %v4689
    %v4691 = vsel %vm4519, %v4688, %v4690
    %v4693 = vsel %vm4620, %v4691, 0.0
    %4694 = vadd.xlane.f32.xlu0 %v4693
    %v4695 = vpop.xlane.xlu0 %4694
    %v4696 = vlog2.pop %v4695
    %v4697 = vmul.f32 %v4696, 0.6931472
    %v4698 = vadd.f32 %v4623, %v4697
    %v4699 = vadd.s32 %v775, 4294967292
    %v4700 = vlaneseq
    %v4701 = vshrl.u32 %v4700, 7
    %v4702 = vsub.s32 %v4699, %v4701
    %v4703 = vrot.slane %v4590, %v4702
    %v4704 = vlaneseq
    %v4705 = vshrl.u32 %v4704, 7
    %v4706 = vsub.s32 %v4699, %v4705
    %v4707 = vrot.slane %v4593, %v4706
    %v4708 = vlaneseq
    %v4709 = vshrl.u32 %v4708, 7
    %v4710 = vsub.s32 %v4699, %v4709
    %v4711 = vrot.slane %v4596, %v4710
    %v4712 = vlaneseq
    %v4713 = vshrl.u32 %v4712, 7
    %v4714 = vsub.s32 %v4699, %v4713
    %v4715 = vrot.slane %v4599, %v4714
    %v4716 = vsel %vm4515, %v4707, %v4703
    %v4717 = vsel %vm4517, %v4711, %v4716
    %v4718 = vsel %vm4519, %v4715, %v4717
    %v4720 = vmul.f32 %v4199, %v4718
    %4722 = vrot.lane.b32.xlu0 %v4720, 124
    %v4723 = vpop.permute.xlu0 %4722
    %v4725 = vsel %vm4620, %v4723, 0.0
    %4726 = vadd.xlane.f32.xlu0 %v4725
    %v4727 = vpop.xlane.xlu0 %4726
    %v4728 = vsub.f32 %v4698, %v4727
    %vm4729 = vcmask 3072
    %v4730 = vsel %vm4729, %v4728, 0.0
    %4731 = vadd.xlane.f32.xlu0 %v4730
    %v4732 = vpop.xlane.xlu0 %4731
    %v4733 = vrot.slane %v4732, 4
    %v4734 = vadd.f32 %v4732, %v4733
    %v4735 = vrot.slane %v4734, 2
    %v4736 = vadd.f32 %v4734, %v4735
    %v4737 = vrot.slane %v4736, 1
    %v4738 = vadd.f32 %v4736, %v4737
    %s4739 = vtos %v4738
    %s4740 = smul.f32 %s4739, 0.25
    %s4741 = scalar_lea.smem [#allocation2], 0
    %4742 = sst [smem:[%s4741]] %s4740
    // Predicated region
    $region30: #{forward.1} parent=1 // pred_check
      _
    $region31: #{forward.1} parent=1 // pred_check_branch
      %4744 = sbr.rel (0) target = $region33
    $region32: #{forward.1} parent=1 // pred_region
      %s4746 = ssub.s32 16, 16
      %4747 = vsyncadd [#allocation3], %s4746
      %4750 = dma.smem_to_hbm [#allocation2], 16, %s7, [#allocation3]
    $region33: #{forward.1} parent=1 // pred_fallthru
      _
    // Predicated region
    $region34: #{forward.1} parent=1 // pred_check
      _
    $region35: #{forward.1} parent=1 // pred_check_branch
      %4752 = sbr.rel (0) target = $region37
    $region36: #{forward.1} parent=1 // pred_region
      %s4754 = ssub.s32 16, 16
      %4755 = vsyncadd [#allocation5], %s4754
      %4758 = dma.smem_to_hbm [#allocation4], 16, %s8, [#allocation5]
    $region37: #{forward.1} parent=1 // pred_fallthru
      _
    // Predicated region
    $region38: #{forward.1} parent=1 // pred_check
      _
    $region39: #{forward.1} parent=1 // pred_check_branch
      %4760 = sbr.rel (0) target = $region41
    $region40: #{forward.1} parent=1 // pred_region
      %4761 = dma.done [#allocation3], 16
    $region41: #{forward.1} parent=1 // pred_fallthru
      _
    // Predicated region
    $region42: #{forward.1} parent=1 // pred_check
      _
    $region43: #{forward.1} parent=1 // pred_check_branch
      %4763 = sbr.rel (0) target = $region45
    $region44: #{forward.1} parent=1 // pred_region
      %4764 = dma.done [#allocation5], 16
    $region45: #{forward.1} parent=1 // pred_fallthru
      _
    %4765 = sfence
    %4766 = vsyncpa [#allocation3], 1
    %4767 = vsyncpa [#allocation5], 1

</llo_original>
